<compile_context>
chip_gen: v6e
topology: v6e:2x2x1
jax: 0.10.0
libtpu: 0.0.40
codegen_flags: <defaults>
</compile_context>

<pallas_src>
import functools
import math

import jax
import jax.numpy as jnp
from jax.experimental import pallas as pl
from jax.experimental.pallas import tpu as pltpu


# ----------------------------- kernel --------------------------------------


def _layernorm(x, gamma, beta, eps=1e-5):
    mu = jnp.mean(x, axis=-1, keepdims=True)
    var = jnp.mean((x - mu) ** 2, axis=-1, keepdims=True)
    return (x - mu) * jax.lax.rsqrt(var + eps) * gamma + beta


def fused_decoder_kernel(latent_ref, pos_ref,
                         sa_wqkv_ref, sa_bqkv_ref, sa_wo_ref, sa_bo_ref,
                         ca_wv_ref, ca_bv_ref, ca_wo_ref, ca_bo_ref,
                         ln_g_ref, ln_b_ref,
                         w1_ref, b1_ref, w2_ref, b2_ref,
                         un_w_ref, un_b_ref,
                         out_ref,
                         *, depth, num_heads, head_dim, embed_dim):
    """All decoder layers + patch unembedding for one batch element (grid over B)."""
    E, H, D = embed_dim, num_heads, head_dim
    cdt = jnp.bfloat16                       # MXU-native dtype for matmul inputs
    scale = 1.0 / math.sqrt(D)

    lat = latent_ref[0]                      # (1, E)  latent for this batch element
    x = pos_ref[...]                         # (S, E)  target = pos_embed (bcast over B)

    for l in range(depth):                   # static unroll; depth is small
        ln_g = ln_g_ref[l]                   # (3, E)
        ln_b = ln_b_ref[l]

        # ---- self-attention: fused QKV matmul + single output projection ----
        qkv = jnp.dot(x.astype(cdt), sa_wqkv_ref[l],
                      preferred_element_type=jnp.float32) + sa_bqkv_ref[l]  # (S, 3E)
        head_outs = []
        for h in range(H):                   # static unroll over heads (H small)
            qh = qkv[:, h * D:(h + 1) * D]                    # (S, D)
            kh = qkv[:, E + h * D:E + (h + 1) * D]            # (S, D)
            vh = qkv[:, 2 * E + h * D:2 * E + (h + 1) * D]    # (S, D)
            s = jnp.dot(qh, kh.T, preferred_element_type=jnp.float32) * scale
            s = s - jnp.max(s, axis=-1, keepdims=True)
            p = jnp.exp(s)
            p = p * pl.reciprocal(jnp.sum(p, axis=-1, keepdims=True), approx=True)
            head_outs.append(jnp.dot(p, vh, preferred_element_type=jnp.float32))
        attn = jnp.concatenate(head_outs, axis=-1)                           # (S, E)
        sa_out = jnp.dot(attn.astype(cdt), sa_wo_ref[l],
                         preferred_element_type=jnp.float32) + sa_bo_ref[l]
        x = _layernorm(x + sa_out, ln_g[0:1], ln_b[0:1])

        # ---- cross-attention (degenerate): memory rows are all the latent,
        #      so softmax is uniform and the output is exactly
        #      W_o(V_proj(latent)) + b_o, independent of the queries. ----
        v_lat = jnp.dot(lat.astype(cdt), ca_wv_ref[l],
                        preferred_element_type=jnp.float32) + ca_bv_ref[l]   # (1, E)
        ca_out = jnp.dot(v_lat.astype(cdt), ca_wo_ref[l],
                         preferred_element_type=jnp.float32) + ca_bo_ref[l]  # (1, E)
        x = _layernorm(x + ca_out, ln_g[1:2], ln_b[1:2])

        # ---- feed-forward (relu) ----
        h1 = jnp.maximum(jnp.dot(x.astype(cdt), w1_ref[l],
                                 preferred_element_type=jnp.float32) + b1_ref[l], 0.0)
        ff = jnp.dot(h1.astype(cdt), w2_ref[l],
                     preferred_element_type=jnp.float32) + b2_ref[l]
        x = _layernorm(x + ff, ln_g[2:3], ln_b[2:3])

    # ---- patch unembedding; output is lane-padded to a multiple of 128 ----
    y = jnp.dot(x.astype(cdt), un_w_ref[...],
                preferred_element_type=jnp.float32) + un_b_ref[...]          # (S, Opad)
    out_ref[0] = y.astype(out_ref.dtype)


# ----------------------------- parameters ----------------------------------


def init_params(key, *, embed_dim, num_heads, mlp_dim, depth,
                num_patches, patch_size, output_channels):
    E, F = embed_dim, mlp_dim
    scale = 0.02
    wdt = jnp.bfloat16  # matmul weights in bf16; biases / LN params stay f32

    def nrm(k, shape):
        return scale * jax.random.normal(k, shape, jnp.float32)

    keys = jax.random.split(key, depth * 6 + 2)
    sa_wqkv, sa_bqkv, sa_wo, sa_bo = [], [], [], []
    ca_wv, ca_bv, ca_wo, ca_bo = [], [], [], []
    ln_g, ln_b = [], []
    w1, b1, w2, b2 = [], [], [], []
    for l in range(depth):
        k = keys[l * 6:(l + 1) * 6]
        sa_in_w = nrm(k[0], (3 * E, E))      # in_proj_weight (PyTorch layout)
        sa_out_w = nrm(k[1], (E, E))         # out_proj.weight
        ca_in_w = nrm(k[2], (3 * E, E))
        ca_out_w = nrm(k[3], (E, E))
        w1_pt = nrm(k[4], (F, E))            # linear1.weight
        w2_pt = nrm(k[5], (E, F))            # linear2.weight

        sa_wqkv.append(sa_in_w.T)                          # (E, 3E): x @ W -> [q|k|v]
        sa_bqkv.append(jnp.zeros((1, 3 * E), jnp.float32))
        sa_wo.append(sa_out_w.T)                           # (E, E)
        sa_bo.append(jnp.zeros((1, E), jnp.float32))
        ca_wv.append(ca_in_w[2 * E:].T)                    # value projection only
        ca_bv.append(jnp.zeros((1, E), jnp.float32))
        ca_wo.append(ca_out_w.T)
        ca_bo.append(jnp.zeros((1, E), jnp.float32))
        ln_g.append(jnp.ones((3, E), jnp.float32))
        ln_b.append(jnp.zeros((3, E), jnp.float32))
        w1.append(w1_pt.T)
        b1.append(jnp.zeros((1, F), jnp.float32))
        w2.append(w2_pt.T)
        b2.append(jnp.zeros((1, E), jnp.float32))

    out_dim = patch_size * patch_size * output_channels
    out_pad = ((out_dim + 127) // 128) * 128
    # pos_embed is zeros in the PyTorch __init__; small deterministic random
    # init here so the test exercises non-degenerate self-attention.
    pos_embed = nrm(keys[-2], (num_patches, E))
    un_w = nrm(keys[-1], (out_dim, E)).T                   # (E, out_dim)
    un_w = jnp.pad(un_w, ((0, 0), (0, out_pad - out_dim)))  # lane-dense pad
    un_b = jnp.zeros((1, out_pad), jnp.float32)

    def stk(xs, dt=jnp.float32):
        return jnp.stack(xs).astype(dt)

    return dict(
        pos_embed=pos_embed,
        sa_wqkv=stk(sa_wqkv, wdt), sa_bqkv=stk(sa_bqkv),
        sa_wo=stk(sa_wo, wdt), sa_bo=stk(sa_bo),
        ca_wv=stk(ca_wv, wdt), ca_bv=stk(ca_bv),
        ca_wo=stk(ca_wo, wdt), ca_bo=stk(ca_bo),
        ln_g=stk(ln_g), ln_b=stk(ln_b),
        w1=stk(w1, wdt), b1=stk(b1),
        w2=stk(w2, wdt), b2=stk(b2),
        unembed_w=un_w.astype(wdt), unembed_b=un_b,
    )


# ----------------------------- forward --------------------------------------


def transformer_decoder_forward(latent, params, *, image_size, patch_size,
                                num_heads, output_channels):
    B, E = latent.shape
    pps = image_size // patch_size
    S = pps * pps
    out_dim = patch_size * patch_size * output_channels
    out_pad = params["unembed_w"].shape[1]
    depth = params["sa_wqkv"].shape[0]

    kernel = functools.partial(fused_decoder_kernel, depth=depth,
                               num_heads=num_heads, head_dim=E // num_heads,
                               embed_dim=E)

    weight_names = ("sa_wqkv", "sa_bqkv", "sa_wo", "sa_bo",
                    "ca_wv", "ca_bv", "ca_wo", "ca_bo",
                    "ln_g", "ln_b", "w1", "b1", "w2", "b2",
                    "unembed_w", "unembed_b")
    weights = [params[n] for n in weight_names]

    latent3 = latent.astype(jnp.float32)[:, None, :]       # (B, 1, E) — no (B,S,E) memory

    def full_spec(a):
        nd = a.ndim
        return pl.BlockSpec(a.shape, lambda b, _nd=nd: (0,) * _nd)

    out = pl.pallas_call(
        kernel,
        out_shape=jax.ShapeDtypeStruct((B, S, out_pad), jnp.float32),
        grid=(B,),
        in_specs=[pl.BlockSpec((1, 1, E), lambda b: (b, 0, 0)),   # latent
                  full_spec(params["pos_embed"])]
                 + [full_spec(a) for a in weights],
        out_specs=pl.BlockSpec((1, S, out_pad), lambda b: (b, 0, 0)),
        compiler_params=pltpu.CompilerParams(
            dimension_semantics=("parallel",)),     # v7x: batch sharded over 2 TCs
    )(latent3, params["pos_embed"], *weights)

    # strip lane padding, then (B, S, P*P*C) -> (B, C, H, W)
    x = out[:, :, :out_dim]
    C = output_channels
    x = x.reshape(B, pps, pps, C, patch_size, patch_size)
    x = jnp.transpose(x, (0, 3, 1, 4, 2, 5))
    return x.reshape(B, C, image_size, image_size)


# ------------------------------- main ---------------------------------------


if __name__ == "__main__":
    # Small config consistent with the module: num_patches = (16/4)^2 = 16
    image_size = 16
    patch_size = 4
    embed_dim = 128
    num_heads = 4
    mlp_dim = 256
    depth = 2
    output_channels = 3
    batch = 2

    key = jax.random.PRNGKey(0)
    k_lat, k_par = jax.random.split(key)
    latent = jax.random.normal(k_lat, (batch, embed_dim), jnp.float32)

    params = init_params(
        k_par, embed_dim=embed_dim, num_heads=num_heads, mlp_dim=mlp_dim,
        depth=depth, num_patches=(image_size // patch_size) ** 2,
        patch_size=patch_size, output_channels=output_channels)

    img = transformer_decoder_forward(
        latent, params, image_size=image_size, patch_size=patch_size,
        num_heads=num_heads, output_channels=output_channels)
    img = jax.block_until_ready(img)

    assert img.shape == (batch, output_channels, image_size, image_size), img.shape
    assert bool(jnp.all(jnp.isfinite(img)))
    print("KERNEL_OK")
</pallas_src>

<mosaic_0001>
module attributes {stable_mosaic.version = 11 : i64} {
  func.func @fused_decoder_kernel(%arg0: i32, %arg1: memref<1x1x128xf32, #tpu.memory_space<vmem>>, %arg2: memref<16x128xf32, #tpu.memory_space<vmem>>, %arg3: memref<2x128x384xbf16, #tpu.memory_space<vmem>>, %arg4: memref<2x1x384xf32, #tpu.memory_space<vmem>>, %arg5: memref<2x128x128xbf16, #tpu.memory_space<vmem>>, %arg6: memref<2x1x128xf32, #tpu.memory_space<vmem>>, %arg7: memref<2x128x128xbf16, #tpu.memory_space<vmem>>, %arg8: memref<2x1x128xf32, #tpu.memory_space<vmem>>, %arg9: memref<2x128x128xbf16, #tpu.memory_space<vmem>>, %arg10: memref<2x1x128xf32, #tpu.memory_space<vmem>>, %arg11: memref<2x3x128xf32, #tpu.memory_space<vmem>>, %arg12: memref<2x3x128xf32, #tpu.memory_space<vmem>>, %arg13: memref<2x128x256xbf16, #tpu.memory_space<vmem>>, %arg14: memref<2x1x256xf32, #tpu.memory_space<vmem>>, %arg15: memref<2x256x128xbf16, #tpu.memory_space<vmem>>, %arg16: memref<2x1x128xf32, #tpu.memory_space<vmem>>, %arg17: memref<128x128xbf16, #tpu.memory_space<vmem>>, %arg18: memref<1x128xf32, #tpu.memory_space<vmem>>, %arg19: memref<1x16x128xf32, #tpu.memory_space<vmem>>) attributes {dimension_semantics = [#tpu.dimension_semantics<parallel>], iteration_bounds = array<i64: 2>, scalar_prefetch = 0 : i64, scratch_operands = 0 : i64, tpu.core_type = #tpu.core_type<tc>, window_params = [{transform_indices = @transform_0, window_bounds = array<i64: 1, 1, 128>}, {pipeline_mode = #tpu.pipeline_mode<synchronous>, transform_indices = @transform_1, window_bounds = array<i64: 16, 128>}, {pipeline_mode = #tpu.pipeline_mode<synchronous>, transform_indices = @transform_2, window_bounds = array<i64: 2, 128, 384>}, {pipeline_mode = #tpu.pipeline_mode<synchronous>, transform_indices = @transform_3, window_bounds = array<i64: 2, 1, 384>}, {pipeline_mode = #tpu.pipeline_mode<synchronous>, transform_indices = @transform_4, window_bounds = array<i64: 2, 128, 128>}, {pipeline_mode = #tpu.pipeline_mode<synchronous>, transform_indices = @transform_5, window_bounds = array<i64: 2, 1, 128>}, {pipeline_mode = #tpu.pipeline_mode<synchronous>, transform_indices = @transform_6, window_bounds = array<i64: 2, 128, 128>}, {pipeline_mode = #tpu.pipeline_mode<synchronous>, transform_indices = @transform_7, window_bounds = array<i64: 2, 1, 128>}, {pipeline_mode = #tpu.pipeline_mode<synchronous>, transform_indices = @transform_8, window_bounds = array<i64: 2, 128, 128>}, {pipeline_mode = #tpu.pipeline_mode<synchronous>, transform_indices = @transform_9, window_bounds = array<i64: 2, 1, 128>}, {pipeline_mode = #tpu.pipeline_mode<synchronous>, transform_indices = @transform_10, window_bounds = array<i64: 2, 3, 128>}, {pipeline_mode = #tpu.pipeline_mode<synchronous>, transform_indices = @transform_11, window_bounds = array<i64: 2, 3, 128>}, {pipeline_mode = #tpu.pipeline_mode<synchronous>, transform_indices = @transform_12, window_bounds = array<i64: 2, 128, 256>}, {pipeline_mode = #tpu.pipeline_mode<synchronous>, transform_indices = @transform_13, window_bounds = array<i64: 2, 1, 256>}, {pipeline_mode = #tpu.pipeline_mode<synchronous>, transform_indices = @transform_14, window_bounds = array<i64: 2, 256, 128>}, {pipeline_mode = #tpu.pipeline_mode<synchronous>, transform_indices = @transform_15, window_bounds = array<i64: 2, 1, 128>}, {pipeline_mode = #tpu.pipeline_mode<synchronous>, transform_indices = @transform_16, window_bounds = array<i64: 128, 128>}, {pipeline_mode = #tpu.pipeline_mode<synchronous>, transform_indices = @transform_17, window_bounds = array<i64: 1, 128>}, {transform_indices = @transform_18, window_bounds = array<i64: 1, 16, 128>}]} {
    %c0 = arith.constant 0 : index
    %c0_0 = arith.constant 0 : index
    %c0_1 = arith.constant 0 : index
    %0 = vector.load %arg1[%c0, %c0_0, %c0_1] : memref<1x1x128xf32, #tpu.memory_space<vmem>>, vector<1x1x128xf32>
    %1 = vector.shape_cast %0 : vector<1x1x128xf32> to vector<1x128xf32>
    %c0_2 = arith.constant 0 : index
    %c0_3 = arith.constant 0 : index
    %2 = vector.load %arg2[%c0_2, %c0_3] : memref<16x128xf32, #tpu.memory_space<vmem>>, vector<16x128xf32>
    %c0_4 = arith.constant 0 : index
    %c0_5 = arith.constant 0 : index
    %c0_6 = arith.constant 0 : index
    %3 = vector.load %arg11[%c0_4, %c0_5, %c0_6] : memref<2x3x128xf32, #tpu.memory_space<vmem>>, vector<1x3x128xf32>
    %4 = vector.shape_cast %3 : vector<1x3x128xf32> to vector<3x128xf32>
    %c0_7 = arith.constant 0 : index
    %c0_8 = arith.constant 0 : index
    %c0_9 = arith.constant 0 : index
    %5 = vector.load %arg12[%c0_7, %c0_8, %c0_9] : memref<2x3x128xf32, #tpu.memory_space<vmem>>, vector<1x3x128xf32>
    %6 = vector.shape_cast %5 : vector<1x3x128xf32> to vector<3x128xf32>
    %7 = arith.truncf %2 : vector<16x128xf32> to vector<16x128xbf16>
    %c0_10 = arith.constant 0 : index
    %c0_11 = arith.constant 0 : index
    %c0_12 = arith.constant 0 : index
    %8 = vector.load %arg3[%c0_10, %c0_11, %c0_12] : memref<2x128x384xbf16, #tpu.memory_space<vmem>>, vector<1x128x384xbf16>
    %9 = vector.shape_cast %8 : vector<1x128x384xbf16> to vector<128x384xbf16>
    %cst = arith.constant dense<0.000000e+00> : vector<16x384xf32>
    %10 = tpu.matmul %7, %9, %cst {dimension_numbers = #tpu.dot_dimension_numbers<[1], [0], [0], [1], [0, 0, 1, 1], [], []>} : vector<16x128xbf16>, vector<128x384xbf16>, vector<16x384xf32> -> vector<16x384xf32>
    %c0_13 = arith.constant 0 : index
    %c0_14 = arith.constant 0 : index
    %c0_15 = arith.constant 0 : index
    %11 = vector.load %arg4[%c0_13, %c0_14, %c0_15] : memref<2x1x384xf32, #tpu.memory_space<vmem>>, vector<1x1x384xf32>
    %12 = vector.shape_cast %11 : vector<1x1x384xf32> to vector<1x384xf32>
    %13 = vector.broadcast %12 : vector<1x384xf32> to vector<16x384xf32>
    %14 = arith.addf %10, %13 : vector<16x384xf32>
    %15 = vector.extract_strided_slice %14 {offsets = [0, 0], sizes = [16, 32], strides = [1, 1]} : vector<16x384xf32> to vector<16x32xf32>
    %16 = vector.extract_strided_slice %14 {offsets = [0, 128], sizes = [16, 32], strides = [1, 1]} : vector<16x384xf32> to vector<16x32xf32>
    %17 = vector.extract_strided_slice %14 {offsets = [0, 256], sizes = [16, 32], strides = [1, 1]} : vector<16x384xf32> to vector<16x32xf32>
    %18 = tpu.transpose %16, [1, 0] : vector<16x32xf32> -> vector<32x16xf32>
    %cst_16 = arith.constant dense<0.000000e+00> : vector<16x16xf32>
    %19 = tpu.matmul %15, %18, %cst_16 {dimension_numbers = #tpu.dot_dimension_numbers<[1], [0], [0], [1], [0, 0, 1, 1], [], []>} : vector<16x32xf32>, vector<32x16xf32>, vector<16x16xf32> -> vector<16x16xf32>
    %cst_17 = arith.constant 0.176776692 : f32
    %20 = vector.broadcast %cst_17 : f32 to vector<16x16xf32>
    %21 = arith.mulf %19, %20 : vector<16x16xf32>
    %cst_18 = arith.constant dense<0xFF800000> : vector<16xf32>
    %22 = vector.multi_reduction <maximumf>, %21, %cst_18 [1] : vector<16x16xf32> to vector<16xf32>
    %23 = vector.shape_cast %22 : vector<16xf32> to vector<16x1xf32>
    %24 = vector.broadcast %23 : vector<16x1xf32> to vector<16x16xf32>
    %25 = arith.subf %21, %24 : vector<16x16xf32>
    %26 = math.exp %25 : vector<16x16xf32>
    %cst_19 = arith.constant dense<0.000000e+00> : vector<16xf32>
    %27 = vector.multi_reduction <add>, %26, %cst_19 [1] : vector<16x16xf32> to vector<16xf32>
    %28 = vector.shape_cast %27 : vector<16xf32> to vector<16x1xf32>
    %29 = tpu.reciprocal %28 {approx = true} : vector<16x1xf32> -> vector<16x1xf32>
    %30 = vector.broadcast %29 : vector<16x1xf32> to vector<16x16xf32>
    %31 = arith.mulf %26, %30 : vector<16x16xf32>
    %cst_20 = arith.constant dense<0.000000e+00> : vector<16x32xf32>
    %32 = tpu.matmul %31, %17, %cst_20 {dimension_numbers = #tpu.dot_dimension_numbers<[1], [0], [0], [1], [0, 0, 1, 1], [], []>} : vector<16x16xf32>, vector<16x32xf32>, vector<16x32xf32> -> vector<16x32xf32>
    %33 = vector.extract_strided_slice %14 {offsets = [0, 32], sizes = [16, 32], strides = [1, 1]} : vector<16x384xf32> to vector<16x32xf32>
    %34 = vector.extract_strided_slice %14 {offsets = [0, 160], sizes = [16, 32], strides = [1, 1]} : vector<16x384xf32> to vector<16x32xf32>
    %35 = vector.extract_strided_slice %14 {offsets = [0, 288], sizes = [16, 32], strides = [1, 1]} : vector<16x384xf32> to vector<16x32xf32>
    %36 = tpu.transpose %34, [1, 0] : vector<16x32xf32> -> vector<32x16xf32>
    %cst_21 = arith.constant dense<0.000000e+00> : vector<16x16xf32>
    %37 = tpu.matmul %33, %36, %cst_21 {dimension_numbers = #tpu.dot_dimension_numbers<[1], [0], [0], [1], [0, 0, 1, 1], [], []>} : vector<16x32xf32>, vector<32x16xf32>, vector<16x16xf32> -> vector<16x16xf32>
    %cst_22 = arith.constant 0.176776692 : f32
    %38 = vector.broadcast %cst_22 : f32 to vector<16x16xf32>
    %39 = arith.mulf %37, %38 : vector<16x16xf32>
    %cst_23 = arith.constant dense<0xFF800000> : vector<16xf32>
    %40 = vector.multi_reduction <maximumf>, %39, %cst_23 [1] : vector<16x16xf32> to vector<16xf32>
    %41 = vector.shape_cast %40 : vector<16xf32> to vector<16x1xf32>
    %42 = vector.broadcast %41 : vector<16x1xf32> to vector<16x16xf32>
    %43 = arith.subf %39, %42 : vector<16x16xf32>
    %44 = math.exp %43 : vector<16x16xf32>
    %cst_24 = arith.constant dense<0.000000e+00> : vector<16xf32>
    %45 = vector.multi_reduction <add>, %44, %cst_24 [1] : vector<16x16xf32> to vector<16xf32>
    %46 = vector.shape_cast %45 : vector<16xf32> to vector<16x1xf32>
    %47 = tpu.reciprocal %46 {approx = true} : vector<16x1xf32> -> vector<16x1xf32>
    %48 = vector.broadcast %47 : vector<16x1xf32> to vector<16x16xf32>
    %49 = arith.mulf %44, %48 : vector<16x16xf32>
    %cst_25 = arith.constant dense<0.000000e+00> : vector<16x32xf32>
    %50 = tpu.matmul %49, %35, %cst_25 {dimension_numbers = #tpu.dot_dimension_numbers<[1], [0], [0], [1], [0, 0, 1, 1], [], []>} : vector<16x16xf32>, vector<16x32xf32>, vector<16x32xf32> -> vector<16x32xf32>
    %51 = vector.extract_strided_slice %14 {offsets = [0, 64], sizes = [16, 32], strides = [1, 1]} : vector<16x384xf32> to vector<16x32xf32>
    %52 = vector.extract_strided_slice %14 {offsets = [0, 192], sizes = [16, 32], strides = [1, 1]} : vector<16x384xf32> to vector<16x32xf32>
    %53 = vector.extract_strided_slice %14 {offsets = [0, 320], sizes = [16, 32], strides = [1, 1]} : vector<16x384xf32> to vector<16x32xf32>
    %54 = tpu.transpose %52, [1, 0] : vector<16x32xf32> -> vector<32x16xf32>
    %cst_26 = arith.constant dense<0.000000e+00> : vector<16x16xf32>
    %55 = tpu.matmul %51, %54, %cst_26 {dimension_numbers = #tpu.dot_dimension_numbers<[1], [0], [0], [1], [0, 0, 1, 1], [], []>} : vector<16x32xf32>, vector<32x16xf32>, vector<16x16xf32> -> vector<16x16xf32>
    %cst_27 = arith.constant 0.176776692 : f32
    %56 = vector.broadcast %cst_27 : f32 to vector<16x16xf32>
    %57 = arith.mulf %55, %56 : vector<16x16xf32>
    %cst_28 = arith.constant dense<0xFF800000> : vector<16xf32>
    %58 = vector.multi_reduction <maximumf>, %57, %cst_28 [1] : vector<16x16xf32> to vector<16xf32>
    %59 = vector.shape_cast %58 : vector<16xf32> to vector<16x1xf32>
    %60 = vector.broadcast %59 : vector<16x1xf32> to vector<16x16xf32>
    %61 = arith.subf %57, %60 : vector<16x16xf32>
    %62 = math.exp %61 : vector<16x16xf32>
    %cst_29 = arith.constant dense<0.000000e+00> : vector<16xf32>
    %63 = vector.multi_reduction <add>, %62, %cst_29 [1] : vector<16x16xf32> to vector<16xf32>
    %64 = vector.shape_cast %63 : vector<16xf32> to vector<16x1xf32>
    %65 = tpu.reciprocal %64 {approx = true} : vector<16x1xf32> -> vector<16x1xf32>
    %66 = vector.broadcast %65 : vector<16x1xf32> to vector<16x16xf32>
    %67 = arith.mulf %62, %66 : vector<16x16xf32>
    %cst_30 = arith.constant dense<0.000000e+00> : vector<16x32xf32>
    %68 = tpu.matmul %67, %53, %cst_30 {dimension_numbers = #tpu.dot_dimension_numbers<[1], [0], [0], [1], [0, 0, 1, 1], [], []>} : vector<16x16xf32>, vector<16x32xf32>, vector<16x32xf32> -> vector<16x32xf32>
    %69 = vector.extract_strided_slice %14 {offsets = [0, 96], sizes = [16, 32], strides = [1, 1]} : vector<16x384xf32> to vector<16x32xf32>
    %70 = vector.extract_strided_slice %14 {offsets = [0, 224], sizes = [16, 32], strides = [1, 1]} : vector<16x384xf32> to vector<16x32xf32>
    %71 = vector.extract_strided_slice %14 {offsets = [0, 352], sizes = [16, 32], strides = [1, 1]} : vector<16x384xf32> to vector<16x32xf32>
    %72 = tpu.transpose %70, [1, 0] : vector<16x32xf32> -> vector<32x16xf32>
    %cst_31 = arith.constant dense<0.000000e+00> : vector<16x16xf32>
    %73 = tpu.matmul %69, %72, %cst_31 {dimension_numbers = #tpu.dot_dimension_numbers<[1], [0], [0], [1], [0, 0, 1, 1], [], []>} : vector<16x32xf32>, vector<32x16xf32>, vector<16x16xf32> -> vector<16x16xf32>
    %cst_32 = arith.constant 0.176776692 : f32
    %74 = vector.broadcast %cst_32 : f32 to vector<16x16xf32>
    %75 = arith.mulf %73, %74 : vector<16x16xf32>
    %cst_33 = arith.constant dense<0xFF800000> : vector<16xf32>
    %76 = vector.multi_reduction <maximumf>, %75, %cst_33 [1] : vector<16x16xf32> to vector<16xf32>
    %77 = vector.shape_cast %76 : vector<16xf32> to vector<16x1xf32>
    %78 = vector.broadcast %77 : vector<16x1xf32> to vector<16x16xf32>
    %79 = arith.subf %75, %78 : vector<16x16xf32>
    %80 = math.exp %79 : vector<16x16xf32>
    %cst_34 = arith.constant dense<0.000000e+00> : vector<16xf32>
    %81 = vector.multi_reduction <add>, %80, %cst_34 [1] : vector<16x16xf32> to vector<16xf32>
    %82 = vector.shape_cast %81 : vector<16xf32> to vector<16x1xf32>
    %83 = tpu.reciprocal %82 {approx = true} : vector<16x1xf32> -> vector<16x1xf32>
    %84 = vector.broadcast %83 : vector<16x1xf32> to vector<16x16xf32>
    %85 = arith.mulf %80, %84 : vector<16x16xf32>
    %cst_35 = arith.constant dense<0.000000e+00> : vector<16x32xf32>
    %86 = tpu.matmul %85, %71, %cst_35 {dimension_numbers = #tpu.dot_dimension_numbers<[1], [0], [0], [1], [0, 0, 1, 1], [], []>} : vector<16x16xf32>, vector<16x32xf32>, vector<16x32xf32> -> vector<16x32xf32>
    %87 = tpu.concatenate %32, %50, %68, %86 in 1 : vector<16x32xf32>, vector<16x32xf32>, vector<16x32xf32>, vector<16x32xf32> -> vector<16x128xf32>
    %88 = arith.truncf %87 : vector<16x128xf32> to vector<16x128xbf16>
    %c0_36 = arith.constant 0 : index
    %c0_37 = arith.constant 0 : index
    %c0_38 = arith.constant 0 : index
    %89 = vector.load %arg5[%c0_36, %c0_37, %c0_38] : memref<2x128x128xbf16, #tpu.memory_space<vmem>>, vector<1x128x128xbf16>
    %90 = vector.shape_cast %89 : vector<1x128x128xbf16> to vector<128x128xbf16>
    %cst_39 = arith.constant dense<0.000000e+00> : vector<16x128xf32>
    %91 = tpu.matmul %88, %90, %cst_39 {dimension_numbers = #tpu.dot_dimension_numbers<[1], [0], [0], [1], [0, 0, 1, 1], [], []>} : vector<16x128xbf16>, vector<128x128xbf16>, vector<16x128xf32> -> vector<16x128xf32>
    %c0_40 = arith.constant 0 : index
    %c0_41 = arith.constant 0 : index
    %c0_42 = arith.constant 0 : index
    %92 = vector.load %arg6[%c0_40, %c0_41, %c0_42] : memref<2x1x128xf32, #tpu.memory_space<vmem>>, vector<1x1x128xf32>
    %93 = vector.shape_cast %92 : vector<1x1x128xf32> to vector<1x128xf32>
    %94 = vector.broadcast %93 : vector<1x128xf32> to vector<16x128xf32>
    %95 = arith.addf %91, %94 : vector<16x128xf32>
    %96 = arith.addf %2, %95 : vector<16x128xf32>
    %97 = vector.extract_strided_slice %4 {offsets = [0, 0], sizes = [1, 128], strides = [1, 1]} : vector<3x128xf32> to vector<1x128xf32>
    %98 = vector.extract_strided_slice %6 {offsets = [0, 0], sizes = [1, 128], strides = [1, 1]} : vector<3x128xf32> to vector<1x128xf32>
    %cst_43 = arith.constant dense<0.000000e+00> : vector<16xf32>
    %99 = vector.multi_reduction <add>, %96, %cst_43 [1] : vector<16x128xf32> to vector<16xf32>
    %100 = vector.shape_cast %99 : vector<16xf32> to vector<16x1xf32>
    %cst_44 = arith.constant 1.280000e+02 : f32
    %101 = vector.broadcast %cst_44 : f32 to vector<16x1xf32>
    %102 = arith.divf %100, %101 : vector<16x1xf32>
    %103 = vector.broadcast %102 : vector<16x1xf32> to vector<16x128xf32>
    %104 = arith.subf %96, %103 : vector<16x128xf32>
    %105 = arith.mulf %104, %104 : vector<16x128xf32>
    %cst_45 = arith.constant dense<0.000000e+00> : vector<16xf32>
    %106 = vector.multi_reduction <add>, %105, %cst_45 [1] : vector<16x128xf32> to vector<16xf32>
    %107 = vector.shape_cast %106 : vector<16xf32> to vector<16x1xf32>
    %cst_46 = arith.constant 1.280000e+02 : f32
    %108 = vector.broadcast %cst_46 : f32 to vector<16x1xf32>
    %109 = arith.divf %107, %108 : vector<16x1xf32>
    %110 = vector.broadcast %102 : vector<16x1xf32> to vector<16x128xf32>
    %111 = arith.subf %96, %110 : vector<16x128xf32>
    %cst_47 = arith.constant 9.99999974E-6 : f32
    %112 = vector.broadcast %cst_47 : f32 to vector<16x1xf32>
    %113 = arith.addf %109, %112 : vector<16x1xf32>
    %114 = math.rsqrt %113 : vector<16x1xf32>
    %115 = vector.broadcast %114 : vector<16x1xf32> to vector<16x128xf32>
    %116 = arith.mulf %111, %115 : vector<16x128xf32>
    %117 = vector.broadcast %97 : vector<1x128xf32> to vector<16x128xf32>
    %118 = arith.mulf %116, %117 : vector<16x128xf32>
    %119 = vector.broadcast %98 : vector<1x128xf32> to vector<16x128xf32>
    %120 = arith.addf %118, %119 : vector<16x128xf32>
    %121 = arith.truncf %1 : vector<1x128xf32> to vector<1x128xbf16>
    %c0_48 = arith.constant 0 : index
    %c0_49 = arith.constant 0 : index
    %c0_50 = arith.constant 0 : index
    %122 = vector.load %arg7[%c0_48, %c0_49, %c0_50] : memref<2x128x128xbf16, #tpu.memory_space<vmem>>, vector<1x128x128xbf16>
    %123 = vector.shape_cast %122 : vector<1x128x128xbf16> to vector<128x128xbf16>
    %cst_51 = arith.constant dense<0.000000e+00> : vector<1x128xf32>
    %124 = tpu.matmul %121, %123, %cst_51 {dimension_numbers = #tpu.dot_dimension_numbers<[1], [0], [0], [1], [0, 0, 1, 1], [], []>} : vector<1x128xbf16>, vector<128x128xbf16>, vector<1x128xf32> -> vector<1x128xf32>
    %c0_52 = arith.constant 0 : index
    %c0_53 = arith.constant 0 : index
    %c0_54 = arith.constant 0 : index
    %125 = vector.load %arg8[%c0_52, %c0_53, %c0_54] : memref<2x1x128xf32, #tpu.memory_space<vmem>>, vector<1x1x128xf32>
    %126 = vector.shape_cast %125 : vector<1x1x128xf32> to vector<1x128xf32>
    %127 = arith.addf %124, %126 : vector<1x128xf32>
    %128 = arith.truncf %127 : vector<1x128xf32> to vector<1x128xbf16>
    %c0_55 = arith.constant 0 : index
    %c0_56 = arith.constant 0 : index
    %c0_57 = arith.constant 0 : index
    %129 = vector.load %arg9[%c0_55, %c0_56, %c0_57] : memref<2x128x128xbf16, #tpu.memory_space<vmem>>, vector<1x128x128xbf16>
    %130 = vector.shape_cast %129 : vector<1x128x128xbf16> to vector<128x128xbf16>
    %cst_58 = arith.constant dense<0.000000e+00> : vector<1x128xf32>
    %131 = tpu.matmul %128, %130, %cst_58 {dimension_numbers = #tpu.dot_dimension_numbers<[1], [0], [0], [1], [0, 0, 1, 1], [], []>} : vector<1x128xbf16>, vector<128x128xbf16>, vector<1x128xf32> -> vector<1x128xf32>
    %c0_59 = arith.constant 0 : index
    %c0_60 = arith.constant 0 : index
    %c0_61 = arith.constant 0 : index
    %132 = vector.load %arg10[%c0_59, %c0_60, %c0_61] : memref<2x1x128xf32, #tpu.memory_space<vmem>>, vector<1x1x128xf32>
    %133 = vector.shape_cast %132 : vector<1x1x128xf32> to vector<1x128xf32>
    %134 = arith.addf %131, %133 : vector<1x128xf32>
    %135 = vector.broadcast %134 : vector<1x128xf32> to vector<16x128xf32>
    %136 = arith.addf %120, %135 : vector<16x128xf32>
    %137 = vector.extract_strided_slice %4 {offsets = [1, 0], sizes = [1, 128], strides = [1, 1]} : vector<3x128xf32> to vector<1x128xf32>
    %138 = vector.extract_strided_slice %6 {offsets = [1, 0], sizes = [1, 128], strides = [1, 1]} : vector<3x128xf32> to vector<1x128xf32>
    %cst_62 = arith.constant dense<0.000000e+00> : vector<16xf32>
    %139 = vector.multi_reduction <add>, %136, %cst_62 [1] : vector<16x128xf32> to vector<16xf32>
    %140 = vector.shape_cast %139 : vector<16xf32> to vector<16x1xf32>
    %cst_63 = arith.constant 1.280000e+02 : f32
    %141 = vector.broadcast %cst_63 : f32 to vector<16x1xf32>
    %142 = arith.divf %140, %141 : vector<16x1xf32>
    %143 = vector.broadcast %142 : vector<16x1xf32> to vector<16x128xf32>
    %144 = arith.subf %136, %143 : vector<16x128xf32>
    %145 = arith.mulf %144, %144 : vector<16x128xf32>
    %cst_64 = arith.constant dense<0.000000e+00> : vector<16xf32>
    %146 = vector.multi_reduction <add>, %145, %cst_64 [1] : vector<16x128xf32> to vector<16xf32>
    %147 = vector.shape_cast %146 : vector<16xf32> to vector<16x1xf32>
    %cst_65 = arith.constant 1.280000e+02 : f32
    %148 = vector.broadcast %cst_65 : f32 to vector<16x1xf32>
    %149 = arith.divf %147, %148 : vector<16x1xf32>
    %150 = vector.broadcast %142 : vector<16x1xf32> to vector<16x128xf32>
    %151 = arith.subf %136, %150 : vector<16x128xf32>
    %cst_66 = arith.constant 9.99999974E-6 : f32
    %152 = vector.broadcast %cst_66 : f32 to vector<16x1xf32>
    %153 = arith.addf %149, %152 : vector<16x1xf32>
    %154 = math.rsqrt %153 : vector<16x1xf32>
    %155 = vector.broadcast %154 : vector<16x1xf32> to vector<16x128xf32>
    %156 = arith.mulf %151, %155 : vector<16x128xf32>
    %157 = vector.broadcast %137 : vector<1x128xf32> to vector<16x128xf32>
    %158 = arith.mulf %156, %157 : vector<16x128xf32>
    %159 = vector.broadcast %138 : vector<1x128xf32> to vector<16x128xf32>
    %160 = arith.addf %158, %159 : vector<16x128xf32>
    %161 = arith.truncf %160 : vector<16x128xf32> to vector<16x128xbf16>
    %c0_67 = arith.constant 0 : index
    %c0_68 = arith.constant 0 : index
    %c0_69 = arith.constant 0 : index
    %162 = vector.load %arg13[%c0_67, %c0_68, %c0_69] : memref<2x128x256xbf16, #tpu.memory_space<vmem>>, vector<1x128x256xbf16>
    %163 = vector.shape_cast %162 : vector<1x128x256xbf16> to vector<128x256xbf16>
    %cst_70 = arith.constant dense<0.000000e+00> : vector<16x256xf32>
    %164 = tpu.matmul %161, %163, %cst_70 {dimension_numbers = #tpu.dot_dimension_numbers<[1], [0], [0], [1], [0, 0, 1, 1], [], []>} : vector<16x128xbf16>, vector<128x256xbf16>, vector<16x256xf32> -> vector<16x256xf32>
    %c0_71 = arith.constant 0 : index
    %c0_72 = arith.constant 0 : index
    %c0_73 = arith.constant 0 : index
    %165 = vector.load %arg14[%c0_71, %c0_72, %c0_73] : memref<2x1x256xf32, #tpu.memory_space<vmem>>, vector<1x1x256xf32>
    %166 = vector.shape_cast %165 : vector<1x1x256xf32> to vector<1x256xf32>
    %167 = vector.broadcast %166 : vector<1x256xf32> to vector<16x256xf32>
    %168 = arith.addf %164, %167 : vector<16x256xf32>
    %cst_74 = arith.constant 0.000000e+00 : f32
    %169 = vector.broadcast %cst_74 : f32 to vector<16x256xf32>
    %170 = arith.maximumf %168, %169 : vector<16x256xf32>
    %171 = arith.truncf %170 : vector<16x256xf32> to vector<16x256xbf16>
    %c0_75 = arith.constant 0 : index
    %c0_76 = arith.constant 0 : index
    %c0_77 = arith.constant 0 : index
    %172 = vector.load %arg15[%c0_75, %c0_76, %c0_77] : memref<2x256x128xbf16, #tpu.memory_space<vmem>>, vector<1x256x128xbf16>
    %173 = vector.shape_cast %172 : vector<1x256x128xbf16> to vector<256x128xbf16>
    %cst_78 = arith.constant dense<0.000000e+00> : vector<16x128xf32>
    %174 = tpu.matmul %171, %173, %cst_78 {dimension_numbers = #tpu.dot_dimension_numbers<[1], [0], [0], [1], [0, 0, 1, 1], [], []>} : vector<16x256xbf16>, vector<256x128xbf16>, vector<16x128xf32> -> vector<16x128xf32>
    %c0_79 = arith.constant 0 : index
    %c0_80 = arith.constant 0 : index
    %c0_81 = arith.constant 0 : index
    %175 = vector.load %arg16[%c0_79, %c0_80, %c0_81] : memref<2x1x128xf32, #tpu.memory_space<vmem>>, vector<1x1x128xf32>
    %176 = vector.shape_cast %175 : vector<1x1x128xf32> to vector<1x128xf32>
    %177 = vector.broadcast %176 : vector<1x128xf32> to vector<16x128xf32>
    %178 = arith.addf %174, %177 : vector<16x128xf32>
    %179 = arith.addf %160, %178 : vector<16x128xf32>
    %180 = vector.extract_strided_slice %4 {offsets = [2, 0], sizes = [1, 128], strides = [1, 1]} : vector<3x128xf32> to vector<1x128xf32>
    %181 = vector.extract_strided_slice %6 {offsets = [2, 0], sizes = [1, 128], strides = [1, 1]} : vector<3x128xf32> to vector<1x128xf32>
    %cst_82 = arith.constant dense<0.000000e+00> : vector<16xf32>
    %182 = vector.multi_reduction <add>, %179, %cst_82 [1] : vector<16x128xf32> to vector<16xf32>
    %183 = vector.shape_cast %182 : vector<16xf32> to vector<16x1xf32>
    %cst_83 = arith.constant 1.280000e+02 : f32
    %184 = vector.broadcast %cst_83 : f32 to vector<16x1xf32>
    %185 = arith.divf %183, %184 : vector<16x1xf32>
    %186 = vector.broadcast %185 : vector<16x1xf32> to vector<16x128xf32>
    %187 = arith.subf %179, %186 : vector<16x128xf32>
    %188 = arith.mulf %187, %187 : vector<16x128xf32>
    %cst_84 = arith.constant dense<0.000000e+00> : vector<16xf32>
    %189 = vector.multi_reduction <add>, %188, %cst_84 [1] : vector<16x128xf32> to vector<16xf32>
    %190 = vector.shape_cast %189 : vector<16xf32> to vector<16x1xf32>
    %cst_85 = arith.constant 1.280000e+02 : f32
    %191 = vector.broadcast %cst_85 : f32 to vector<16x1xf32>
    %192 = arith.divf %190, %191 : vector<16x1xf32>
    %193 = vector.broadcast %185 : vector<16x1xf32> to vector<16x128xf32>
    %194 = arith.subf %179, %193 : vector<16x128xf32>
    %cst_86 = arith.constant 9.99999974E-6 : f32
    %195 = vector.broadcast %cst_86 : f32 to vector<16x1xf32>
    %196 = arith.addf %192, %195 : vector<16x1xf32>
    %197 = math.rsqrt %196 : vector<16x1xf32>
    %198 = vector.broadcast %197 : vector<16x1xf32> to vector<16x128xf32>
    %199 = arith.mulf %194, %198 : vector<16x128xf32>
    %200 = vector.broadcast %180 : vector<1x128xf32> to vector<16x128xf32>
    %201 = arith.mulf %199, %200 : vector<16x128xf32>
    %202 = vector.broadcast %181 : vector<1x128xf32> to vector<16x128xf32>
    %203 = arith.addf %201, %202 : vector<16x128xf32>
    %c1 = arith.constant 1 : index
    %c0_87 = arith.constant 0 : index
    %c0_88 = arith.constant 0 : index
    %204 = vector.load %arg11[%c1, %c0_87, %c0_88] : memref<2x3x128xf32, #tpu.memory_space<vmem>>, vector<1x3x128xf32>
    %205 = vector.shape_cast %204 : vector<1x3x128xf32> to vector<3x128xf32>
    %c1_89 = arith.constant 1 : index
    %c0_90 = arith.constant 0 : index
    %c0_91 = arith.constant 0 : index
    %206 = vector.load %arg12[%c1_89, %c0_90, %c0_91] : memref<2x3x128xf32, #tpu.memory_space<vmem>>, vector<1x3x128xf32>
    %207 = vector.shape_cast %206 : vector<1x3x128xf32> to vector<3x128xf32>
    %208 = arith.truncf %203 : vector<16x128xf32> to vector<16x128xbf16>
    %c1_92 = arith.constant 1 : index
    %c0_93 = arith.constant 0 : index
    %c0_94 = arith.constant 0 : index
    %209 = vector.load %arg3[%c1_92, %c0_93, %c0_94] : memref<2x128x384xbf16, #tpu.memory_space<vmem>>, vector<1x128x384xbf16>
    %210 = vector.shape_cast %209 : vector<1x128x384xbf16> to vector<128x384xbf16>
    %cst_95 = arith.constant dense<0.000000e+00> : vector<16x384xf32>
    %211 = tpu.matmul %208, %210, %cst_95 {dimension_numbers = #tpu.dot_dimension_numbers<[1], [0], [0], [1], [0, 0, 1, 1], [], []>} : vector<16x128xbf16>, vector<128x384xbf16>, vector<16x384xf32> -> vector<16x384xf32>
    %c1_96 = arith.constant 1 : index
    %c0_97 = arith.constant 0 : index
    %c0_98 = arith.constant 0 : index
    %212 = vector.load %arg4[%c1_96, %c0_97, %c0_98] : memref<2x1x384xf32, #tpu.memory_space<vmem>>, vector<1x1x384xf32>
    %213 = vector.shape_cast %212 : vector<1x1x384xf32> to vector<1x384xf32>
    %214 = vector.broadcast %213 : vector<1x384xf32> to vector<16x384xf32>
    %215 = arith.addf %211, %214 : vector<16x384xf32>
    %216 = vector.extract_strided_slice %215 {offsets = [0, 0], sizes = [16, 32], strides = [1, 1]} : vector<16x384xf32> to vector<16x32xf32>
    %217 = vector.extract_strided_slice %215 {offsets = [0, 128], sizes = [16, 32], strides = [1, 1]} : vector<16x384xf32> to vector<16x32xf32>
    %218 = vector.extract_strided_slice %215 {offsets = [0, 256], sizes = [16, 32], strides = [1, 1]} : vector<16x384xf32> to vector<16x32xf32>
    %219 = tpu.transpose %217, [1, 0] : vector<16x32xf32> -> vector<32x16xf32>
    %cst_99 = arith.constant dense<0.000000e+00> : vector<16x16xf32>
    %220 = tpu.matmul %216, %219, %cst_99 {dimension_numbers = #tpu.dot_dimension_numbers<[1], [0], [0], [1], [0, 0, 1, 1], [], []>} : vector<16x32xf32>, vector<32x16xf32>, vector<16x16xf32> -> vector<16x16xf32>
    %cst_100 = arith.constant 0.176776692 : f32
    %221 = vector.broadcast %cst_100 : f32 to vector<16x16xf32>
    %222 = arith.mulf %220, %221 : vector<16x16xf32>
    %cst_101 = arith.constant dense<0xFF800000> : vector<16xf32>
    %223 = vector.multi_reduction <maximumf>, %222, %cst_101 [1] : vector<16x16xf32> to vector<16xf32>
    %224 = vector.shape_cast %223 : vector<16xf32> to vector<16x1xf32>
    %225 = vector.broadcast %224 : vector<16x1xf32> to vector<16x16xf32>
    %226 = arith.subf %222, %225 : vector<16x16xf32>
    %227 = math.exp %226 : vector<16x16xf32>
    %cst_102 = arith.constant dense<0.000000e+00> : vector<16xf32>
    %228 = vector.multi_reduction <add>, %227, %cst_102 [1] : vector<16x16xf32> to vector<16xf32>
    %229 = vector.shape_cast %228 : vector<16xf32> to vector<16x1xf32>
    %230 = tpu.reciprocal %229 {approx = true} : vector<16x1xf32> -> vector<16x1xf32>
    %231 = vector.broadcast %230 : vector<16x1xf32> to vector<16x16xf32>
    %232 = arith.mulf %227, %231 : vector<16x16xf32>
    %cst_103 = arith.constant dense<0.000000e+00> : vector<16x32xf32>
    %233 = tpu.matmul %232, %218, %cst_103 {dimension_numbers = #tpu.dot_dimension_numbers<[1], [0], [0], [1], [0, 0, 1, 1], [], []>} : vector<16x16xf32>, vector<16x32xf32>, vector<16x32xf32> -> vector<16x32xf32>
    %234 = vector.extract_strided_slice %215 {offsets = [0, 32], sizes = [16, 32], strides = [1, 1]} : vector<16x384xf32> to vector<16x32xf32>
    %235 = vector.extract_strided_slice %215 {offsets = [0, 160], sizes = [16, 32], strides = [1, 1]} : vector<16x384xf32> to vector<16x32xf32>
    %236 = vector.extract_strided_slice %215 {offsets = [0, 288], sizes = [16, 32], strides = [1, 1]} : vector<16x384xf32> to vector<16x32xf32>
    %237 = tpu.transpose %235, [1, 0] : vector<16x32xf32> -> vector<32x16xf32>
    %cst_104 = arith.constant dense<0.000000e+00> : vector<16x16xf32>
    %238 = tpu.matmul %234, %237, %cst_104 {dimension_numbers = #tpu.dot_dimension_numbers<[1], [0], [0], [1], [0, 0, 1, 1], [], []>} : vector<16x32xf32>, vector<32x16xf32>, vector<16x16xf32> -> vector<16x16xf32>
    %cst_105 = arith.constant 0.176776692 : f32
    %239 = vector.broadcast %cst_105 : f32 to vector<16x16xf32>
    %240 = arith.mulf %238, %239 : vector<16x16xf32>
    %cst_106 = arith.constant dense<0xFF800000> : vector<16xf32>
    %241 = vector.multi_reduction <maximumf>, %240, %cst_106 [1] : vector<16x16xf32> to vector<16xf32>
    %242 = vector.shape_cast %241 : vector<16xf32> to vector<16x1xf32>
    %243 = vector.broadcast %242 : vector<16x1xf32> to vector<16x16xf32>
    %244 = arith.subf %240, %243 : vector<16x16xf32>
    %245 = math.exp %244 : vector<16x16xf32>
    %cst_107 = arith.constant dense<0.000000e+00> : vector<16xf32>
    %246 = vector.multi_reduction <add>, %245, %cst_107 [1] : vector<16x16xf32> to vector<16xf32>
    %247 = vector.shape_cast %246 : vector<16xf32> to vector<16x1xf32>
    %248 = tpu.reciprocal %247 {approx = true} : vector<16x1xf32> -> vector<16x1xf32>
    %249 = vector.broadcast %248 : vector<16x1xf32> to vector<16x16xf32>
    %250 = arith.mulf %245, %249 : vector<16x16xf32>
    %cst_108 = arith.constant dense<0.000000e+00> : vector<16x32xf32>
    %251 = tpu.matmul %250, %236, %cst_108 {dimension_numbers = #tpu.dot_dimension_numbers<[1], [0], [0], [1], [0, 0, 1, 1], [], []>} : vector<16x16xf32>, vector<16x32xf32>, vector<16x32xf32> -> vector<16x32xf32>
    %252 = vector.extract_strided_slice %215 {offsets = [0, 64], sizes = [16, 32], strides = [1, 1]} : vector<16x384xf32> to vector<16x32xf32>
    %253 = vector.extract_strided_slice %215 {offsets = [0, 192], sizes = [16, 32], strides = [1, 1]} : vector<16x384xf32> to vector<16x32xf32>
    %254 = vector.extract_strided_slice %215 {offsets = [0, 320], sizes = [16, 32], strides = [1, 1]} : vector<16x384xf32> to vector<16x32xf32>
    %255 = tpu.transpose %253, [1, 0] : vector<16x32xf32> -> vector<32x16xf32>
    %cst_109 = arith.constant dense<0.000000e+00> : vector<16x16xf32>
    %256 = tpu.matmul %252, %255, %cst_109 {dimension_numbers = #tpu.dot_dimension_numbers<[1], [0], [0], [1], [0, 0, 1, 1], [], []>} : vector<16x32xf32>, vector<32x16xf32>, vector<16x16xf32> -> vector<16x16xf32>
    %cst_110 = arith.constant 0.176776692 : f32
    %257 = vector.broadcast %cst_110 : f32 to vector<16x16xf32>
    %258 = arith.mulf %256, %257 : vector<16x16xf32>
    %cst_111 = arith.constant dense<0xFF800000> : vector<16xf32>
    %259 = vector.multi_reduction <maximumf>, %258, %cst_111 [1] : vector<16x16xf32> to vector<16xf32>
    %260 = vector.shape_cast %259 : vector<16xf32> to vector<16x1xf32>
    %261 = vector.broadcast %260 : vector<16x1xf32> to vector<16x16xf32>
    %262 = arith.subf %258, %261 : vector<16x16xf32>
    %263 = math.exp %262 : vector<16x16xf32>
    %cst_112 = arith.constant dense<0.000000e+00> : vector<16xf32>
    %264 = vector.multi_reduction <add>, %263, %cst_112 [1] : vector<16x16xf32> to vector<16xf32>
    %265 = vector.shape_cast %264 : vector<16xf32> to vector<16x1xf32>
    %266 = tpu.reciprocal %265 {approx = true} : vector<16x1xf32> -> vector<16x1xf32>
    %267 = vector.broadcast %266 : vector<16x1xf32> to vector<16x16xf32>
    %268 = arith.mulf %263, %267 : vector<16x16xf32>
    %cst_113 = arith.constant dense<0.000000e+00> : vector<16x32xf32>
    %269 = tpu.matmul %268, %254, %cst_113 {dimension_numbers = #tpu.dot_dimension_numbers<[1], [0], [0], [1], [0, 0, 1, 1], [], []>} : vector<16x16xf32>, vector<16x32xf32>, vector<16x32xf32> -> vector<16x32xf32>
    %270 = vector.extract_strided_slice %215 {offsets = [0, 96], sizes = [16, 32], strides = [1, 1]} : vector<16x384xf32> to vector<16x32xf32>
    %271 = vector.extract_strided_slice %215 {offsets = [0, 224], sizes = [16, 32], strides = [1, 1]} : vector<16x384xf32> to vector<16x32xf32>
    %272 = vector.extract_strided_slice %215 {offsets = [0, 352], sizes = [16, 32], strides = [1, 1]} : vector<16x384xf32> to vector<16x32xf32>
    %273 = tpu.transpose %271, [1, 0] : vector<16x32xf32> -> vector<32x16xf32>
    %cst_114 = arith.constant dense<0.000000e+00> : vector<16x16xf32>
    %274 = tpu.matmul %270, %273, %cst_114 {dimension_numbers = #tpu.dot_dimension_numbers<[1], [0], [0], [1], [0, 0, 1, 1], [], []>} : vector<16x32xf32>, vector<32x16xf32>, vector<16x16xf32> -> vector<16x16xf32>
    %cst_115 = arith.constant 0.176776692 : f32
    %275 = vector.broadcast %cst_115 : f32 to vector<16x16xf32>
    %276 = arith.mulf %274, %275 : vector<16x16xf32>
    %cst_116 = arith.constant dense<0xFF800000> : vector<16xf32>
    %277 = vector.multi_reduction <maximumf>, %276, %cst_116 [1] : vector<16x16xf32> to vector<16xf32>
    %278 = vector.shape_cast %277 : vector<16xf32> to vector<16x1xf32>
    %279 = vector.broadcast %278 : vector<16x1xf32> to vector<16x16xf32>
    %280 = arith.subf %276, %279 : vector<16x16xf32>
    %281 = math.exp %280 : vector<16x16xf32>
    %cst_117 = arith.constant dense<0.000000e+00> : vector<16xf32>
    %282 = vector.multi_reduction <add>, %281, %cst_117 [1] : vector<16x16xf32> to vector<16xf32>
    %283 = vector.shape_cast %282 : vector<16xf32> to vector<16x1xf32>
    %284 = tpu.reciprocal %283 {approx = true} : vector<16x1xf32> -> vector<16x1xf32>
    %285 = vector.broadcast %284 : vector<16x1xf32> to vector<16x16xf32>
    %286 = arith.mulf %281, %285 : vector<16x16xf32>
    %cst_118 = arith.constant dense<0.000000e+00> : vector<16x32xf32>
    %287 = tpu.matmul %286, %272, %cst_118 {dimension_numbers = #tpu.dot_dimension_numbers<[1], [0], [0], [1], [0, 0, 1, 1], [], []>} : vector<16x16xf32>, vector<16x32xf32>, vector<16x32xf32> -> vector<16x32xf32>
    %288 = tpu.concatenate %233, %251, %269, %287 in 1 : vector<16x32xf32>, vector<16x32xf32>, vector<16x32xf32>, vector<16x32xf32> -> vector<16x128xf32>
    %289 = arith.truncf %288 : vector<16x128xf32> to vector<16x128xbf16>
    %c1_119 = arith.constant 1 : index
    %c0_120 = arith.constant 0 : index
    %c0_121 = arith.constant 0 : index
    %290 = vector.load %arg5[%c1_119, %c0_120, %c0_121] : memref<2x128x128xbf16, #tpu.memory_space<vmem>>, vector<1x128x128xbf16>
    %291 = vector.shape_cast %290 : vector<1x128x128xbf16> to vector<128x128xbf16>
    %cst_122 = arith.constant dense<0.000000e+00> : vector<16x128xf32>
    %292 = tpu.matmul %289, %291, %cst_122 {dimension_numbers = #tpu.dot_dimension_numbers<[1], [0], [0], [1], [0, 0, 1, 1], [], []>} : vector<16x128xbf16>, vector<128x128xbf16>, vector<16x128xf32> -> vector<16x128xf32>
    %c1_123 = arith.constant 1 : index
    %c0_124 = arith.constant 0 : index
    %c0_125 = arith.constant 0 : index
    %293 = vector.load %arg6[%c1_123, %c0_124, %c0_125] : memref<2x1x128xf32, #tpu.memory_space<vmem>>, vector<1x1x128xf32>
    %294 = vector.shape_cast %293 : vector<1x1x128xf32> to vector<1x128xf32>
    %295 = vector.broadcast %294 : vector<1x128xf32> to vector<16x128xf32>
    %296 = arith.addf %292, %295 : vector<16x128xf32>
    %297 = arith.addf %203, %296 : vector<16x128xf32>
    %298 = vector.extract_strided_slice %205 {offsets = [0, 0], sizes = [1, 128], strides = [1, 1]} : vector<3x128xf32> to vector<1x128xf32>
    %299 = vector.extract_strided_slice %207 {offsets = [0, 0], sizes = [1, 128], strides = [1, 1]} : vector<3x128xf32> to vector<1x128xf32>
    %cst_126 = arith.constant dense<0.000000e+00> : vector<16xf32>
    %300 = vector.multi_reduction <add>, %297, %cst_126 [1] : vector<16x128xf32> to vector<16xf32>
    %301 = vector.shape_cast %300 : vector<16xf32> to vector<16x1xf32>
    %cst_127 = arith.constant 1.280000e+02 : f32
    %302 = vector.broadcast %cst_127 : f32 to vector<16x1xf32>
    %303 = arith.divf %301, %302 : vector<16x1xf32>
    %304 = vector.broadcast %303 : vector<16x1xf32> to vector<16x128xf32>
    %305 = arith.subf %297, %304 : vector<16x128xf32>
    %306 = arith.mulf %305, %305 : vector<16x128xf32>
    %cst_128 = arith.constant dense<0.000000e+00> : vector<16xf32>
    %307 = vector.multi_reduction <add>, %306, %cst_128 [1] : vector<16x128xf32> to vector<16xf32>
    %308 = vector.shape_cast %307 : vector<16xf32> to vector<16x1xf32>
    %cst_129 = arith.constant 1.280000e+02 : f32
    %309 = vector.broadcast %cst_129 : f32 to vector<16x1xf32>
    %310 = arith.divf %308, %309 : vector<16x1xf32>
    %311 = vector.broadcast %303 : vector<16x1xf32> to vector<16x128xf32>
    %312 = arith.subf %297, %311 : vector<16x128xf32>
    %cst_130 = arith.constant 9.99999974E-6 : f32
    %313 = vector.broadcast %cst_130 : f32 to vector<16x1xf32>
    %314 = arith.addf %310, %313 : vector<16x1xf32>
    %315 = math.rsqrt %314 : vector<16x1xf32>
    %316 = vector.broadcast %315 : vector<16x1xf32> to vector<16x128xf32>
    %317 = arith.mulf %312, %316 : vector<16x128xf32>
    %318 = vector.broadcast %298 : vector<1x128xf32> to vector<16x128xf32>
    %319 = arith.mulf %317, %318 : vector<16x128xf32>
    %320 = vector.broadcast %299 : vector<1x128xf32> to vector<16x128xf32>
    %321 = arith.addf %319, %320 : vector<16x128xf32>
    %322 = arith.truncf %1 : vector<1x128xf32> to vector<1x128xbf16>
    %c1_131 = arith.constant 1 : index
    %c0_132 = arith.constant 0 : index
    %c0_133 = arith.constant 0 : index
    %323 = vector.load %arg7[%c1_131, %c0_132, %c0_133] : memref<2x128x128xbf16, #tpu.memory_space<vmem>>, vector<1x128x128xbf16>
    %324 = vector.shape_cast %323 : vector<1x128x128xbf16> to vector<128x128xbf16>
    %cst_134 = arith.constant dense<0.000000e+00> : vector<1x128xf32>
    %325 = tpu.matmul %322, %324, %cst_134 {dimension_numbers = #tpu.dot_dimension_numbers<[1], [0], [0], [1], [0, 0, 1, 1], [], []>} : vector<1x128xbf16>, vector<128x128xbf16>, vector<1x128xf32> -> vector<1x128xf32>
    %c1_135 = arith.constant 1 : index
    %c0_136 = arith.constant 0 : index
    %c0_137 = arith.constant 0 : index
    %326 = vector.load %arg8[%c1_135, %c0_136, %c0_137] : memref<2x1x128xf32, #tpu.memory_space<vmem>>, vector<1x1x128xf32>
    %327 = vector.shape_cast %326 : vector<1x1x128xf32> to vector<1x128xf32>
    %328 = arith.addf %325, %327 : vector<1x128xf32>
    %329 = arith.truncf %328 : vector<1x128xf32> to vector<1x128xbf16>
    %c1_138 = arith.constant 1 : index
    %c0_139 = arith.constant 0 : index
    %c0_140 = arith.constant 0 : index
    %330 = vector.load %arg9[%c1_138, %c0_139, %c0_140] : memref<2x128x128xbf16, #tpu.memory_space<vmem>>, vector<1x128x128xbf16>
    %331 = vector.shape_cast %330 : vector<1x128x128xbf16> to vector<128x128xbf16>
    %cst_141 = arith.constant dense<0.000000e+00> : vector<1x128xf32>
    %332 = tpu.matmul %329, %331, %cst_141 {dimension_numbers = #tpu.dot_dimension_numbers<[1], [0], [0], [1], [0, 0, 1, 1], [], []>} : vector<1x128xbf16>, vector<128x128xbf16>, vector<1x128xf32> -> vector<1x128xf32>
    %c1_142 = arith.constant 1 : index
    %c0_143 = arith.constant 0 : index
    %c0_144 = arith.constant 0 : index
    %333 = vector.load %arg10[%c1_142, %c0_143, %c0_144] : memref<2x1x128xf32, #tpu.memory_space<vmem>>, vector<1x1x128xf32>
    %334 = vector.shape_cast %333 : vector<1x1x128xf32> to vector<1x128xf32>
    %335 = arith.addf %332, %334 : vector<1x128xf32>
    %336 = vector.broadcast %335 : vector<1x128xf32> to vector<16x128xf32>
    %337 = arith.addf %321, %336 : vector<16x128xf32>
    %338 = vector.extract_strided_slice %205 {offsets = [1, 0], sizes = [1, 128], strides = [1, 1]} : vector<3x128xf32> to vector<1x128xf32>
    %339 = vector.extract_strided_slice %207 {offsets = [1, 0], sizes = [1, 128], strides = [1, 1]} : vector<3x128xf32> to vector<1x128xf32>
    %cst_145 = arith.constant dense<0.000000e+00> : vector<16xf32>
    %340 = vector.multi_reduction <add>, %337, %cst_145 [1] : vector<16x128xf32> to vector<16xf32>
    %341 = vector.shape_cast %340 : vector<16xf32> to vector<16x1xf32>
    %cst_146 = arith.constant 1.280000e+02 : f32
    %342 = vector.broadcast %cst_146 : f32 to vector<16x1xf32>
    %343 = arith.divf %341, %342 : vector<16x1xf32>
    %344 = vector.broadcast %343 : vector<16x1xf32> to vector<16x128xf32>
    %345 = arith.subf %337, %344 : vector<16x128xf32>
    %346 = arith.mulf %345, %345 : vector<16x128xf32>
    %cst_147 = arith.constant dense<0.000000e+00> : vector<16xf32>
    %347 = vector.multi_reduction <add>, %346, %cst_147 [1] : vector<16x128xf32> to vector<16xf32>
    %348 = vector.shape_cast %347 : vector<16xf32> to vector<16x1xf32>
    %cst_148 = arith.constant 1.280000e+02 : f32
    %349 = vector.broadcast %cst_148 : f32 to vector<16x1xf32>
    %350 = arith.divf %348, %349 : vector<16x1xf32>
    %351 = vector.broadcast %343 : vector<16x1xf32> to vector<16x128xf32>
    %352 = arith.subf %337, %351 : vector<16x128xf32>
    %cst_149 = arith.constant 9.99999974E-6 : f32
    %353 = vector.broadcast %cst_149 : f32 to vector<16x1xf32>
    %354 = arith.addf %350, %353 : vector<16x1xf32>
    %355 = math.rsqrt %354 : vector<16x1xf32>
    %356 = vector.broadcast %355 : vector<16x1xf32> to vector<16x128xf32>
    %357 = arith.mulf %352, %356 : vector<16x128xf32>
    %358 = vector.broadcast %338 : vector<1x128xf32> to vector<16x128xf32>
    %359 = arith.mulf %357, %358 : vector<16x128xf32>
    %360 = vector.broadcast %339 : vector<1x128xf32> to vector<16x128xf32>
    %361 = arith.addf %359, %360 : vector<16x128xf32>
    %362 = arith.truncf %361 : vector<16x128xf32> to vector<16x128xbf16>
    %c1_150 = arith.constant 1 : index
    %c0_151 = arith.constant 0 : index
    %c0_152 = arith.constant 0 : index
    %363 = vector.load %arg13[%c1_150, %c0_151, %c0_152] : memref<2x128x256xbf16, #tpu.memory_space<vmem>>, vector<1x128x256xbf16>
    %364 = vector.shape_cast %363 : vector<1x128x256xbf16> to vector<128x256xbf16>
    %cst_153 = arith.constant dense<0.000000e+00> : vector<16x256xf32>
    %365 = tpu.matmul %362, %364, %cst_153 {dimension_numbers = #tpu.dot_dimension_numbers<[1], [0], [0], [1], [0, 0, 1, 1], [], []>} : vector<16x128xbf16>, vector<128x256xbf16>, vector<16x256xf32> -> vector<16x256xf32>
    %c1_154 = arith.constant 1 : index
    %c0_155 = arith.constant 0 : index
    %c0_156 = arith.constant 0 : index
    %366 = vector.load %arg14[%c1_154, %c0_155, %c0_156] : memref<2x1x256xf32, #tpu.memory_space<vmem>>, vector<1x1x256xf32>
    %367 = vector.shape_cast %366 : vector<1x1x256xf32> to vector<1x256xf32>
    %368 = vector.broadcast %367 : vector<1x256xf32> to vector<16x256xf32>
    %369 = arith.addf %365, %368 : vector<16x256xf32>
    %cst_157 = arith.constant 0.000000e+00 : f32
    %370 = vector.broadcast %cst_157 : f32 to vector<16x256xf32>
    %371 = arith.maximumf %369, %370 : vector<16x256xf32>
    %372 = arith.truncf %371 : vector<16x256xf32> to vector<16x256xbf16>
    %c1_158 = arith.constant 1 : index
    %c0_159 = arith.constant 0 : index
    %c0_160 = arith.constant 0 : index
    %373 = vector.load %arg15[%c1_158, %c0_159, %c0_160] : memref<2x256x128xbf16, #tpu.memory_space<vmem>>, vector<1x256x128xbf16>
    %374 = vector.shape_cast %373 : vector<1x256x128xbf16> to vector<256x128xbf16>
    %cst_161 = arith.constant dense<0.000000e+00> : vector<16x128xf32>
    %375 = tpu.matmul %372, %374, %cst_161 {dimension_numbers = #tpu.dot_dimension_numbers<[1], [0], [0], [1], [0, 0, 1, 1], [], []>} : vector<16x256xbf16>, vector<256x128xbf16>, vector<16x128xf32> -> vector<16x128xf32>
    %c1_162 = arith.constant 1 : index
    %c0_163 = arith.constant 0 : index
    %c0_164 = arith.constant 0 : index
    %376 = vector.load %arg16[%c1_162, %c0_163, %c0_164] : memref<2x1x128xf32, #tpu.memory_space<vmem>>, vector<1x1x128xf32>
    %377 = vector.shape_cast %376 : vector<1x1x128xf32> to vector<1x128xf32>
    %378 = vector.broadcast %377 : vector<1x128xf32> to vector<16x128xf32>
    %379 = arith.addf %375, %378 : vector<16x128xf32>
    %380 = arith.addf %361, %379 : vector<16x128xf32>
    %381 = vector.extract_strided_slice %205 {offsets = [2, 0], sizes = [1, 128], strides = [1, 1]} : vector<3x128xf32> to vector<1x128xf32>
    %382 = vector.extract_strided_slice %207 {offsets = [2, 0], sizes = [1, 128], strides = [1, 1]} : vector<3x128xf32> to vector<1x128xf32>
    %cst_165 = arith.constant dense<0.000000e+00> : vector<16xf32>
    %383 = vector.multi_reduction <add>, %380, %cst_165 [1] : vector<16x128xf32> to vector<16xf32>
    %384 = vector.shape_cast %383 : vector<16xf32> to vector<16x1xf32>
    %cst_166 = arith.constant 1.280000e+02 : f32
    %385 = vector.broadcast %cst_166 : f32 to vector<16x1xf32>
    %386 = arith.divf %384, %385 : vector<16x1xf32>
    %387 = vector.broadcast %386 : vector<16x1xf32> to vector<16x128xf32>
    %388 = arith.subf %380, %387 : vector<16x128xf32>
    %389 = arith.mulf %388, %388 : vector<16x128xf32>
    %cst_167 = arith.constant dense<0.000000e+00> : vector<16xf32>
    %390 = vector.multi_reduction <add>, %389, %cst_167 [1] : vector<16x128xf32> to vector<16xf32>
    %391 = vector.shape_cast %390 : vector<16xf32> to vector<16x1xf32>
    %cst_168 = arith.constant 1.280000e+02 : f32
    %392 = vector.broadcast %cst_168 : f32 to vector<16x1xf32>
    %393 = arith.divf %391, %392 : vector<16x1xf32>
    %394 = vector.broadcast %386 : vector<16x1xf32> to vector<16x128xf32>
    %395 = arith.subf %380, %394 : vector<16x128xf32>
    %cst_169 = arith.constant 9.99999974E-6 : f32
    %396 = vector.broadcast %cst_169 : f32 to vector<16x1xf32>
    %397 = arith.addf %393, %396 : vector<16x1xf32>
    %398 = math.rsqrt %397 : vector<16x1xf32>
    %399 = vector.broadcast %398 : vector<16x1xf32> to vector<16x128xf32>
    %400 = arith.mulf %395, %399 : vector<16x128xf32>
    %401 = vector.broadcast %381 : vector<1x128xf32> to vector<16x128xf32>
    %402 = arith.mulf %400, %401 : vector<16x128xf32>
    %403 = vector.broadcast %382 : vector<1x128xf32> to vector<16x128xf32>
    %404 = arith.addf %402, %403 : vector<16x128xf32>
    %405 = arith.truncf %404 : vector<16x128xf32> to vector<16x128xbf16>
    %c0_170 = arith.constant 0 : index
    %c0_171 = arith.constant 0 : index
    %406 = vector.load %arg17[%c0_170, %c0_171] : memref<128x128xbf16, #tpu.memory_space<vmem>>, vector<128x128xbf16>
    %cst_172 = arith.constant dense<0.000000e+00> : vector<16x128xf32>
    %407 = tpu.matmul %405, %406, %cst_172 {dimension_numbers = #tpu.dot_dimension_numbers<[1], [0], [0], [1], [0, 0, 1, 1], [], []>} : vector<16x128xbf16>, vector<128x128xbf16>, vector<16x128xf32> -> vector<16x128xf32>
    %c0_173 = arith.constant 0 : index
    %c0_174 = arith.constant 0 : index
    %408 = vector.load %arg18[%c0_173, %c0_174] : memref<1x128xf32, #tpu.memory_space<vmem>>, vector<1x128xf32>
    %409 = vector.broadcast %408 : vector<1x128xf32> to vector<16x128xf32>
    %410 = arith.addf %407, %409 : vector<16x128xf32>
    %c0_175 = arith.constant 0 : index
    %c0_176 = arith.constant 0 : index
    %c0_177 = arith.constant 0 : index
    %411 = vector.load %arg19[%c0_175, %c0_176, %c0_177] : memref<1x16x128xf32, #tpu.memory_space<vmem>>, vector<1x16x128xf32>
    %412 = vector.shape_cast %411 : vector<1x16x128xf32> to vector<16x128xf32>
    %413 = vector.shape_cast %410 : vector<16x128xf32> to vector<1x16x128xf32>
    tpu.vector_store %arg19[%c0_175, %c0_176, %c0_177], %413 {strides = array<i32>} : memref<1x16x128xf32, #tpu.memory_space<vmem>>, vector<1x16x128xf32>,
    return
  }
  func.func @transform_0(%arg0: i32) -> (i32, i32, i32) {
    %c0_i32 = arith.constant 0 : i32
    %c0_i32_0 = arith.constant 0 : i32
    %c0_i32_1 = arith.constant 0 : i32
    return %arg0, %c0_i32, %c0_i32_0 : i32, i32, i32
  }
  func.func @transform_1(%arg0: i32) -> (i32, i32) {
    %c0_i32 = arith.constant 0 : i32
    %c0_i32_0 = arith.constant 0 : i32
    %c0_i32_1 = arith.constant 0 : i32
    return %c0_i32, %c0_i32_0 : i32, i32
  }
  func.func @transform_2(%arg0: i32) -> (i32, i32, i32) {
    %c0_i32 = arith.constant 0 : i32
    %c0_i32_0 = arith.constant 0 : i32
    %c0_i32_1 = arith.constant 0 : i32
    %c0_i32_2 = arith.constant 0 : i32
    return %c0_i32, %c0_i32_0, %c0_i32_1 : i32, i32, i32
  }
  func.func @transform_3(%arg0: i32) -> (i32, i32, i32) {
    %c0_i32 = arith.constant 0 : i32
    %c0_i32_0 = arith.constant 0 : i32
    %c0_i32_1 = arith.constant 0 : i32
    %c0_i32_2 = arith.constant 0 : i32
    return %c0_i32, %c0_i32_0, %c0_i32_1 : i32, i32, i32
  }
  func.func @transform_4(%arg0: i32) -> (i32, i32, i32) {
    %c0_i32 = arith.constant 0 : i32
    %c0_i32_0 = arith.constant 0 : i32
    %c0_i32_1 = arith.constant 0 : i32
    %c0_i32_2 = arith.constant 0 : i32
    return %c0_i32, %c0_i32_0, %c0_i32_1 : i32, i32, i32
  }
  func.func @transform_5(%arg0: i32) -> (i32, i32, i32) {
    %c0_i32 = arith.constant 0 : i32
    %c0_i32_0 = arith.constant 0 : i32
    %c0_i32_1 = arith.constant 0 : i32
    %c0_i32_2 = arith.constant 0 : i32
    return %c0_i32, %c0_i32_0, %c0_i32_1 : i32, i32, i32
  }
  func.func @transform_6(%arg0: i32) -> (i32, i32, i32) {
    %c0_i32 = arith.constant 0 : i32
    %c0_i32_0 = arith.constant 0 : i32
    %c0_i32_1 = arith.constant 0 : i32
    %c0_i32_2 = arith.constant 0 : i32
    return %c0_i32, %c0_i32_0, %c0_i32_1 : i32, i32, i32
  }
  func.func @transform_7(%arg0: i32) -> (i32, i32, i32) {
    %c0_i32 = arith.constant 0 : i32
    %c0_i32_0 = arith.constant 0 : i32
    %c0_i32_1 = arith.constant 0 : i32
    %c0_i32_2 = arith.constant 0 : i32
    return %c0_i32, %c0_i32_0, %c0_i32_1 : i32, i32, i32
  }
  func.func @transform_8(%arg0: i32) -> (i32, i32, i32) {
    %c0_i32 = arith.constant 0 : i32
    %c0_i32_0 = arith.constant 0 : i32
    %c0_i32_1 = arith.constant 0 : i32
    %c0_i32_2 = arith.constant 0 : i32
    return %c0_i32, %c0_i32_0, %c0_i32_1 : i32, i32, i32
  }
  func.func @transform_9(%arg0: i32) -> (i32, i32, i32) {
    %c0_i32 = arith.constant 0 : i32
    %c0_i32_0 = arith.constant 0 : i32
    %c0_i32_1 = arith.constant 0 : i32
    %c0_i32_2 = arith.constant 0 : i32
    return %c0_i32, %c0_i32_0, %c0_i32_1 : i32, i32, i32
  }
  func.func @transform_10(%arg0: i32) -> (i32, i32, i32) {
    %c0_i32 = arith.constant 0 : i32
    %c0_i32_0 = arith.constant 0 : i32
    %c0_i32_1 = arith.constant 0 : i32
    %c0_i32_2 = arith.constant 0 : i32
    return %c0_i32, %c0_i32_0, %c0_i32_1 : i32, i32, i32
  }
  func.func @transform_11(%arg0: i32) -> (i32, i32, i32) {
    %c0_i32 = arith.constant 0 : i32
    %c0_i32_0 = arith.constant 0 : i32
    %c0_i32_1 = arith.constant 0 : i32
    %c0_i32_2 = arith.constant 0 : i32
    return %c0_i32, %c0_i32_0, %c0_i32_1 : i32, i32, i32
  }
  func.func @transform_12(%arg0: i32) -> (i32, i32, i32) {
    %c0_i32 = arith.constant 0 : i32
    %c0_i32_0 = arith.constant 0 : i32
    %c0_i32_1 = arith.constant 0 : i32
    %c0_i32_2 = arith.constant 0 : i32
    return %c0_i32, %c0_i32_0, %c0_i32_1 : i32, i32, i32
  }
  func.func @transform_13(%arg0: i32) -> (i32, i32, i32) {
    %c0_i32 = arith.constant 0 : i32
    %c0_i32_0 = arith.constant 0 : i32
    %c0_i32_1 = arith.constant 0 : i32
    %c0_i32_2 = arith.constant 0 : i32
    return %c0_i32, %c0_i32_0, %c0_i32_1 : i32, i32, i32
  }
  func.func @transform_14(%arg0: i32) -> (i32, i32, i32) {
    %c0_i32 = arith.constant 0 : i32
    %c0_i32_0 = arith.constant 0 : i32
    %c0_i32_1 = arith.constant 0 : i32
    %c0_i32_2 = arith.constant 0 : i32
    return %c0_i32, %c0_i32_0, %c0_i32_1 : i32, i32, i32
  }
  func.func @transform_15(%arg0: i32) -> (i32, i32, i32) {
    %c0_i32 = arith.constant 0 : i32
    %c0_i32_0 = arith.constant 0 : i32
    %c0_i32_1 = arith.constant 0 : i32
    %c0_i32_2 = arith.constant 0 : i32
    return %c0_i32, %c0_i32_0, %c0_i32_1 : i32, i32, i32
  }
  func.func @transform_16(%arg0: i32) -> (i32, i32) {
    %c0_i32 = arith.constant 0 : i32
    %c0_i32_0 = arith.constant 0 : i32
    %c0_i32_1 = arith.constant 0 : i32
    return %c0_i32, %c0_i32_0 : i32, i32
  }
  func.func @transform_17(%arg0: i32) -> (i32, i32) {
    %c0_i32 = arith.constant 0 : i32
    %c0_i32_0 = arith.constant 0 : i32
    %c0_i32_1 = arith.constant 0 : i32
    return %c0_i32, %c0_i32_0 : i32, i32
  }
  func.func @transform_18(%arg0: i32) -> (i32, i32, i32) {
    %c0_i32 = arith.constant 0 : i32
    %c0_i32_0 = arith.constant 0 : i32
    %c0_i32_1 = arith.constant 0 : i32
    return %arg0, %c0_i32, %c0_i32_0 : i32, i32, i32
  }
}

</mosaic_0001>

<llo_original>
// kernel: tpu_custom_call.1
$region0: #{tpu_custom_call.1}
  #allocation0 [shape = 'u32[]', space=smem, size = 0x4, offset = 0x4, fixed_abs, tag = 'smem constant byte address 0x4 - core index']
  #allocation1 [shape = 'u32[144,128]{1,0:T(1,128)}', space=vmem, size = 0x12000, scoped, tag = 'internal scratch']
  %s0 = inlined_call_operand.hbm [shape: f32[2,1,128], index: 0, kind: input, shape index: {}]
  %s1 = inlined_call_operand.vmem [shape: f32[16,128], index: 1, kind: input, shape index: {}]
  %s2 = inlined_call_operand.hbm [shape: bf16[2,128,384], index: 2, kind: input, shape index: {}]
  %s3 = inlined_call_operand.vmem [shape: f32[2,1,384], index: 3, kind: input, shape index: {}]
  %s4 = inlined_call_operand.hbm [shape: bf16[2,128,128], index: 4, kind: input, shape index: {}]
  %s5 = inlined_call_operand.vmem [shape: f32[2,1,128], index: 5, kind: input, shape index: {}]
  %s6 = inlined_call_operand.hbm [shape: bf16[2,128,128], index: 6, kind: input, shape index: {}]
  %s7 = inlined_call_operand.hbm [shape: f32[2,1,128], index: 7, kind: input, shape index: {}]
  %s8 = inlined_call_operand.hbm [shape: bf16[2,128,128], index: 8, kind: input, shape index: {}]
  %s9 = inlined_call_operand.vmem [shape: f32[2,1,128], index: 9, kind: input, shape index: {}]
  %s10 = inlined_call_operand.vmem [shape: f32[2,3,128], index: 10, kind: input, shape index: {}]
  %s11 = inlined_call_operand.vmem [shape: f32[2,3,128], index: 11, kind: input, shape index: {}]
  %s12 = inlined_call_operand.hbm [shape: bf16[2,128,256], index: 12, kind: input, shape index: {}]
  %s13 = inlined_call_operand.vmem [shape: f32[2,1,256], index: 13, kind: input, shape index: {}]
  %s14 = inlined_call_operand.hbm [shape: bf16[2,256,128], index: 14, kind: input, shape index: {}]
  %s15 = inlined_call_operand.vmem [shape: f32[2,1,128], index: 15, kind: input, shape index: {}]
  %s16 = inlined_call_operand.hbm [shape: bf16[128,128], index: 16, kind: input, shape index: {}]
  %s17 = inlined_call_operand.vmem [shape: f32[1,128], index: 17, kind: input, shape index: {}]
  %s18 = inlined_call_operand.hbm [shape: f32[2,16,128], index: 18, kind: output, shape index: {}]
  %s19 = sld [smem:[#allocation0]]
  $region141: #{tpu_custom_call.1} parent=0
    _
  %s21 = ssub.s32 1, %s19
  %s22 = scalar_select 0, %s21, %s19
  $region1: #{tpu_custom_call.1} parent=0
    #allocation2 [shape = 'u8[1024]{0}', space=vmem, size = 0x400, scoped, tag = 'input window, operand 0']
    #allocation3 [shape = 's32[2]{0}', space=sflag, size = 0x8, scoped, tag = 'scoped memory for tpu_custom_call.1']
    #allocation4 [shape = 's32[2]{0}', space=sflag, size = 0x8, scoped, tag = 'scoped memory for tpu_custom_call.1']
    #allocation5 [shape = 'u8[196608]{0}', space=vmem, size = 0x30000, scoped, tag = 'input window, operand 2, single buffered']
    #allocation6 [shape = 's32[1]{0}', space=sflag, size = 0x4, scoped, tag = 'scoped memory for tpu_custom_call.1']
    #allocation7 [shape = 'u8[65536]{0}', space=vmem, size = 0x10000, scoped, tag = 'input window, operand 4, single buffered']
    #allocation8 [shape = 'u8[65536]{0}', space=vmem, size = 0x10000, scoped, tag = 'input window, operand 6, single buffered']
    #allocation9 [shape = 's32[1]{0}', space=sflag, size = 0x4, scoped, tag = 'scoped memory for tpu_custom_call.1']
    #allocation10 [shape = 'u8[1024]{0}', space=vmem, size = 0x400, scoped, tag = 'input window, operand 7, single buffered']
    #allocation11 [shape = 'u8[65536]{0}', space=vmem, size = 0x10000, scoped, tag = 'input window, operand 8, single buffered']
    #allocation12 [shape = 's32[1]{0}', space=sflag, size = 0x4, scoped, tag = 'scoped memory for tpu_custom_call.1']
    #allocation13 [shape = 'u8[131072]{0}', space=vmem, size = 0x20000, scoped, tag = 'input window, operand 12, single buffered']
    #allocation14 [shape = 'u8[131072]{0}', space=vmem, size = 0x20000, scoped, tag = 'input window, operand 14, single buffered']
    #allocation15 [shape = 's32[1]{0}', space=sflag, size = 0x4, scoped, tag = 'scoped memory for tpu_custom_call.1']
    #allocation16 [shape = 'u8[32768]{0}', space=vmem, size = 0x8000, scoped, tag = 'input window, operand 16, single buffered']
    #allocation17 [shape = 'u8[16384]{0}', space=vmem, size = 0x4000, scoped, tag = 'output window, operand 0']
    %23 = vsyncpa [#allocation3], 0
    %s24 = scalar_lea.sflag [#allocation3], 1
    %25 = vsyncpa %s24, 0
    %26 = vsyncpa [#allocation6], 0
    %27 = vsyncpa [#allocation9], 0
    %28 = vsyncpa [#allocation12], 0
    %29 = vsyncpa [#allocation15], 0
    %30 = vsyncpa [#allocation4], 0
    %s31 = scalar_lea.sflag [#allocation4], 1
    %32 = vsyncpa %s31, 0
    loop: start=0, step=1, limit=4
    $region2: #{tpu_custom_call.1} parent=1 // loop_pre_header
      _
    $region3: #{tpu_custom_call.1} parent=1 // loop_header
      %s34 = sphi 0, %s38
      %p35 = scmp.ge.s32.totalorder %s34, 4
      %s44 = sphi 0, %s46
      %s47 = sphi 0, %s44
      %s48 = sphi 0, %s47
      %s64 = sphi 0, %s48
      %s68 = sphi 0, %s68
      %s70 = sphi 0, %s68
      %s71 = sphi 0, %s70
      %s85 = sphi 0, %s71
      %s89 = sphi 0, %s89
      %s91 = sphi 0, %s89
      %s92 = sphi 0, %s91
      %s106 = sphi 0, %s92
      %s110 = sphi 0, %s110
      %s112 = sphi 0, %s110
      %s113 = sphi 0, %s112
      %s127 = sphi 0, %s113
      %s131 = sphi 0, %s131
      %s133 = sphi 0, %s131
      %s134 = sphi 0, %s133
      %s148 = sphi 0, %s134
      %s152 = sphi 0, %s152
      %s154 = sphi 0, %s152
      %s155 = sphi 0, %s154
      %s169 = sphi 0, %s155
      %s173 = sphi 0, %s173
      %s175 = sphi 0, %s173
      %s176 = sphi 0, %s175
      %s190 = sphi 0, %s176
      %s194 = sphi 0, %s194
      %s196 = sphi 0, %s194
      %s197 = sphi 0, %s196
      %s211 = sphi 0, %s197
      %s215 = sphi 0, %s215
      %s217 = sphi 0, %s215
      %s218 = sphi 0, %s217
      %s232 = sphi 0, %s218
      %s236 = sphi 0, %s236
      %s238 = sphi 0, %s236
      %s239 = sphi 0, %s238
      %s253 = sphi 0, %s239
      %s257 = sphi 0, %s257
      %s259 = sphi 0, %s257
      %s260 = sphi 0, %s259
      %s274 = sphi 0, %s260
      %s278 = sphi 0, %s278
      %s280 = sphi 0, %s278
      %s281 = sphi 0, %s280
      %s295 = sphi 0, %s281
      %s299 = sphi 0, %s299
      %s301 = sphi 0, %s299
      %s302 = sphi 0, %s301
      %s316 = sphi 0, %s302
      %s320 = sphi 0, %s320
      %s322 = sphi 0, %s320
      %s323 = sphi 0, %s322
      %s337 = sphi 0, %s323
      %s341 = sphi 0, %s341
      %s343 = sphi 0, %s341
      %s344 = sphi 0, %s343
      %s358 = sphi 0, %s344
      %s362 = sphi 0, %s362
      %s364 = sphi 0, %s362
      %s365 = sphi 0, %s364
      %s379 = sphi 0, %s365
      %s383 = sphi 0, %s383
      %s385 = sphi 0, %s383
      %s386 = sphi 0, %s385
      %s400 = sphi 0, %s386
      %s404 = sphi 0, %s404
      %s406 = sphi 0, %s404
      %s407 = sphi 0, %s406
      %s421 = sphi 0, %s407
      %s427 = sphi 0, %s429
      %s430 = sphi 0, %s427
      %s431 = sphi 0, %s430
      %s447 = sphi 0, %s431
    $region4: #{tpu_custom_call.1} parent=1 // loop_header_branch
      %37 = sbr.rel (%p35) target = $region8
    $region5: #{tpu_custom_call.1} parent=1 // loop_body
      %s39 = ssub.s32 %s34, 1
      %s40 = ssub.s32 %s34, 2
      %s41 = sadd.s32 %s34, 1
      %s42 = ssub.s32 %s34, %s41
      %p43 = scmp.eq.s32.totalorder %s42, 0
      %s45 = sadd.s32 %s44, 1
      %s46 = scalar_select %p43, %s44, %s45
      %p49 = pneg %p43
      %p50 = scmp.eq.s32.totalorder %s34, 1
      %p51 = por %p49, %p50
      %p52 = scmp.ne.s32.totalorder %s44, %s47
      %p53 = scmp.eq.s32.totalorder %s34, 0
      %p54 = por %p52, %p53
      %p55 = scmp.ne.s32.totalorder %s44, %s47
      %p56 = scmp.eq.s32.totalorder %s39, 1
      %p57 = por %p55, %p56
      %p58 = scmp.ne.s32.totalorder %s47, %s48
      %p59 = scmp.eq.s32.totalorder %s39, 0
      %p60 = por %p58, %p59
      %p61 = scmp.ne.s32.totalorder %s47, %s48
      %p62 = scmp.eq.s32.totalorder %s40, 1
      %p63 = por %p61, %p62
      %p65 = scmp.ne.s32.totalorder %s48, %s64
      %p66 = scmp.eq.s32.totalorder %s40, 0
      %p67 = por %p65, %p66
      %s69 = sadd.s32 %s68, 1
      %p72 = scmp.eq.s32.totalorder %s34, 1
      %p73 = scmp.ne.s32.totalorder %s68, %s70
      %p74 = scmp.eq.s32.totalorder %s34, 0
      %p75 = por %p73, %p74
      %p76 = scmp.ne.s32.totalorder %s68, %s70
      %p77 = scmp.eq.s32.totalorder %s39, 1
      %p78 = por %p76, %p77
      %p79 = scmp.ne.s32.totalorder %s70, %s71
      %p80 = scmp.eq.s32.totalorder %s39, 0
      %p81 = por %p79, %p80
      %p82 = scmp.ne.s32.totalorder %s70, %s71
      %p83 = scmp.eq.s32.totalorder %s40, 1
      %p84 = por %p82, %p83
      %p86 = scmp.ne.s32.totalorder %s71, %s85
      %p87 = scmp.eq.s32.totalorder %s40, 0
      %p88 = por %p86, %p87
      %s90 = sadd.s32 %s89, 1
      %p93 = scmp.eq.s32.totalorder %s34, 1
      %p94 = scmp.ne.s32.totalorder %s89, %s91
      %p95 = scmp.eq.s32.totalorder %s34, 0
      %p96 = por %p94, %p95
      %p97 = scmp.ne.s32.totalorder %s89, %s91
      %p98 = scmp.eq.s32.totalorder %s39, 1
      %p99 = por %p97, %p98
      %p100 = scmp.ne.s32.totalorder %s91, %s92
      %p101 = scmp.eq.s32.totalorder %s39, 0
      %p102 = por %p100, %p101
      %p103 = scmp.ne.s32.totalorder %s91, %s92
      %p104 = scmp.eq.s32.totalorder %s40, 1
      %p105 = por %p103, %p104
      %p107 = scmp.ne.s32.totalorder %s92, %s106
      %p108 = scmp.eq.s32.totalorder %s40, 0
      %p109 = por %p107, %p108
      %s111 = sadd.s32 %s110, 1
      %p114 = scmp.eq.s32.totalorder %s34, 1
      %p115 = scmp.ne.s32.totalorder %s110, %s112
      %p116 = scmp.eq.s32.totalorder %s34, 0
      %p117 = por %p115, %p116
      %p118 = scmp.ne.s32.totalorder %s110, %s112
      %p119 = scmp.eq.s32.totalorder %s39, 1
      %p120 = por %p118, %p119
      %p121 = scmp.ne.s32.totalorder %s112, %s113
      %p122 = scmp.eq.s32.totalorder %s39, 0
      %p123 = por %p121, %p122
      %p124 = scmp.ne.s32.totalorder %s112, %s113
      %p125 = scmp.eq.s32.totalorder %s40, 1
      %p126 = por %p124, %p125
      %p128 = scmp.ne.s32.totalorder %s113, %s127
      %p129 = scmp.eq.s32.totalorder %s40, 0
      %p130 = por %p128, %p129
      %s132 = sadd.s32 %s131, 1
      %p135 = scmp.eq.s32.totalorder %s34, 1
      %p136 = scmp.ne.s32.totalorder %s131, %s133
      %p137 = scmp.eq.s32.totalorder %s34, 0
      %p138 = por %p136, %p137
      %p139 = scmp.ne.s32.totalorder %s131, %s133
      %p140 = scmp.eq.s32.totalorder %s39, 1
      %p141 = por %p139, %p140
      %p142 = scmp.ne.s32.totalorder %s133, %s134
      %p143 = scmp.eq.s32.totalorder %s39, 0
      %p144 = por %p142, %p143
      %p145 = scmp.ne.s32.totalorder %s133, %s134
      %p146 = scmp.eq.s32.totalorder %s40, 1
      %p147 = por %p145, %p146
      %p149 = scmp.ne.s32.totalorder %s134, %s148
      %p150 = scmp.eq.s32.totalorder %s40, 0
      %p151 = por %p149, %p150
      %s153 = sadd.s32 %s152, 1
      %p156 = scmp.eq.s32.totalorder %s34, 1
      %p157 = scmp.ne.s32.totalorder %s152, %s154
      %p158 = scmp.eq.s32.totalorder %s34, 0
      %p159 = por %p157, %p158
      %p160 = scmp.ne.s32.totalorder %s152, %s154
      %p161 = scmp.eq.s32.totalorder %s39, 1
      %p162 = por %p160, %p161
      %p163 = scmp.ne.s32.totalorder %s154, %s155
      %p164 = scmp.eq.s32.totalorder %s39, 0
      %p165 = por %p163, %p164
      %p166 = scmp.ne.s32.totalorder %s154, %s155
      %p167 = scmp.eq.s32.totalorder %s40, 1
      %p168 = por %p166, %p167
      %p170 = scmp.ne.s32.totalorder %s155, %s169
      %p171 = scmp.eq.s32.totalorder %s40, 0
      %p172 = por %p170, %p171
      %s174 = sadd.s32 %s173, 1
      %p177 = scmp.eq.s32.totalorder %s34, 1
      %p178 = scmp.ne.s32.totalorder %s173, %s175
      %p179 = scmp.eq.s32.totalorder %s34, 0
      %p180 = por %p178, %p179
      %p181 = scmp.ne.s32.totalorder %s173, %s175
      %p182 = scmp.eq.s32.totalorder %s39, 1
      %p183 = por %p181, %p182
      %p184 = scmp.ne.s32.totalorder %s175, %s176
      %p185 = scmp.eq.s32.totalorder %s39, 0
      %p186 = por %p184, %p185
      %p187 = scmp.ne.s32.totalorder %s175, %s176
      %p188 = scmp.eq.s32.totalorder %s40, 1
      %p189 = por %p187, %p188
      %p191 = scmp.ne.s32.totalorder %s176, %s190
      %p192 = scmp.eq.s32.totalorder %s40, 0
      %p193 = por %p191, %p192
      %s195 = sadd.s32 %s194, 1
      %p198 = scmp.eq.s32.totalorder %s34, 1
      %p199 = scmp.ne.s32.totalorder %s194, %s196
      %p200 = scmp.eq.s32.totalorder %s34, 0
      %p201 = por %p199, %p200
      %p202 = scmp.ne.s32.totalorder %s194, %s196
      %p203 = scmp.eq.s32.totalorder %s39, 1
      %p204 = por %p202, %p203
      %p205 = scmp.ne.s32.totalorder %s196, %s197
      %p206 = scmp.eq.s32.totalorder %s39, 0
      %p207 = por %p205, %p206
      %p208 = scmp.ne.s32.totalorder %s196, %s197
      %p209 = scmp.eq.s32.totalorder %s40, 1
      %p210 = por %p208, %p209
      %p212 = scmp.ne.s32.totalorder %s197, %s211
      %p213 = scmp.eq.s32.totalorder %s40, 0
      %p214 = por %p212, %p213
      %s216 = sadd.s32 %s215, 1
      %p219 = scmp.eq.s32.totalorder %s34, 1
      %p220 = scmp.ne.s32.totalorder %s215, %s217
      %p221 = scmp.eq.s32.totalorder %s34, 0
      %p222 = por %p220, %p221
      %p223 = scmp.ne.s32.totalorder %s215, %s217
      %p224 = scmp.eq.s32.totalorder %s39, 1
      %p225 = por %p223, %p224
      %p226 = scmp.ne.s32.totalorder %s217, %s218
      %p227 = scmp.eq.s32.totalorder %s39, 0
      %p228 = por %p226, %p227
      %p229 = scmp.ne.s32.totalorder %s217, %s218
      %p230 = scmp.eq.s32.totalorder %s40, 1
      %p231 = por %p229, %p230
      %p233 = scmp.ne.s32.totalorder %s218, %s232
      %p234 = scmp.eq.s32.totalorder %s40, 0
      %p235 = por %p233, %p234
      %s237 = sadd.s32 %s236, 1
      %p240 = scmp.eq.s32.totalorder %s34, 1
      %p241 = scmp.ne.s32.totalorder %s236, %s238
      %p242 = scmp.eq.s32.totalorder %s34, 0
      %p243 = por %p241, %p242
      %p244 = scmp.ne.s32.totalorder %s236, %s238
      %p245 = scmp.eq.s32.totalorder %s39, 1
      %p246 = por %p244, %p245
      %p247 = scmp.ne.s32.totalorder %s238, %s239
      %p248 = scmp.eq.s32.totalorder %s39, 0
      %p249 = por %p247, %p248
      %p250 = scmp.ne.s32.totalorder %s238, %s239
      %p251 = scmp.eq.s32.totalorder %s40, 1
      %p252 = por %p250, %p251
      %p254 = scmp.ne.s32.totalorder %s239, %s253
      %p255 = scmp.eq.s32.totalorder %s40, 0
      %p256 = por %p254, %p255
      %s258 = sadd.s32 %s257, 1
      %p261 = scmp.eq.s32.totalorder %s34, 1
      %p262 = scmp.ne.s32.totalorder %s257, %s259
      %p263 = scmp.eq.s32.totalorder %s34, 0
      %p264 = por %p262, %p263
      %p265 = scmp.ne.s32.totalorder %s257, %s259
      %p266 = scmp.eq.s32.totalorder %s39, 1
      %p267 = por %p265, %p266
      %p268 = scmp.ne.s32.totalorder %s259, %s260
      %p269 = scmp.eq.s32.totalorder %s39, 0
      %p270 = por %p268, %p269
      %p271 = scmp.ne.s32.totalorder %s259, %s260
      %p272 = scmp.eq.s32.totalorder %s40, 1
      %p273 = por %p271, %p272
      %p275 = scmp.ne.s32.totalorder %s260, %s274
      %p276 = scmp.eq.s32.totalorder %s40, 0
      %p277 = por %p275, %p276
      %s279 = sadd.s32 %s278, 1
      %p282 = scmp.eq.s32.totalorder %s34, 1
      %p283 = scmp.ne.s32.totalorder %s278, %s280
      %p284 = scmp.eq.s32.totalorder %s34, 0
      %p285 = por %p283, %p284
      %p286 = scmp.ne.s32.totalorder %s278, %s280
      %p287 = scmp.eq.s32.totalorder %s39, 1
      %p288 = por %p286, %p287
      %p289 = scmp.ne.s32.totalorder %s280, %s281
      %p290 = scmp.eq.s32.totalorder %s39, 0
      %p291 = por %p289, %p290
      %p292 = scmp.ne.s32.totalorder %s280, %s281
      %p293 = scmp.eq.s32.totalorder %s40, 1
      %p294 = por %p292, %p293
      %p296 = scmp.ne.s32.totalorder %s281, %s295
      %p297 = scmp.eq.s32.totalorder %s40, 0
      %p298 = por %p296, %p297
      %s300 = sadd.s32 %s299, 1
      %p303 = scmp.eq.s32.totalorder %s34, 1
      %p304 = scmp.ne.s32.totalorder %s299, %s301
      %p305 = scmp.eq.s32.totalorder %s34, 0
      %p306 = por %p304, %p305
      %p307 = scmp.ne.s32.totalorder %s299, %s301
      %p308 = scmp.eq.s32.totalorder %s39, 1
      %p309 = por %p307, %p308
      %p310 = scmp.ne.s32.totalorder %s301, %s302
      %p311 = scmp.eq.s32.totalorder %s39, 0
      %p312 = por %p310, %p311
      %p313 = scmp.ne.s32.totalorder %s301, %s302
      %p314 = scmp.eq.s32.totalorder %s40, 1
      %p315 = por %p313, %p314
      %p317 = scmp.ne.s32.totalorder %s302, %s316
      %p318 = scmp.eq.s32.totalorder %s40, 0
      %p319 = por %p317, %p318
      %s321 = sadd.s32 %s320, 1
      %p324 = scmp.eq.s32.totalorder %s34, 1
      %p325 = scmp.ne.s32.totalorder %s320, %s322
      %p326 = scmp.eq.s32.totalorder %s34, 0
      %p327 = por %p325, %p326
      %p328 = scmp.ne.s32.totalorder %s320, %s322
      %p329 = scmp.eq.s32.totalorder %s39, 1
      %p330 = por %p328, %p329
      %p331 = scmp.ne.s32.totalorder %s322, %s323
      %p332 = scmp.eq.s32.totalorder %s39, 0
      %p333 = por %p331, %p332
      %p334 = scmp.ne.s32.totalorder %s322, %s323
      %p335 = scmp.eq.s32.totalorder %s40, 1
      %p336 = por %p334, %p335
      %p338 = scmp.ne.s32.totalorder %s323, %s337
      %p339 = scmp.eq.s32.totalorder %s40, 0
      %p340 = por %p338, %p339
      %s342 = sadd.s32 %s341, 1
      %p345 = scmp.eq.s32.totalorder %s34, 1
      %p346 = scmp.ne.s32.totalorder %s341, %s343
      %p347 = scmp.eq.s32.totalorder %s34, 0
      %p348 = por %p346, %p347
      %p349 = scmp.ne.s32.totalorder %s341, %s343
      %p350 = scmp.eq.s32.totalorder %s39, 1
      %p351 = por %p349, %p350
      %p352 = scmp.ne.s32.totalorder %s343, %s344
      %p353 = scmp.eq.s32.totalorder %s39, 0
      %p354 = por %p352, %p353
      %p355 = scmp.ne.s32.totalorder %s343, %s344
      %p356 = scmp.eq.s32.totalorder %s40, 1
      %p357 = por %p355, %p356
      %p359 = scmp.ne.s32.totalorder %s344, %s358
      %p360 = scmp.eq.s32.totalorder %s40, 0
      %p361 = por %p359, %p360
      %s363 = sadd.s32 %s362, 1
      %p366 = scmp.eq.s32.totalorder %s34, 1
      %p367 = scmp.ne.s32.totalorder %s362, %s364
      %p368 = scmp.eq.s32.totalorder %s34, 0
      %p369 = por %p367, %p368
      %p370 = scmp.ne.s32.totalorder %s362, %s364
      %p371 = scmp.eq.s32.totalorder %s39, 1
      %p372 = por %p370, %p371
      %p373 = scmp.ne.s32.totalorder %s364, %s365
      %p374 = scmp.eq.s32.totalorder %s39, 0
      %p375 = por %p373, %p374
      %p376 = scmp.ne.s32.totalorder %s364, %s365
      %p377 = scmp.eq.s32.totalorder %s40, 1
      %p378 = por %p376, %p377
      %p380 = scmp.ne.s32.totalorder %s365, %s379
      %p381 = scmp.eq.s32.totalorder %s40, 0
      %p382 = por %p380, %p381
      %s384 = sadd.s32 %s383, 1
      %p387 = scmp.eq.s32.totalorder %s34, 1
      %p388 = scmp.ne.s32.totalorder %s383, %s385
      %p389 = scmp.eq.s32.totalorder %s34, 0
      %p390 = por %p388, %p389
      %p391 = scmp.ne.s32.totalorder %s383, %s385
      %p392 = scmp.eq.s32.totalorder %s39, 1
      %p393 = por %p391, %p392
      %p394 = scmp.ne.s32.totalorder %s385, %s386
      %p395 = scmp.eq.s32.totalorder %s39, 0
      %p396 = por %p394, %p395
      %p397 = scmp.ne.s32.totalorder %s385, %s386
      %p398 = scmp.eq.s32.totalorder %s40, 1
      %p399 = por %p397, %p398
      %p401 = scmp.ne.s32.totalorder %s386, %s400
      %p402 = scmp.eq.s32.totalorder %s40, 0
      %p403 = por %p401, %p402
      %s405 = sadd.s32 %s404, 1
      %p408 = scmp.eq.s32.totalorder %s34, 1
      %p409 = scmp.ne.s32.totalorder %s404, %s406
      %p410 = scmp.eq.s32.totalorder %s34, 0
      %p411 = por %p409, %p410
      %p412 = scmp.ne.s32.totalorder %s404, %s406
      %p413 = scmp.eq.s32.totalorder %s39, 1
      %p414 = por %p412, %p413
      %p415 = scmp.ne.s32.totalorder %s406, %s407
      %p416 = scmp.eq.s32.totalorder %s39, 0
      %p417 = por %p415, %p416
      %p418 = scmp.ne.s32.totalorder %s406, %s407
      %p419 = scmp.eq.s32.totalorder %s40, 1
      %p420 = por %p418, %p419
      %p422 = scmp.ne.s32.totalorder %s407, %s421
      %p423 = scmp.eq.s32.totalorder %s40, 0
      %p424 = por %p422, %p423
      %s425 = ssub.s32 %s34, %s41
      %p426 = scmp.eq.s32.totalorder %s425, 0
      %s428 = sadd.s32 %s427, 1
      %s429 = scalar_select %p426, %s427, %s428
      %p432 = pneg %p426
      %p433 = scmp.eq.s32.totalorder %s34, 1
      %p434 = por %p432, %p433
      %p435 = scmp.ne.s32.totalorder %s427, %s430
      %p436 = scmp.eq.s32.totalorder %s34, 0
      %p437 = por %p435, %p436
      %p438 = scmp.ne.s32.totalorder %s427, %s430
      %p439 = scmp.eq.s32.totalorder %s39, 1
      %p440 = por %p438, %p439
      %p441 = scmp.ne.s32.totalorder %s430, %s431
      %p442 = scmp.eq.s32.totalorder %s39, 0
      %p443 = por %p441, %p442
      %p444 = scmp.ne.s32.totalorder %s430, %s431
      %p445 = scmp.eq.s32.totalorder %s40, 1
      %p446 = por %p444, %p445
      %p448 = scmp.ne.s32.totalorder %s431, %s447
      %p449 = scmp.eq.s32.totalorder %s40, 0
      %p450 = por %p448, %p449
      %p451 = scmp.le.s32.totalorder 1, %s34
      %p452 = scmp.lt.s32.totalorder %s34, 3
      %p453 = pnand %p451, %p452
      %p454 = pneg %p453
      // Predicated region
      $region9: #{tpu_custom_call.1} parent=5 // pred_check
        _
      $region10: #{tpu_custom_call.1} parent=5 // pred_check_branch
        %456 = sbr.rel (%p453) target = $region12
      $region11: #{tpu_custom_call.1} parent=5 // pred_region
        %s457 = ssub.s32 %s34, 1
        // Predicated region
        $region13: #{tpu_custom_call.1} parent=11 // pred_check
          %p458 = pneg %p81
        $region14: #{tpu_custom_call.1} parent=11 // pred_check_branch
          %460 = sbr.rel (%p458) target = $region16
        $region15: #{tpu_custom_call.1} parent=11 // pred_region
          _
        $region16: #{tpu_custom_call.1} parent=11 // pred_fallthru
          _
        // Predicated region
        $region17: #{tpu_custom_call.1} parent=11 // pred_check
          %p461 = pneg %p102
        $region18: #{tpu_custom_call.1} parent=11 // pred_check_branch
          %463 = sbr.rel (%p461) target = $region20
        $region19: #{tpu_custom_call.1} parent=11 // pred_region
          %s465 = ssub.s32 6144, 6144
          %466 = vsyncadd [#allocation6], %s465
          %s467 = sshll.u32 [#allocation5], 4
          %s468 = int_to_ptr.vmem [resolvable:$true] %s467
          %473 = dma.hbm_to_vmem [thread:$0]  %s2, 6144, %s468, [#allocation6], 192, 192, 12
        $region20: #{tpu_custom_call.1} parent=11 // pred_fallthru
          _
        // Predicated region
        $region21: #{tpu_custom_call.1} parent=11 // pred_check
          %p474 = pneg %p123
        $region22: #{tpu_custom_call.1} parent=11 // pred_check_branch
          %476 = sbr.rel (%p474) target = $region24
        $region23: #{tpu_custom_call.1} parent=11 // pred_region
          _
        $region24: #{tpu_custom_call.1} parent=11 // pred_fallthru
          _
        // Predicated region
        $region25: #{tpu_custom_call.1} parent=11 // pred_check
          %p477 = pneg %p144
        $region26: #{tpu_custom_call.1} parent=11 // pred_check_branch
          %479 = sbr.rel (%p477) target = $region28
        $region27: #{tpu_custom_call.1} parent=11 // pred_region
          %s481 = ssub.s32 2048, 2048
          %482 = vsyncadd [#allocation6], %s481
          %s483 = sshll.u32 [#allocation7], 4
          %s484 = int_to_ptr.vmem [resolvable:$true] %s483
          %489 = dma.hbm_to_vmem [thread:$0]  %s4, 2048, %s484, [#allocation6], 64, 64, 4
        $region28: #{tpu_custom_call.1} parent=11 // pred_fallthru
          _
        // Predicated region
        $region29: #{tpu_custom_call.1} parent=11 // pred_check
          %p490 = pneg %p165
        $region30: #{tpu_custom_call.1} parent=11 // pred_check_branch
          %492 = sbr.rel (%p490) target = $region32
        $region31: #{tpu_custom_call.1} parent=11 // pred_region
          _
        $region32: #{tpu_custom_call.1} parent=11 // pred_fallthru
          _
        // Predicated region
        $region33: #{tpu_custom_call.1} parent=11 // pred_check
          %p493 = pneg %p186
        $region34: #{tpu_custom_call.1} parent=11 // pred_check_branch
          %495 = sbr.rel (%p493) target = $region36
        $region35: #{tpu_custom_call.1} parent=11 // pred_region
          %s497 = ssub.s32 2048, 2048
          %498 = vsyncadd [#allocation9], %s497
          %s499 = sshll.u32 [#allocation8], 4
          %s500 = int_to_ptr.vmem [resolvable:$true] %s499
          %505 = dma.hbm_to_vmem [thread:$0]  %s6, 2048, %s500, [#allocation9], 64, 64, 4
        $region36: #{tpu_custom_call.1} parent=11 // pred_fallthru
          _
        // Predicated region
        $region37: #{tpu_custom_call.1} parent=11 // pred_check
          %p506 = pneg %p207
        $region38: #{tpu_custom_call.1} parent=11 // pred_check_branch
          %508 = sbr.rel (%p506) target = $region40
        $region39: #{tpu_custom_call.1} parent=11 // pred_region
          %s510 = ssub.s32 32, 32
          %511 = vsyncadd [#allocation9], %s510
          %s512 = sshll.u32 [#allocation10], 4
          %s513 = int_to_ptr.vmem [resolvable:$true] %s512
          %518 = dma.hbm_to_vmem [thread:$0]  %s7, 32, %s513, [#allocation9], 16, 16, 1
        $region40: #{tpu_custom_call.1} parent=11 // pred_fallthru
          _
        // Predicated region
        $region41: #{tpu_custom_call.1} parent=11 // pred_check
          %p519 = pneg %p228
        $region42: #{tpu_custom_call.1} parent=11 // pred_check_branch
          %521 = sbr.rel (%p519) target = $region44
        $region43: #{tpu_custom_call.1} parent=11 // pred_region
          %s523 = ssub.s32 2048, 2048
          %524 = vsyncadd [#allocation12], %s523
          %s525 = sshll.u32 [#allocation11], 4
          %s526 = int_to_ptr.vmem [resolvable:$true] %s525
          %531 = dma.hbm_to_vmem [thread:$0]  %s8, 2048, %s526, [#allocation12], 64, 64, 4
        $region44: #{tpu_custom_call.1} parent=11 // pred_fallthru
          _
        // Predicated region
        $region45: #{tpu_custom_call.1} parent=11 // pred_check
          %p532 = pneg %p249
        $region46: #{tpu_custom_call.1} parent=11 // pred_check_branch
          %534 = sbr.rel (%p532) target = $region48
        $region47: #{tpu_custom_call.1} parent=11 // pred_region
          _
        $region48: #{tpu_custom_call.1} parent=11 // pred_fallthru
          _
        // Predicated region
        $region49: #{tpu_custom_call.1} parent=11 // pred_check
          %p535 = pneg %p270
        $region50: #{tpu_custom_call.1} parent=11 // pred_check_branch
          %537 = sbr.rel (%p535) target = $region52
        $region51: #{tpu_custom_call.1} parent=11 // pred_region
          _
        $region52: #{tpu_custom_call.1} parent=11 // pred_fallthru
          _
        // Predicated region
        $region53: #{tpu_custom_call.1} parent=11 // pred_check
          %p538 = pneg %p291
        $region54: #{tpu_custom_call.1} parent=11 // pred_check_branch
          %540 = sbr.rel (%p538) target = $region56
        $region55: #{tpu_custom_call.1} parent=11 // pred_region
          _
        $region56: #{tpu_custom_call.1} parent=11 // pred_fallthru
          _
        // Predicated region
        $region57: #{tpu_custom_call.1} parent=11 // pred_check
          %p541 = pneg %p312
        $region58: #{tpu_custom_call.1} parent=11 // pred_check_branch
          %543 = sbr.rel (%p541) target = $region60
        $region59: #{tpu_custom_call.1} parent=11 // pred_region
          %s545 = ssub.s32 4096, 4096
          %546 = vsyncadd [#allocation12], %s545
          %s547 = sshll.u32 [#allocation13], 4
          %s548 = int_to_ptr.vmem [resolvable:$true] %s547
          %553 = dma.hbm_to_vmem [thread:$0]  %s12, 4096, %s548, [#allocation12], 128, 128, 8
        $region60: #{tpu_custom_call.1} parent=11 // pred_fallthru
          _
        // Predicated region
        $region61: #{tpu_custom_call.1} parent=11 // pred_check
          %p554 = pneg %p333
        $region62: #{tpu_custom_call.1} parent=11 // pred_check_branch
          %556 = sbr.rel (%p554) target = $region64
        $region63: #{tpu_custom_call.1} parent=11 // pred_region
          _
        $region64: #{tpu_custom_call.1} parent=11 // pred_fallthru
          _
        // Predicated region
        $region65: #{tpu_custom_call.1} parent=11 // pred_check
          %p557 = pneg %p354
        $region66: #{tpu_custom_call.1} parent=11 // pred_check_branch
          %559 = sbr.rel (%p557) target = $region68
        $region67: #{tpu_custom_call.1} parent=11 // pred_region
          %s561 = ssub.s32 4096, 4096
          %562 = vsyncadd [#allocation15], %s561
          %s563 = sshll.u32 [#allocation14], 4
          %s564 = int_to_ptr.vmem [resolvable:$true] %s563
          %569 = dma.hbm_to_vmem [thread:$0]  %s14, 4096, %s564, [#allocation15], 64, 64, 4
        $region68: #{tpu_custom_call.1} parent=11 // pred_fallthru
          _
        // Predicated region
        $region69: #{tpu_custom_call.1} parent=11 // pred_check
          %p570 = pneg %p375
        $region70: #{tpu_custom_call.1} parent=11 // pred_check_branch
          %572 = sbr.rel (%p570) target = $region72
        $region71: #{tpu_custom_call.1} parent=11 // pred_region
          _
        $region72: #{tpu_custom_call.1} parent=11 // pred_fallthru
          _
        // Predicated region
        $region73: #{tpu_custom_call.1} parent=11 // pred_check
          %p573 = pneg %p396
        $region74: #{tpu_custom_call.1} parent=11 // pred_check_branch
          %575 = sbr.rel (%p573) target = $region76
        $region75: #{tpu_custom_call.1} parent=11 // pred_region
          %s577 = ssub.s32 1024, 1024
          %578 = vsyncadd [#allocation15], %s577
          %s579 = sshll.u32 [#allocation16], 4
          %s580 = int_to_ptr.vmem [resolvable:$true] %s579
          %585 = dma.hbm_to_vmem [thread:$0]  %s16, 1024, %s580, [#allocation15], 64, 64, 4
        $region76: #{tpu_custom_call.1} parent=11 // pred_fallthru
          _
        // Predicated region
        $region77: #{tpu_custom_call.1} parent=11 // pred_check
          %p586 = pneg %p417
        $region78: #{tpu_custom_call.1} parent=11 // pred_check_branch
          %588 = sbr.rel (%p586) target = $region80
        $region79: #{tpu_custom_call.1} parent=11 // pred_region
          _
        $region80: #{tpu_custom_call.1} parent=11 // pred_fallthru
          _
      $region12: #{tpu_custom_call.1} parent=5 // pred_fallthru
        _
      %p589 = scmp.lt.s32.totalorder %s34, 2
      // Predicated region
      $region81: #{tpu_custom_call.1} parent=5 // pred_check
        %p590 = pneg %p589
      $region82: #{tpu_custom_call.1} parent=5 // pred_check_branch
        %592 = sbr.rel (%p590) target = $region84
      $region83: #{tpu_custom_call.1} parent=5 // pred_region
        // Predicated region
        $region85: #{tpu_custom_call.1} parent=83 // pred_check
          %p593 = pneg %p54
        $region86: #{tpu_custom_call.1} parent=83 // pred_check_branch
          %595 = sbr.rel (%p593) target = $region88
        $region87: #{tpu_custom_call.1} parent=83 // pred_region
          %s596 = sand.u32 %s44, 1
          %s597 = scalar_lea.sflag [#allocation3], %s596
          %s598 = sand.u32 %s44, 1
          %s599 = scalar_lea.vmem [#allocation2], %s598
          %s601 = ssub.s32 16, 16
          %602 = vsyncadd %s597, %s601
          %s603 = smul.addr %s34, 16
          %s604 = scalar_lea.hbm %s0, %s603
          %s606 = sshll.u32 %s599, 4
          %s607 = int_to_ptr.vmem [resolvable:$true] %s606
          %609 = dma.hbm_to_vmem [thread:$0]  %s604, 16, %s607, %s597
        $region88: #{tpu_custom_call.1} parent=83 // pred_fallthru
          _
      $region84: #{tpu_custom_call.1} parent=5 // pred_fallthru
        _
      %p610 = scmp.le.s32.totalorder 1, %s34
      %p611 = scmp.lt.s32.totalorder %s34, 3
      %p612 = pnand %p610, %p611
      %p613 = pneg %p612
      // Predicated region
      $region89: #{tpu_custom_call.1} parent=5 // pred_check
        _
      $region90: #{tpu_custom_call.1} parent=5 // pred_check_branch
        %615 = sbr.rel (%p612) target = $region92
      $region91: #{tpu_custom_call.1} parent=5 // pred_region
        %s616 = ssub.s32 %s34, 1
        %s617 = sand.u32 %s47, 1
        %s618 = scalar_lea.sflag [#allocation3], %s617
        %s619 = sand.u32 %s47, 1
        %s620 = scalar_lea.vmem [#allocation2], %s619
        // Predicated region
        $region93: #{tpu_custom_call.1} parent=91 // pred_check
          %p621 = pneg %p60
        $region94: #{tpu_custom_call.1} parent=91 // pred_check_branch
          %623 = sbr.rel (%p621) target = $region96
        $region95: #{tpu_custom_call.1} parent=91 // pred_region
          %624 = dma.done %s618, 16
        $region96: #{tpu_custom_call.1} parent=91 // pred_fallthru
          _
        // Predicated region
        $region97: #{tpu_custom_call.1} parent=91 // pred_check
          %p625 = pneg %p102
        $region98: #{tpu_custom_call.1} parent=91 // pred_check_branch
          %627 = sbr.rel (%p625) target = $region100
        $region99: #{tpu_custom_call.1} parent=91 // pred_region
          %628 = dma.done [#allocation6], 6144
        $region100: #{tpu_custom_call.1} parent=91 // pred_fallthru
          _
        // Predicated region
        $region101: #{tpu_custom_call.1} parent=91 // pred_check
          %p629 = pneg %p144
        $region102: #{tpu_custom_call.1} parent=91 // pred_check_branch
          %631 = sbr.rel (%p629) target = $region104
        $region103: #{tpu_custom_call.1} parent=91 // pred_region
          %632 = dma.done [#allocation6], 2048
        $region104: #{tpu_custom_call.1} parent=91 // pred_fallthru
          _
        // Predicated region
        $region105: #{tpu_custom_call.1} parent=91 // pred_check
          %p633 = pneg %p186
        $region106: #{tpu_custom_call.1} parent=91 // pred_check_branch
          %635 = sbr.rel (%p633) target = $region108
        $region107: #{tpu_custom_call.1} parent=91 // pred_region
          %636 = dma.done [#allocation9], 2048
        $region108: #{tpu_custom_call.1} parent=91 // pred_fallthru
          _
        // Predicated region
        $region109: #{tpu_custom_call.1} parent=91 // pred_check
          %p637 = pneg %p207
        $region110: #{tpu_custom_call.1} parent=91 // pred_check_branch
          %639 = sbr.rel (%p637) target = $region112
        $region111: #{tpu_custom_call.1} parent=91 // pred_region
          %640 = dma.done [#allocation9], 32
        $region112: #{tpu_custom_call.1} parent=91 // pred_fallthru
          _
        // Predicated region
        $region113: #{tpu_custom_call.1} parent=91 // pred_check
          %p641 = pneg %p228
        $region114: #{tpu_custom_call.1} parent=91 // pred_check_branch
          %643 = sbr.rel (%p641) target = $region116
        $region115: #{tpu_custom_call.1} parent=91 // pred_region
          %644 = dma.done [#allocation12], 2048
        $region116: #{tpu_custom_call.1} parent=91 // pred_fallthru
          _
        // Predicated region
        $region117: #{tpu_custom_call.1} parent=91 // pred_check
          %p645 = pneg %p312
        $region118: #{tpu_custom_call.1} parent=91 // pred_check_branch
          %647 = sbr.rel (%p645) target = $region120
        $region119: #{tpu_custom_call.1} parent=91 // pred_region
          %648 = dma.done [#allocation12], 4096
        $region120: #{tpu_custom_call.1} parent=91 // pred_fallthru
          _
        // Predicated region
        $region121: #{tpu_custom_call.1} parent=91 // pred_check
          %p649 = pneg %p354
        $region122: #{tpu_custom_call.1} parent=91 // pred_check_branch
          %651 = sbr.rel (%p649) target = $region124
        $region123: #{tpu_custom_call.1} parent=91 // pred_region
          %652 = dma.done [#allocation15], 4096
        $region124: #{tpu_custom_call.1} parent=91 // pred_fallthru
          _
        // Predicated region
        $region125: #{tpu_custom_call.1} parent=91 // pred_check
          %p653 = pneg %p396
        $region126: #{tpu_custom_call.1} parent=91 // pred_check_branch
          %655 = sbr.rel (%p653) target = $region128
        $region127: #{tpu_custom_call.1} parent=91 // pred_region
          %656 = dma.done [#allocation15], 1024
        $region128: #{tpu_custom_call.1} parent=91 // pred_fallthru
          _
        %s657 = sand.u32 %s47, 1
        %s658 = scalar_lea.sflag [#allocation3], %s657
        %s659 = sand.u32 %s47, 1
        %s660 = scalar_lea.vmem [#allocation2], %s659
        %p661 = pneg %p60
        %p662 = pneg %p57
        %p663 = pneg %p81
        %p664 = pneg %p78
        %p665 = pneg %p102
        %p666 = pneg %p99
        %p667 = pneg %p123
        %p668 = pneg %p120
        %p669 = pneg %p144
        %p670 = pneg %p141
        %p671 = pneg %p165
        %p672 = pneg %p162
        %p673 = pneg %p186
        %p674 = pneg %p183
        %p675 = pneg %p207
        %p676 = pneg %p204
        %p677 = pneg %p228
        %p678 = pneg %p225
        %p679 = pneg %p249
        %p680 = pneg %p246
        %p681 = pneg %p270
        %p682 = pneg %p267
        %p683 = pneg %p291
        %p684 = pneg %p288
        %p685 = pneg %p312
        %p686 = pneg %p309
        %p687 = pneg %p333
        %p688 = pneg %p330
        %p689 = pneg %p354
        %p690 = pneg %p351
        %p691 = pneg %p375
        %p692 = pneg %p372
        %p693 = pneg %p396
        %p694 = pneg %p393
        %p695 = pneg %p417
        %p696 = pneg %p414
        %p697 = pneg %p443
        %p698 = pneg %p440
        %s699 = sand.u32 %s430, 1
        %s700 = scalar_lea.sflag [#allocation4], %s699
        %s701 = sand.u32 %s430, 1
        %s702 = smul.addr %s701, 16
        %s703 = scalar_lea.vmem [#allocation17], %s702
        %v705 = vld [vmem:[%s620] sm:$0x1]
        %v706 = vld [vmem:[%s1] sm:$0xff]
        %v707 = vld [vmem:[%s1 + $0x8] sm:$0xff]
        %v708 = vld [vmem:[%s10] sm:$0x7]
        %v709 = vld [vmem:[%s11] sm:$0x7]
        %v710 = vpack.c.bf16 %v707, %v706
        %v711 = vld [vmem:[#allocation5] sm:$0xff]
        %v712 = vld [vmem:[#allocation5 + $0x8] sm:$0xf]
        %v713 = vld [vmem:[#allocation5 + $0xc] sm:$0xff]
        %v714 = vld [vmem:[#allocation5 + $0x14] sm:$0xf]
        %v715 = vld [vmem:[#allocation5 + $0x18] sm:$0xff]
        %v716 = vld [vmem:[#allocation5 + $0x20] sm:$0xf]
        %v717 = vld [vmem:[#allocation5 + $0x24] sm:$0xff]
        %v718 = vld [vmem:[#allocation5 + $0x2c] sm:$0xf]
        %v719 = vld [vmem:[#allocation5 + $0x30] sm:$0xff]
        %v720 = vld [vmem:[#allocation5 + $0x38] sm:$0xf]
        %v721 = vld [vmem:[#allocation5 + $0x3c] sm:$0xff]
        %v722 = vld [vmem:[#allocation5 + $0x44] sm:$0xf]
        %v723 = vld [vmem:[#allocation5 + $0x48] sm:$0xff]
        %v724 = vld [vmem:[#allocation5 + $0x50] sm:$0xf]
        %v725 = vld [vmem:[#allocation5 + $0x54] sm:$0xff]
        %v726 = vld [vmem:[#allocation5 + $0x5c] sm:$0xf]
        %v727 = vld [vmem:[#allocation5 + $0x60] sm:$0xff]
        %v728 = vld [vmem:[#allocation5 + $0x68] sm:$0xf]
        %v729 = vld [vmem:[#allocation5 + $0x6c] sm:$0xff]
        %v730 = vld [vmem:[#allocation5 + $0x74] sm:$0xf]
        %v731 = vld [vmem:[#allocation5 + $0x78] sm:$0xff]
        %v732 = vld [vmem:[#allocation5 + $0x80] sm:$0xf]
        %v733 = vld [vmem:[#allocation5 + $0x84] sm:$0xff]
        %v734 = vld [vmem:[#allocation5 + $0x8c] sm:$0xf]
        %v735 = vld [vmem:[#allocation5 + $0x90] sm:$0xff]
        %v736 = vld [vmem:[#allocation5 + $0x98] sm:$0xf]
        %v737 = vld [vmem:[#allocation5 + $0x9c] sm:$0xff]
        %v738 = vld [vmem:[#allocation5 + $0xa4] sm:$0xf]
        %v739 = vld [vmem:[#allocation5 + $0xa8] sm:$0xff]
        %v740 = vld [vmem:[#allocation5 + $0xb0] sm:$0xf]
        %v741 = vld [vmem:[#allocation5 + $0xb4] sm:$0xff]
        %v742 = vld [vmem:[#allocation5 + $0xbc] sm:$0xf]
        %v743 = vld [vmem:[%s3] sm:$0x7]
        %v745 = vlaneseq
        %v746 = vshrl.u32 %v745, 7
        %v747 = vsub.s32 0, %v746
        %v748 = vrot.slane %v743, %v747
        %v749 = vlaneseq
        %v750 = vshrl.u32 %v749, 7
        %v751 = vsub.s32 1, %v750
        %v752 = vrot.slane %v743, %v751
        %v753 = vlaneseq
        %v754 = vshrl.u32 %v753, 7
        %v755 = vsub.s32 2, %v754
        %v756 = vrot.slane %v743, %v755
        %v792 = vunpack.c.l.b16 %v711
        %v793 = vunpack.c.h.b16 %v711
        %v794 = vunpack.c.l.b16 %v712
        %v795 = vunpack.c.l.b16 %v713
        %v796 = vunpack.c.h.b16 %v713
        %v797 = vunpack.c.l.b16 %v714
        %v798 = vunpack.c.l.b16 %v715
        %v799 = vunpack.c.h.b16 %v715
        %v800 = vunpack.c.l.b16 %v716
        %v801 = vunpack.c.l.b16 %v717
        %v802 = vunpack.c.h.b16 %v717
        %v803 = vunpack.c.l.b16 %v718
        %v804 = vunpack.c.l.b16 %v719
        %v805 = vunpack.c.h.b16 %v719
        %v806 = vunpack.c.l.b16 %v720
        %v807 = vunpack.c.l.b16 %v721
        %v808 = vunpack.c.h.b16 %v721
        %v809 = vunpack.c.l.b16 %v722
        %v810 = vunpack.c.l.b16 %v723
        %v811 = vunpack.c.h.b16 %v723
        %v812 = vunpack.c.l.b16 %v724
        %v813 = vunpack.c.l.b16 %v725
        %v814 = vunpack.c.h.b16 %v725
        %v815 = vunpack.c.l.b16 %v726
        %v816 = vunpack.c.l.b16 %v727
        %v817 = vunpack.c.h.b16 %v727
        %v818 = vunpack.c.l.b16 %v728
        %v819 = vunpack.c.l.b16 %v729
        %v820 = vunpack.c.h.b16 %v729
        %v821 = vunpack.c.l.b16 %v730
        %v822 = vunpack.c.l.b16 %v731
        %v823 = vunpack.c.h.b16 %v731
        %v824 = vunpack.c.l.b16 %v732
        %v825 = vunpack.c.l.b16 %v733
        %v826 = vunpack.c.h.b16 %v733
        %v827 = vunpack.c.l.b16 %v734
        %v828 = vunpack.c.l.b16 %v735
        %v829 = vunpack.c.h.b16 %v735
        %v830 = vunpack.c.l.b16 %v736
        %v831 = vunpack.c.l.b16 %v737
        %v832 = vunpack.c.h.b16 %v737
        %v833 = vunpack.c.l.b16 %v738
        %v834 = vunpack.c.l.b16 %v739
        %v835 = vunpack.c.h.b16 %v739
        %v836 = vunpack.c.l.b16 %v740
        %v837 = vunpack.c.l.b16 %v741
        %v838 = vunpack.c.h.b16 %v741
        %v839 = vunpack.c.l.b16 %v742
        %v840 = vpack.c.b16 %v795, %v792
        %v841 = vpack.c.b16 %v796, %v793
        %v842 = vpack.c.b16 %v797, %v794
        %v843 = vpack.c.b16 %v801, %v798
        %v844 = vpack.c.b16 %v802, %v799
        %v845 = vpack.c.b16 %v803, %v800
        %v846 = vpack.c.b16 %v807, %v804
        %v847 = vpack.c.b16 %v808, %v805
        %v848 = vpack.c.b16 %v809, %v806
        %v849 = vpack.c.b16 %v813, %v810
        %v850 = vpack.c.b16 %v814, %v811
        %v851 = vpack.c.b16 %v815, %v812
        %v852 = vpack.c.b16 %v819, %v816
        %v853 = vpack.c.b16 %v820, %v817
        %v854 = vpack.c.b16 %v821, %v818
        %v855 = vpack.c.b16 %v825, %v822
        %v856 = vpack.c.b16 %v826, %v823
        %v857 = vpack.c.b16 %v827, %v824
        %v858 = vpack.c.b16 %v831, %v828
        %v859 = vpack.c.b16 %v832, %v829
        %v860 = vpack.c.b16 %v833, %v830
        %v861 = vpack.c.b16 %v837, %v834
        %v862 = vpack.c.b16 %v838, %v835
        %v863 = vpack.c.b16 %v839, %v836
        %888 = vmatprep.subr.bf16.mxu0 %v862
        %889 = vmatpush1.bf16.msra.mxu0 %v861
        %890 = vmatprep.subr.bf16.mxu0 %v859
        %891 = vmatpush1.bf16.msra.mxu0 %v858
        %892 = vmatprep.subr.bf16.mxu0 %v856
        %893 = vmatpush1.bf16.msra.mxu0 %v855
        %894 = vmatprep.subr.bf16.mxu0 %v853
        %895 = vmatpush1.bf16.msra.mxu0 %v852
        %896 = vmatprep.subr.bf16.mxu0 %v850
        %897 = vmatpush1.bf16.msra.mxu0 %v849
        %898 = vmatprep.subr.bf16.mxu0 %v847
        %899 = vmatpush1.bf16.msra.mxu0 %v846
        %900 = vmatprep.subr.bf16.mxu0 %v844
        %901 = vmatpush1.bf16.msra.mxu0 %v843
        %902 = vmatprep.subr.bf16.mxu0 %v841
        %903 = vmatpush1.bf16.msra.mxu0 %v840
        %904 = vmatprep.subr.bf16.mxu0 0
        %905 = vmatpush2.bf16.msra.mxu0 0
        %906 = vmatprep.subr.bf16.mxu0 0
        %907 = vmatpush2.bf16.msra.mxu0 0
        %908 = vmatprep.subr.bf16.mxu0 0
        %909 = vmatpush2.bf16.msra.mxu0 0
        %910 = vmatprep.subr.bf16.mxu0 0
        %911 = vmatpush2.bf16.msra.mxu0 0
        %912 = vmatprep.subr.bf16.mxu0 0
        %913 = vmatpush2.bf16.msra.mxu0 0
        %914 = vmatprep.subr.bf16.mxu0 0
        %915 = vmatpush2.bf16.msra.mxu0 0
        %916 = vmatprep.subr.bf16.mxu0 0
        %917 = vmatpush2.bf16.msra.mxu0 0
        %918 = vmatprep.subr.bf16.mxu0 0
        %919 = vmatpush2.bf16.msra.mxu0 0
        %920 = vmatprep.mubr.bf16.mxu0 0
        %921 = vmatmul.mubr.bf16.gmra.mxu0 %v710
        %v922 = vpop.f32.mrf.mxu0
        %v923 = vadd.f32 %v748, %v922
        %v924 = vpop.f32.mrf.mxu0
        %v925 = vadd.f32 %v752, %v924
        %v926 = vpop.f32.mrf.mxu0
        %v927 = vadd.f32 %v748, %v926
        %v928 = vpop.f32.mrf.mxu0
        %v929 = vadd.f32 %v752, %v928
        %930 = vdwg.mxu0
        %931 = vmatprep.subr.bf16.mxu0 0
        %932 = vmatpush1.bf16.msra.mxu0 %v863
        %933 = vmatprep.subr.bf16.mxu0 0
        %934 = vmatpush1.bf16.msra.mxu0 %v860
        %935 = vmatprep.subr.bf16.mxu0 0
        %936 = vmatpush1.bf16.msra.mxu0 %v857
        %937 = vmatprep.subr.bf16.mxu0 0
        %938 = vmatpush1.bf16.msra.mxu0 %v854
        %939 = vmatprep.subr.bf16.mxu0 0
        %940 = vmatpush1.bf16.msra.mxu0 %v851
        %941 = vmatprep.subr.bf16.mxu0 0
        %942 = vmatpush1.bf16.msra.mxu0 %v848
        %943 = vmatprep.subr.bf16.mxu0 0
        %944 = vmatpush1.bf16.msra.mxu0 %v845
        %945 = vmatprep.subr.bf16.mxu0 0
        %946 = vmatpush1.bf16.msra.mxu0 %v842
        %947 = vmatprep.subr.bf16.mxu0 0
        %948 = vmatpush2.bf16.msra.mxu0 0
        %949 = vmatprep.subr.bf16.mxu0 0
        %950 = vmatpush2.bf16.msra.mxu0 0
        %951 = vmatprep.subr.bf16.mxu0 0
        %952 = vmatpush2.bf16.msra.mxu0 0
        %953 = vmatprep.subr.bf16.mxu0 0
        %954 = vmatpush2.bf16.msra.mxu0 0
        %955 = vmatprep.subr.bf16.mxu0 0
        %956 = vmatpush2.bf16.msra.mxu0 0
        %957 = vmatprep.subr.bf16.mxu0 0
        %958 = vmatpush2.bf16.msra.mxu0 0
        %959 = vmatprep.subr.bf16.mxu0 0
        %960 = vmatpush2.bf16.msra.mxu0 0
        %961 = vmatprep.subr.bf16.mxu0 0
        %962 = vmatpush2.bf16.msra.mxu0 0
        %963 = vmatprep.mubr.bf16.mxu0 0
        %964 = vmatmul.mubr.bf16.gmra.mxu0 %v710
        %v965 = vpop.f32.mrf.mxu0
        %v966 = vadd.f32 %v756, %v965
        %v967 = vpop.f32.mrf.mxu0
        %v968 = vpop.f32.mrf.mxu0
        %v969 = vadd.f32 %v756, %v968
        %v970 = vpop.f32.mrf.mxu0
        %971 = vdwg.mxu0
        %vm972 = vcmask 261120
        %v974 = vsel %vm972, %v923, 0
        %v977 = vsel %vm972, %v927, 0
        %v980 = vsel %vm972, %v925, 0
        %v983 = vsel %vm972, %v929, 0
        %985 = vmatprep.subr.mxu0 0.0
        %986 = vmatpush1.xpose.msra.mxu0 0.0
        %987 = vmatprep.subr.mxu0 0.0
        %988 = vmatpush1.xpose.msra.mxu0 0.0
        %989 = vmatprep.subr.mxu0 0.0
        %990 = vmatpush1.xpose.msra.mxu0 0.0
        %991 = vmatprep.subr.mxu0 0.0
        %992 = vmatpush1.xpose.msra.mxu0 0.0
        %993 = vmatprep.subr.mxu0 0.0
        %994 = vmatpush1.xpose.msra.mxu0 0.0
        %995 = vmatprep.subr.mxu0 0.0
        %996 = vmatpush1.xpose.msra.mxu0 0.0
        %997 = vmatprep.subr.mxu0 0.0
        %998 = vmatpush1.xpose.msra.mxu0 0.0
        %999 = vmatprep.subr.mxu0 0.0
        %1000 = vmatpush1.xpose.msra.mxu0 0.0
        %1001 = vmatprep.subr.mxu0 0.0
        %1002 = vmatpush1.xpose.msra.mxu0 0.0
        %1003 = vmatprep.subr.mxu0 0.0
        %1004 = vmatpush1.xpose.msra.mxu0 0.0
        %1005 = vmatprep.subr.mxu0 0.0
        %1006 = vmatpush1.xpose.msra.mxu0 0.0
        %1007 = vmatprep.subr.mxu0 0.0
        %1008 = vmatpush1.xpose.msra.mxu0 0.0
        %1009 = vmatprep.subr.mxu0 0.0
        %1010 = vmatpush1.xpose.msra.mxu0 0.0
        %1011 = vmatprep.subr.mxu0 0.0
        %1012 = vmatpush1.xpose.msra.mxu0 0.0
        %1013 = vmatprep.subr.mxu0 0.0
        %1014 = vmatpush1.xpose.msra.mxu0 %v983
        %1015 = vmatprep.subr.mxu0 0.0
        %1016 = vmatpush1.xpose.msra.mxu0 %v980
        %1017 = vmatprep.subr.mxu0 0.0
        %1018 = vmatpush2.xpose.msra.mxu0 0.0
        %1019 = vmatprep.subr.mxu0 0.0
        %1020 = vmatpush2.xpose.msra.mxu0 0.0
        %1021 = vmatprep.subr.mxu0 0.0
        %1022 = vmatpush2.xpose.msra.mxu0 0.0
        %1023 = vmatprep.subr.mxu0 0.0
        %1024 = vmatpush2.xpose.msra.mxu0 0.0
        %1025 = vmatprep.subr.mxu0 0.0
        %1026 = vmatpush2.xpose.msra.mxu0 0.0
        %1027 = vmatprep.subr.mxu0 0.0
        %1028 = vmatpush2.xpose.msra.mxu0 0.0
        %1029 = vmatprep.subr.mxu0 0.0
        %1030 = vmatpush2.xpose.msra.mxu0 0.0
        %1031 = vmatprep.subr.mxu0 0.0
        %1032 = vmatpush2.xpose.msra.mxu0 0.0
        %1033 = vmatprep.subr.mxu0 0.0
        %1034 = vmatpush2.xpose.msra.mxu0 0.0
        %1035 = vmatprep.subr.mxu0 0.0
        %1036 = vmatpush2.xpose.msra.mxu0 0.0
        %1037 = vmatprep.subr.mxu0 0.0
        %1038 = vmatpush2.xpose.msra.mxu0 0.0
        %1039 = vmatprep.subr.mxu0 0.0
        %1040 = vmatpush2.xpose.msra.mxu0 0.0
        %1041 = vmatprep.subr.mxu0 0.0
        %1042 = vmatpush2.xpose.msra.mxu0 0.0
        %1043 = vmatprep.subr.mxu0 0.0
        %1044 = vmatpush2.xpose.msra.mxu0 0.0
        %1045 = vmatprep.subr.mxu0 0.0
        %1046 = vmatpush2.xpose.msra.mxu0 0.0
        %1047 = vmatprep.subr.mxu0 0.0
        %1048 = vmatpush2.xpose.msra.mxu0 0.0
        %1049 = vmatprep.mubr.f32.mxu0 0.0
        %1050 = vmatmul.mubr.f32.gmra.mxu0 %v974
        %v1051 = vpop.f32.mrf.mxu0
        %v1052 = vadd.f32 0.0, %v1051
        %v1053 = vpop.f32.mrf.mxu0
        %1054 = vmatprep.mubr.f32.mxu0 0.0
        %1055 = vmatmul.mubr.f32.gmra.mxu0 %v977
        %v1056 = vpop.f32.mrf.mxu0
        %v1057 = vadd.f32 0.0, %v1056
        %v1058 = vpop.f32.mrf.mxu0
        %1059 = vdwg.mxu0
        %v1060 = vmul.f32 %v1052, 0.17677669
        %v1061 = vmul.f32 %v1057, 0.17677669
        %vm1062 = vcmask 130048
        %v1063 = vsel %vm1062, %v1060, -inf
        %1064 = vmax.xlane.f32.xlu0 %v1063
        %v1065 = vpop.xlane.xlu0 %1064
        %v1066 = vsel %vm1062, %v1061, -inf
        %1067 = vmax.xlane.f32.xlu0 %v1066
        %v1068 = vpop.xlane.xlu0 %1067
        %v1069 = vsub.f32 %v1060, %v1065
        %v1070 = vsub.f32 %v1061, %v1068
        %v1071 = vmul.f32 %v1069, 1.442695
        %v1072 = vpow.pop %v1071
        %v1073 = vmul.f32 %v1070, 1.442695
        %v1074 = vpow.pop %v1073
        %v1075 = vsel %vm1062, %v1072, 0.0
        %1076 = vadd.xlane.f32.xlu0 %v1075
        %v1077 = vpop.xlane.xlu0 %1076
        %v1078 = vsel %vm1062, %v1074, 0.0
        %1079 = vadd.xlane.f32.xlu0 %v1078
        %v1080 = vpop.xlane.xlu0 %1079
        %v1081 = vrcp.pop %v1077
        %v1082 = vrcp.pop %v1080
        %v1083 = vmul.f32 %v1072, %v1081
        %v1084 = vmul.f32 %v1074, %v1082
        %v1086 = vsel %vm1062, %v1083, 0
        %v1089 = vsel %vm1062, %v1084, 0
        %1091 = vmatprep.subr.mxu0 0.0
        %1092 = vmatpush1.msra.mxu0 0.0
        %1093 = vmatprep.subr.mxu0 0.0
        %1094 = vmatpush1.msra.mxu0 0.0
        %1095 = vmatprep.subr.mxu0 0.0
        %1096 = vmatpush1.msra.mxu0 0.0
        %1097 = vmatprep.subr.mxu0 0.0
        %1098 = vmatpush1.msra.mxu0 0.0
        %1099 = vmatprep.subr.mxu0 0.0
        %1100 = vmatpush1.msra.mxu0 0.0
        %1101 = vmatprep.subr.mxu0 0.0
        %1102 = vmatpush1.msra.mxu0 0.0
        %1103 = vmatprep.subr.mxu0 0.0
        %1104 = vmatpush1.msra.mxu0 0.0
        %1105 = vmatprep.subr.mxu0 0.0
        %1106 = vmatpush1.msra.mxu0 0.0
        %1107 = vmatprep.subr.mxu0 0.0
        %1108 = vmatpush1.msra.mxu0 0.0
        %1109 = vmatprep.subr.mxu0 0.0
        %1110 = vmatpush1.msra.mxu0 0.0
        %1111 = vmatprep.subr.mxu0 0.0
        %1112 = vmatpush1.msra.mxu0 0.0
        %1113 = vmatprep.subr.mxu0 0.0
        %1114 = vmatpush1.msra.mxu0 0.0
        %1115 = vmatprep.subr.mxu0 0.0
        %1116 = vmatpush1.msra.mxu0 0.0
        %1117 = vmatprep.subr.mxu0 0.0
        %1118 = vmatpush1.msra.mxu0 0.0
        %1119 = vmatprep.subr.mxu0 0.0
        %1120 = vmatpush1.msra.mxu0 %v969
        %1121 = vmatprep.subr.mxu0 0.0
        %1122 = vmatpush1.msra.mxu0 %v966
        %1123 = vmatprep.subr.mxu0 0.0
        %1124 = vmatpush2.msra.mxu0 0.0
        %1125 = vmatprep.subr.mxu0 0.0
        %1126 = vmatpush2.msra.mxu0 0.0
        %1127 = vmatprep.subr.mxu0 0.0
        %1128 = vmatpush2.msra.mxu0 0.0
        %1129 = vmatprep.subr.mxu0 0.0
        %1130 = vmatpush2.msra.mxu0 0.0
        %1131 = vmatprep.subr.mxu0 0.0
        %1132 = vmatpush2.msra.mxu0 0.0
        %1133 = vmatprep.subr.mxu0 0.0
        %1134 = vmatpush2.msra.mxu0 0.0
        %1135 = vmatprep.subr.mxu0 0.0
        %1136 = vmatpush2.msra.mxu0 0.0
        %1137 = vmatprep.subr.mxu0 0.0
        %1138 = vmatpush2.msra.mxu0 0.0
        %1139 = vmatprep.subr.mxu0 0.0
        %1140 = vmatpush2.msra.mxu0 0.0
        %1141 = vmatprep.subr.mxu0 0.0
        %1142 = vmatpush2.msra.mxu0 0.0
        %1143 = vmatprep.subr.mxu0 0.0
        %1144 = vmatpush2.msra.mxu0 0.0
        %1145 = vmatprep.subr.mxu0 0.0
        %1146 = vmatpush2.msra.mxu0 0.0
        %1147 = vmatprep.subr.mxu0 0.0
        %1148 = vmatpush2.msra.mxu0 0.0
        %1149 = vmatprep.subr.mxu0 0.0
        %1150 = vmatpush2.msra.mxu0 0.0
        %1151 = vmatprep.subr.mxu0 0.0
        %1152 = vmatpush2.msra.mxu0 0.0
        %1153 = vmatprep.subr.mxu0 0.0
        %1154 = vmatpush2.msra.mxu0 0.0
        %1155 = vmatprep.mubr.f32.mxu0 0.0
        %1156 = vmatmul.mubr.f32.gmra.mxu0 %v1086
        %v1157 = vpop.f32.mrf.mxu0
        %v1158 = vadd.f32 0.0, %v1157
        %v1159 = vpop.f32.mrf.mxu0
        %1160 = vmatprep.mubr.f32.mxu0 0.0
        %1161 = vmatmul.mubr.f32.gmra.mxu0 %v1089
        %v1162 = vpop.f32.mrf.mxu0
        %v1163 = vadd.f32 0.0, %v1162
        %v1164 = vpop.f32.mrf.mxu0
        %1165 = vdwg.mxu0
        %1166 = vrot.lane.b32.xlu0 %v923, 96
        %v1167 = vpop.permute.xlu0 %1166
        %1168 = vrot.lane.b32.xlu0 %v927, 96
        %v1169 = vpop.permute.xlu0 %1168
        %1170 = vrot.lane.b32.xlu0 %v925, 96
        %v1171 = vpop.permute.xlu0 %1170
        %1172 = vrot.lane.b32.xlu0 %v929, 96
        %v1173 = vpop.permute.xlu0 %1172
        %v1174 = vsel %vm972, %v1167, 0
        %v1176 = vsel %vm972, %v1169, 0
        %v1178 = vsel %vm972, %v1171, 0
        %v1180 = vsel %vm972, %v1173, 0
        %1182 = vmatprep.subr.mxu0 0.0
        %1183 = vmatpush1.xpose.msra.mxu0 0.0
        %1184 = vmatprep.subr.mxu0 0.0
        %1185 = vmatpush1.xpose.msra.mxu0 0.0
        %1186 = vmatprep.subr.mxu0 0.0
        %1187 = vmatpush1.xpose.msra.mxu0 0.0
        %1188 = vmatprep.subr.mxu0 0.0
        %1189 = vmatpush1.xpose.msra.mxu0 0.0
        %1190 = vmatprep.subr.mxu0 0.0
        %1191 = vmatpush1.xpose.msra.mxu0 0.0
        %1192 = vmatprep.subr.mxu0 0.0
        %1193 = vmatpush1.xpose.msra.mxu0 0.0
        %1194 = vmatprep.subr.mxu0 0.0
        %1195 = vmatpush1.xpose.msra.mxu0 0.0
        %1196 = vmatprep.subr.mxu0 0.0
        %1197 = vmatpush1.xpose.msra.mxu0 0.0
        %1198 = vmatprep.subr.mxu0 0.0
        %1199 = vmatpush1.xpose.msra.mxu0 0.0
        %1200 = vmatprep.subr.mxu0 0.0
        %1201 = vmatpush1.xpose.msra.mxu0 0.0
        %1202 = vmatprep.subr.mxu0 0.0
        %1203 = vmatpush1.xpose.msra.mxu0 0.0
        %1204 = vmatprep.subr.mxu0 0.0
        %1205 = vmatpush1.xpose.msra.mxu0 0.0
        %1206 = vmatprep.subr.mxu0 0.0
        %1207 = vmatpush1.xpose.msra.mxu0 0.0
        %1208 = vmatprep.subr.mxu0 0.0
        %1209 = vmatpush1.xpose.msra.mxu0 0.0
        %1210 = vmatprep.subr.mxu0 0.0
        %1211 = vmatpush1.xpose.msra.mxu0 %v1180
        %1212 = vmatprep.subr.mxu0 0.0
        %1213 = vmatpush1.xpose.msra.mxu0 %v1178
        %1214 = vmatprep.subr.mxu0 0.0
        %1215 = vmatpush2.xpose.msra.mxu0 0.0
        %1216 = vmatprep.subr.mxu0 0.0
        %1217 = vmatpush2.xpose.msra.mxu0 0.0
        %1218 = vmatprep.subr.mxu0 0.0
        %1219 = vmatpush2.xpose.msra.mxu0 0.0
        %1220 = vmatprep.subr.mxu0 0.0
        %1221 = vmatpush2.xpose.msra.mxu0 0.0
        %1222 = vmatprep.subr.mxu0 0.0
        %1223 = vmatpush2.xpose.msra.mxu0 0.0
        %1224 = vmatprep.subr.mxu0 0.0
        %1225 = vmatpush2.xpose.msra.mxu0 0.0
        %1226 = vmatprep.subr.mxu0 0.0
        %1227 = vmatpush2.xpose.msra.mxu0 0.0
        %1228 = vmatprep.subr.mxu0 0.0
        %1229 = vmatpush2.xpose.msra.mxu0 0.0
        %1230 = vmatprep.subr.mxu0 0.0
        %1231 = vmatpush2.xpose.msra.mxu0 0.0
        %1232 = vmatprep.subr.mxu0 0.0
        %1233 = vmatpush2.xpose.msra.mxu0 0.0
        %1234 = vmatprep.subr.mxu0 0.0
        %1235 = vmatpush2.xpose.msra.mxu0 0.0
        %1236 = vmatprep.subr.mxu0 0.0
        %1237 = vmatpush2.xpose.msra.mxu0 0.0
        %1238 = vmatprep.subr.mxu0 0.0
        %1239 = vmatpush2.xpose.msra.mxu0 0.0
        %1240 = vmatprep.subr.mxu0 0.0
        %1241 = vmatpush2.xpose.msra.mxu0 0.0
        %1242 = vmatprep.subr.mxu0 0.0
        %1243 = vmatpush2.xpose.msra.mxu0 0.0
        %1244 = vmatprep.subr.mxu0 0.0
        %1245 = vmatpush2.xpose.msra.mxu0 0.0
        %1246 = vmatprep.mubr.f32.mxu0 0.0
        %1247 = vmatmul.mubr.f32.gmra.mxu0 %v1174
        %v1248 = vpop.f32.mrf.mxu0
        %v1249 = vadd.f32 0.0, %v1248
        %v1250 = vpop.f32.mrf.mxu0
        %1251 = vmatprep.mubr.f32.mxu0 0.0
        %1252 = vmatmul.mubr.f32.gmra.mxu0 %v1176
        %v1253 = vpop.f32.mrf.mxu0
        %v1254 = vadd.f32 0.0, %v1253
        %v1255 = vpop.f32.mrf.mxu0
        %1256 = vdwg.mxu0
        %v1257 = vmul.f32 %v1249, 0.17677669
        %v1258 = vmul.f32 %v1254, 0.17677669
        %v1259 = vsel %vm1062, %v1257, -inf
        %1260 = vmax.xlane.f32.xlu0 %v1259
        %v1261 = vpop.xlane.xlu0 %1260
        %v1262 = vsel %vm1062, %v1258, -inf
        %1263 = vmax.xlane.f32.xlu0 %v1262
        %v1264 = vpop.xlane.xlu0 %1263
        %v1265 = vsub.f32 %v1257, %v1261
        %v1266 = vsub.f32 %v1258, %v1264
        %v1267 = vmul.f32 %v1265, 1.442695
        %v1268 = vpow.pop %v1267
        %v1269 = vmul.f32 %v1266, 1.442695
        %v1270 = vpow.pop %v1269
        %v1271 = vsel %vm1062, %v1268, 0.0
        %1272 = vadd.xlane.f32.xlu0 %v1271
        %v1273 = vpop.xlane.xlu0 %1272
        %v1274 = vsel %vm1062, %v1270, 0.0
        %1275 = vadd.xlane.f32.xlu0 %v1274
        %v1276 = vpop.xlane.xlu0 %1275
        %v1277 = vrcp.pop %v1273
        %v1278 = vrcp.pop %v1276
        %v1279 = vmul.f32 %v1268, %v1277
        %v1280 = vmul.f32 %v1270, %v1278
        %1283 = vrot.lane.b32.xlu0 %v966, 96
        %v1284 = vpop.permute.xlu0 %1283
        %1285 = vrot.lane.b32.xlu0 %v969, 96
        %v1286 = vpop.permute.xlu0 %1285
        %v1290 = vsel %vm1062, %v1279, 0
        %v1293 = vsel %vm1062, %v1280, 0
        %1295 = vmatprep.subr.mxu0 0.0
        %1296 = vmatpush1.msra.mxu0 0.0
        %1297 = vmatprep.subr.mxu0 0.0
        %1298 = vmatpush1.msra.mxu0 0.0
        %1299 = vmatprep.subr.mxu0 0.0
        %1300 = vmatpush1.msra.mxu0 0.0
        %1301 = vmatprep.subr.mxu0 0.0
        %1302 = vmatpush1.msra.mxu0 0.0
        %1303 = vmatprep.subr.mxu0 0.0
        %1304 = vmatpush1.msra.mxu0 0.0
        %1305 = vmatprep.subr.mxu0 0.0
        %1306 = vmatpush1.msra.mxu0 0.0
        %1307 = vmatprep.subr.mxu0 0.0
        %1308 = vmatpush1.msra.mxu0 0.0
        %1309 = vmatprep.subr.mxu0 0.0
        %1310 = vmatpush1.msra.mxu0 0.0
        %1311 = vmatprep.subr.mxu0 0.0
        %1312 = vmatpush1.msra.mxu0 0.0
        %1313 = vmatprep.subr.mxu0 0.0
        %1314 = vmatpush1.msra.mxu0 0.0
        %1315 = vmatprep.subr.mxu0 0.0
        %1316 = vmatpush1.msra.mxu0 0.0
        %1317 = vmatprep.subr.mxu0 0.0
        %1318 = vmatpush1.msra.mxu0 0.0
        %1319 = vmatprep.subr.mxu0 0.0
        %1320 = vmatpush1.msra.mxu0 0.0
        %1321 = vmatprep.subr.mxu0 0.0
        %1322 = vmatpush1.msra.mxu0 0.0
        %1323 = vmatprep.subr.mxu0 0.0
        %1324 = vmatpush1.msra.mxu0 %v1286
        %1325 = vmatprep.subr.mxu0 0.0
        %1326 = vmatpush1.msra.mxu0 %v1284
        %1327 = vmatprep.subr.mxu0 0.0
        %1328 = vmatpush2.msra.mxu0 0.0
        %1329 = vmatprep.subr.mxu0 0.0
        %1330 = vmatpush2.msra.mxu0 0.0
        %1331 = vmatprep.subr.mxu0 0.0
        %1332 = vmatpush2.msra.mxu0 0.0
        %1333 = vmatprep.subr.mxu0 0.0
        %1334 = vmatpush2.msra.mxu0 0.0
        %1335 = vmatprep.subr.mxu0 0.0
        %1336 = vmatpush2.msra.mxu0 0.0
        %1337 = vmatprep.subr.mxu0 0.0
        %1338 = vmatpush2.msra.mxu0 0.0
        %1339 = vmatprep.subr.mxu0 0.0
        %1340 = vmatpush2.msra.mxu0 0.0
        %1341 = vmatprep.subr.mxu0 0.0
        %1342 = vmatpush2.msra.mxu0 0.0
        %1343 = vmatprep.subr.mxu0 0.0
        %1344 = vmatpush2.msra.mxu0 0.0
        %1345 = vmatprep.subr.mxu0 0.0
        %1346 = vmatpush2.msra.mxu0 0.0
        %1347 = vmatprep.subr.mxu0 0.0
        %1348 = vmatpush2.msra.mxu0 0.0
        %1349 = vmatprep.subr.mxu0 0.0
        %1350 = vmatpush2.msra.mxu0 0.0
        %1351 = vmatprep.subr.mxu0 0.0
        %1352 = vmatpush2.msra.mxu0 0.0
        %1353 = vmatprep.subr.mxu0 0.0
        %1354 = vmatpush2.msra.mxu0 0.0
        %1355 = vmatprep.subr.mxu0 0.0
        %1356 = vmatpush2.msra.mxu0 0.0
        %1357 = vmatprep.subr.mxu0 0.0
        %1358 = vmatpush2.msra.mxu0 0.0
        %1359 = vmatprep.mubr.f32.mxu0 0.0
        %1360 = vmatmul.mubr.f32.gmra.mxu0 %v1290
        %v1361 = vpop.f32.mrf.mxu0
        %v1362 = vadd.f32 0.0, %v1361
        %v1363 = vpop.f32.mrf.mxu0
        %1364 = vmatprep.mubr.f32.mxu0 0.0
        %1365 = vmatmul.mubr.f32.gmra.mxu0 %v1293
        %v1366 = vpop.f32.mrf.mxu0
        %v1367 = vadd.f32 0.0, %v1366
        %v1368 = vpop.f32.mrf.mxu0
        %1369 = vdwg.mxu0
        %1370 = vrot.lane.b32.xlu0 %v923, 64
        %v1371 = vpop.permute.xlu0 %1370
        %1372 = vrot.lane.b32.xlu0 %v927, 64
        %v1373 = vpop.permute.xlu0 %1372
        %1374 = vrot.lane.b32.xlu0 %v925, 64
        %v1375 = vpop.permute.xlu0 %1374
        %1376 = vrot.lane.b32.xlu0 %v929, 64
        %v1377 = vpop.permute.xlu0 %1376
        %v1378 = vsel %vm972, %v1371, 0
        %v1380 = vsel %vm972, %v1373, 0
        %v1382 = vsel %vm972, %v1375, 0
        %v1384 = vsel %vm972, %v1377, 0
        %1386 = vmatprep.subr.mxu0 0.0
        %1387 = vmatpush1.xpose.msra.mxu0 0.0
        %1388 = vmatprep.subr.mxu0 0.0
        %1389 = vmatpush1.xpose.msra.mxu0 0.0
        %1390 = vmatprep.subr.mxu0 0.0
        %1391 = vmatpush1.xpose.msra.mxu0 0.0
        %1392 = vmatprep.subr.mxu0 0.0
        %1393 = vmatpush1.xpose.msra.mxu0 0.0
        %1394 = vmatprep.subr.mxu0 0.0
        %1395 = vmatpush1.xpose.msra.mxu0 0.0
        %1396 = vmatprep.subr.mxu0 0.0
        %1397 = vmatpush1.xpose.msra.mxu0 0.0
        %1398 = vmatprep.subr.mxu0 0.0
        %1399 = vmatpush1.xpose.msra.mxu0 0.0
        %1400 = vmatprep.subr.mxu0 0.0
        %1401 = vmatpush1.xpose.msra.mxu0 0.0
        %1402 = vmatprep.subr.mxu0 0.0
        %1403 = vmatpush1.xpose.msra.mxu0 0.0
        %1404 = vmatprep.subr.mxu0 0.0
        %1405 = vmatpush1.xpose.msra.mxu0 0.0
        %1406 = vmatprep.subr.mxu0 0.0
        %1407 = vmatpush1.xpose.msra.mxu0 0.0
        %1408 = vmatprep.subr.mxu0 0.0
        %1409 = vmatpush1.xpose.msra.mxu0 0.0
        %1410 = vmatprep.subr.mxu0 0.0
        %1411 = vmatpush1.xpose.msra.mxu0 0.0
        %1412 = vmatprep.subr.mxu0 0.0
        %1413 = vmatpush1.xpose.msra.mxu0 0.0
        %1414 = vmatprep.subr.mxu0 0.0
        %1415 = vmatpush1.xpose.msra.mxu0 %v1384
        %1416 = vmatprep.subr.mxu0 0.0
        %1417 = vmatpush1.xpose.msra.mxu0 %v1382
        %1418 = vmatprep.subr.mxu0 0.0
        %1419 = vmatpush2.xpose.msra.mxu0 0.0
        %1420 = vmatprep.subr.mxu0 0.0
        %1421 = vmatpush2.xpose.msra.mxu0 0.0
        %1422 = vmatprep.subr.mxu0 0.0
        %1423 = vmatpush2.xpose.msra.mxu0 0.0
        %1424 = vmatprep.subr.mxu0 0.0
        %1425 = vmatpush2.xpose.msra.mxu0 0.0
        %1426 = vmatprep.subr.mxu0 0.0
        %1427 = vmatpush2.xpose.msra.mxu0 0.0
        %1428 = vmatprep.subr.mxu0 0.0
        %1429 = vmatpush2.xpose.msra.mxu0 0.0
        %1430 = vmatprep.subr.mxu0 0.0
        %1431 = vmatpush2.xpose.msra.mxu0 0.0
        %1432 = vmatprep.subr.mxu0 0.0
        %1433 = vmatpush2.xpose.msra.mxu0 0.0
        %1434 = vmatprep.subr.mxu0 0.0
        %1435 = vmatpush2.xpose.msra.mxu0 0.0
        %1436 = vmatprep.subr.mxu0 0.0
        %1437 = vmatpush2.xpose.msra.mxu0 0.0
        %1438 = vmatprep.subr.mxu0 0.0
        %1439 = vmatpush2.xpose.msra.mxu0 0.0
        %1440 = vmatprep.subr.mxu0 0.0
        %1441 = vmatpush2.xpose.msra.mxu0 0.0
        %1442 = vmatprep.subr.mxu0 0.0
        %1443 = vmatpush2.xpose.msra.mxu0 0.0
        %1444 = vmatprep.subr.mxu0 0.0
        %1445 = vmatpush2.xpose.msra.mxu0 0.0
        %1446 = vmatprep.subr.mxu0 0.0
        %1447 = vmatpush2.xpose.msra.mxu0 0.0
        %1448 = vmatprep.subr.mxu0 0.0
        %1449 = vmatpush2.xpose.msra.mxu0 0.0
        %1450 = vmatprep.mubr.f32.mxu0 0.0
        %1451 = vmatmul.mubr.f32.gmra.mxu0 %v1378
        %v1452 = vpop.f32.mrf.mxu0
        %v1453 = vadd.f32 0.0, %v1452
        %v1454 = vpop.f32.mrf.mxu0
        %1455 = vmatprep.mubr.f32.mxu0 0.0
        %1456 = vmatmul.mubr.f32.gmra.mxu0 %v1380
        %v1457 = vpop.f32.mrf.mxu0
        %v1458 = vadd.f32 0.0, %v1457
        %v1459 = vpop.f32.mrf.mxu0
        %1460 = vdwg.mxu0
        %v1461 = vmul.f32 %v1453, 0.17677669
        %v1462 = vmul.f32 %v1458, 0.17677669
        %v1463 = vsel %vm1062, %v1461, -inf
        %1464 = vmax.xlane.f32.xlu0 %v1463
        %v1465 = vpop.xlane.xlu0 %1464
        %v1466 = vsel %vm1062, %v1462, -inf
        %1467 = vmax.xlane.f32.xlu0 %v1466
        %v1468 = vpop.xlane.xlu0 %1467
        %v1469 = vsub.f32 %v1461, %v1465
        %v1470 = vsub.f32 %v1462, %v1468
        %v1471 = vmul.f32 %v1469, 1.442695
        %v1472 = vpow.pop %v1471
        %v1473 = vmul.f32 %v1470, 1.442695
        %v1474 = vpow.pop %v1473
        %v1475 = vsel %vm1062, %v1472, 0.0
        %1476 = vadd.xlane.f32.xlu0 %v1475
        %v1477 = vpop.xlane.xlu0 %1476
        %v1478 = vsel %vm1062, %v1474, 0.0
        %1479 = vadd.xlane.f32.xlu0 %v1478
        %v1480 = vpop.xlane.xlu0 %1479
        %v1481 = vrcp.pop %v1477
        %v1482 = vrcp.pop %v1480
        %v1483 = vmul.f32 %v1472, %v1481
        %v1484 = vmul.f32 %v1474, %v1482
        %1485 = vrot.lane.b32.xlu0 %v966, 64
        %v1486 = vpop.permute.xlu0 %1485
        %1487 = vrot.lane.b32.xlu0 %v969, 64
        %v1488 = vpop.permute.xlu0 %1487
        %v1492 = vsel %vm1062, %v1483, 0
        %v1495 = vsel %vm1062, %v1484, 0
        %1497 = vmatprep.subr.mxu0 0.0
        %1498 = vmatpush1.msra.mxu0 0.0
        %1499 = vmatprep.subr.mxu0 0.0
        %1500 = vmatpush1.msra.mxu0 0.0
        %1501 = vmatprep.subr.mxu0 0.0
        %1502 = vmatpush1.msra.mxu0 0.0
        %1503 = vmatprep.subr.mxu0 0.0
        %1504 = vmatpush1.msra.mxu0 0.0
        %1505 = vmatprep.subr.mxu0 0.0
        %1506 = vmatpush1.msra.mxu0 0.0
        %1507 = vmatprep.subr.mxu0 0.0
        %1508 = vmatpush1.msra.mxu0 0.0
        %1509 = vmatprep.subr.mxu0 0.0
        %1510 = vmatpush1.msra.mxu0 0.0
        %1511 = vmatprep.subr.mxu0 0.0
        %1512 = vmatpush1.msra.mxu0 0.0
        %1513 = vmatprep.subr.mxu0 0.0
        %1514 = vmatpush1.msra.mxu0 0.0
        %1515 = vmatprep.subr.mxu0 0.0
        %1516 = vmatpush1.msra.mxu0 0.0
        %1517 = vmatprep.subr.mxu0 0.0
        %1518 = vmatpush1.msra.mxu0 0.0
        %1519 = vmatprep.subr.mxu0 0.0
        %1520 = vmatpush1.msra.mxu0 0.0
        %1521 = vmatprep.subr.mxu0 0.0
        %1522 = vmatpush1.msra.mxu0 0.0
        %1523 = vmatprep.subr.mxu0 0.0
        %1524 = vmatpush1.msra.mxu0 0.0
        %1525 = vmatprep.subr.mxu0 0.0
        %1526 = vmatpush1.msra.mxu0 %v1488
        %1527 = vmatprep.subr.mxu0 0.0
        %1528 = vmatpush1.msra.mxu0 %v1486
        %1529 = vmatprep.subr.mxu0 0.0
        %1530 = vmatpush2.msra.mxu0 0.0
        %1531 = vmatprep.subr.mxu0 0.0
        %1532 = vmatpush2.msra.mxu0 0.0
        %1533 = vmatprep.subr.mxu0 0.0
        %1534 = vmatpush2.msra.mxu0 0.0
        %1535 = vmatprep.subr.mxu0 0.0
        %1536 = vmatpush2.msra.mxu0 0.0
        %1537 = vmatprep.subr.mxu0 0.0
        %1538 = vmatpush2.msra.mxu0 0.0
        %1539 = vmatprep.subr.mxu0 0.0
        %1540 = vmatpush2.msra.mxu0 0.0
        %1541 = vmatprep.subr.mxu0 0.0
        %1542 = vmatpush2.msra.mxu0 0.0
        %1543 = vmatprep.subr.mxu0 0.0
        %1544 = vmatpush2.msra.mxu0 0.0
        %1545 = vmatprep.subr.mxu0 0.0
        %1546 = vmatpush2.msra.mxu0 0.0
        %1547 = vmatprep.subr.mxu0 0.0
        %1548 = vmatpush2.msra.mxu0 0.0
        %1549 = vmatprep.subr.mxu0 0.0
        %1550 = vmatpush2.msra.mxu0 0.0
        %1551 = vmatprep.subr.mxu0 0.0
        %1552 = vmatpush2.msra.mxu0 0.0
        %1553 = vmatprep.subr.mxu0 0.0
        %1554 = vmatpush2.msra.mxu0 0.0
        %1555 = vmatprep.subr.mxu0 0.0
        %1556 = vmatpush2.msra.mxu0 0.0
        %1557 = vmatprep.subr.mxu0 0.0
        %1558 = vmatpush2.msra.mxu0 0.0
        %1559 = vmatprep.subr.mxu0 0.0
        %1560 = vmatpush2.msra.mxu0 0.0
        %1561 = vmatprep.mubr.f32.mxu0 0.0
        %1562 = vmatmul.mubr.f32.gmra.mxu0 %v1492
        %v1563 = vpop.f32.mrf.mxu0
        %v1564 = vadd.f32 0.0, %v1563
        %v1565 = vpop.f32.mrf.mxu0
        %1566 = vmatprep.mubr.f32.mxu0 0.0
        %1567 = vmatmul.mubr.f32.gmra.mxu0 %v1495
        %v1568 = vpop.f32.mrf.mxu0
        %v1569 = vadd.f32 0.0, %v1568
        %v1570 = vpop.f32.mrf.mxu0
        %1571 = vdwg.mxu0
        %1572 = vrot.lane.b32.xlu0 %v923, 32
        %v1573 = vpop.permute.xlu0 %1572
        %1574 = vrot.lane.b32.xlu0 %v927, 32
        %v1575 = vpop.permute.xlu0 %1574
        %1576 = vrot.lane.b32.xlu0 %v925, 32
        %v1577 = vpop.permute.xlu0 %1576
        %1578 = vrot.lane.b32.xlu0 %v929, 32
        %v1579 = vpop.permute.xlu0 %1578
        %v1580 = vsel %vm972, %v1573, 0
        %v1582 = vsel %vm972, %v1575, 0
        %v1584 = vsel %vm972, %v1577, 0
        %v1586 = vsel %vm972, %v1579, 0
        %1588 = vmatprep.subr.mxu0 0.0
        %1589 = vmatpush1.xpose.msra.mxu0 0.0
        %1590 = vmatprep.subr.mxu0 0.0
        %1591 = vmatpush1.xpose.msra.mxu0 0.0
        %1592 = vmatprep.subr.mxu0 0.0
        %1593 = vmatpush1.xpose.msra.mxu0 0.0
        %1594 = vmatprep.subr.mxu0 0.0
        %1595 = vmatpush1.xpose.msra.mxu0 0.0
        %1596 = vmatprep.subr.mxu0 0.0
        %1597 = vmatpush1.xpose.msra.mxu0 0.0
        %1598 = vmatprep.subr.mxu0 0.0
        %1599 = vmatpush1.xpose.msra.mxu0 0.0
        %1600 = vmatprep.subr.mxu0 0.0
        %1601 = vmatpush1.xpose.msra.mxu0 0.0
        %1602 = vmatprep.subr.mxu0 0.0
        %1603 = vmatpush1.xpose.msra.mxu0 0.0
        %1604 = vmatprep.subr.mxu0 0.0
        %1605 = vmatpush1.xpose.msra.mxu0 0.0
        %1606 = vmatprep.subr.mxu0 0.0
        %1607 = vmatpush1.xpose.msra.mxu0 0.0
        %1608 = vmatprep.subr.mxu0 0.0
        %1609 = vmatpush1.xpose.msra.mxu0 0.0
        %1610 = vmatprep.subr.mxu0 0.0
        %1611 = vmatpush1.xpose.msra.mxu0 0.0
        %1612 = vmatprep.subr.mxu0 0.0
        %1613 = vmatpush1.xpose.msra.mxu0 0.0
        %1614 = vmatprep.subr.mxu0 0.0
        %1615 = vmatpush1.xpose.msra.mxu0 0.0
        %1616 = vmatprep.subr.mxu0 0.0
        %1617 = vmatpush1.xpose.msra.mxu0 %v1586
        %1618 = vmatprep.subr.mxu0 0.0
        %1619 = vmatpush1.xpose.msra.mxu0 %v1584
        %1620 = vmatprep.subr.mxu0 0.0
        %1621 = vmatpush2.xpose.msra.mxu0 0.0
        %1622 = vmatprep.subr.mxu0 0.0
        %1623 = vmatpush2.xpose.msra.mxu0 0.0
        %1624 = vmatprep.subr.mxu0 0.0
        %1625 = vmatpush2.xpose.msra.mxu0 0.0
        %1626 = vmatprep.subr.mxu0 0.0
        %1627 = vmatpush2.xpose.msra.mxu0 0.0
        %1628 = vmatprep.subr.mxu0 0.0
        %1629 = vmatpush2.xpose.msra.mxu0 0.0
        %1630 = vmatprep.subr.mxu0 0.0
        %1631 = vmatpush2.xpose.msra.mxu0 0.0
        %1632 = vmatprep.subr.mxu0 0.0
        %1633 = vmatpush2.xpose.msra.mxu0 0.0
        %1634 = vmatprep.subr.mxu0 0.0
        %1635 = vmatpush2.xpose.msra.mxu0 0.0
        %1636 = vmatprep.subr.mxu0 0.0
        %1637 = vmatpush2.xpose.msra.mxu0 0.0
        %1638 = vmatprep.subr.mxu0 0.0
        %1639 = vmatpush2.xpose.msra.mxu0 0.0
        %1640 = vmatprep.subr.mxu0 0.0
        %1641 = vmatpush2.xpose.msra.mxu0 0.0
        %1642 = vmatprep.subr.mxu0 0.0
        %1643 = vmatpush2.xpose.msra.mxu0 0.0
        %1644 = vmatprep.subr.mxu0 0.0
        %1645 = vmatpush2.xpose.msra.mxu0 0.0
        %1646 = vmatprep.subr.mxu0 0.0
        %1647 = vmatpush2.xpose.msra.mxu0 0.0
        %1648 = vmatprep.subr.mxu0 0.0
        %1649 = vmatpush2.xpose.msra.mxu0 0.0
        %1650 = vmatprep.subr.mxu0 0.0
        %1651 = vmatpush2.xpose.msra.mxu0 0.0
        %1652 = vmatprep.mubr.f32.mxu0 0.0
        %1653 = vmatmul.mubr.f32.gmra.mxu0 %v1580
        %v1654 = vpop.f32.mrf.mxu0
        %v1655 = vadd.f32 0.0, %v1654
        %v1656 = vpop.f32.mrf.mxu0
        %1657 = vmatprep.mubr.f32.mxu0 0.0
        %1658 = vmatmul.mubr.f32.gmra.mxu0 %v1582
        %v1659 = vpop.f32.mrf.mxu0
        %v1660 = vadd.f32 0.0, %v1659
        %v1661 = vpop.f32.mrf.mxu0
        %1662 = vdwg.mxu0
        %v1663 = vmul.f32 %v1655, 0.17677669
        %v1664 = vmul.f32 %v1660, 0.17677669
        %v1665 = vsel %vm1062, %v1663, -inf
        %1666 = vmax.xlane.f32.xlu0 %v1665
        %v1667 = vpop.xlane.xlu0 %1666
        %v1668 = vsel %vm1062, %v1664, -inf
        %1669 = vmax.xlane.f32.xlu0 %v1668
        %v1670 = vpop.xlane.xlu0 %1669
        %v1671 = vsub.f32 %v1663, %v1667
        %v1672 = vsub.f32 %v1664, %v1670
        %v1673 = vmul.f32 %v1671, 1.442695
        %v1674 = vpow.pop %v1673
        %v1675 = vmul.f32 %v1672, 1.442695
        %v1676 = vpow.pop %v1675
        %v1677 = vsel %vm1062, %v1674, 0.0
        %1678 = vadd.xlane.f32.xlu0 %v1677
        %v1679 = vpop.xlane.xlu0 %1678
        %v1680 = vsel %vm1062, %v1676, 0.0
        %1681 = vadd.xlane.f32.xlu0 %v1680
        %v1682 = vpop.xlane.xlu0 %1681
        %v1683 = vrcp.pop %v1679
        %v1684 = vrcp.pop %v1682
        %v1685 = vmul.f32 %v1674, %v1683
        %v1686 = vmul.f32 %v1676, %v1684
        %1687 = vrot.lane.b32.xlu0 %v966, 32
        %v1688 = vpop.permute.xlu0 %1687
        %1689 = vrot.lane.b32.xlu0 %v969, 32
        %v1690 = vpop.permute.xlu0 %1689
        %v1694 = vsel %vm1062, %v1685, 0
        %v1697 = vsel %vm1062, %v1686, 0
        %1699 = vmatprep.subr.mxu0 0.0
        %1700 = vmatpush1.msra.mxu0 0.0
        %1701 = vmatprep.subr.mxu0 0.0
        %1702 = vmatpush1.msra.mxu0 0.0
        %1703 = vmatprep.subr.mxu0 0.0
        %1704 = vmatpush1.msra.mxu0 0.0
        %1705 = vmatprep.subr.mxu0 0.0
        %1706 = vmatpush1.msra.mxu0 0.0
        %1707 = vmatprep.subr.mxu0 0.0
        %1708 = vmatpush1.msra.mxu0 0.0
        %1709 = vmatprep.subr.mxu0 0.0
        %1710 = vmatpush1.msra.mxu0 0.0
        %1711 = vmatprep.subr.mxu0 0.0
        %1712 = vmatpush1.msra.mxu0 0.0
        %1713 = vmatprep.subr.mxu0 0.0
        %1714 = vmatpush1.msra.mxu0 0.0
        %1715 = vmatprep.subr.mxu0 0.0
        %1716 = vmatpush1.msra.mxu0 0.0
        %1717 = vmatprep.subr.mxu0 0.0
        %1718 = vmatpush1.msra.mxu0 0.0
        %1719 = vmatprep.subr.mxu0 0.0
        %1720 = vmatpush1.msra.mxu0 0.0
        %1721 = vmatprep.subr.mxu0 0.0
        %1722 = vmatpush1.msra.mxu0 0.0
        %1723 = vmatprep.subr.mxu0 0.0
        %1724 = vmatpush1.msra.mxu0 0.0
        %1725 = vmatprep.subr.mxu0 0.0
        %1726 = vmatpush1.msra.mxu0 0.0
        %1727 = vmatprep.subr.mxu0 0.0
        %1728 = vmatpush1.msra.mxu0 %v1690
        %1729 = vmatprep.subr.mxu0 0.0
        %1730 = vmatpush1.msra.mxu0 %v1688
        %1731 = vmatprep.subr.mxu0 0.0
        %1732 = vmatpush2.msra.mxu0 0.0
        %1733 = vmatprep.subr.mxu0 0.0
        %1734 = vmatpush2.msra.mxu0 0.0
        %1735 = vmatprep.subr.mxu0 0.0
        %1736 = vmatpush2.msra.mxu0 0.0
        %1737 = vmatprep.subr.mxu0 0.0
        %1738 = vmatpush2.msra.mxu0 0.0
        %1739 = vmatprep.subr.mxu0 0.0
        %1740 = vmatpush2.msra.mxu0 0.0
        %1741 = vmatprep.subr.mxu0 0.0
        %1742 = vmatpush2.msra.mxu0 0.0
        %1743 = vmatprep.subr.mxu0 0.0
        %1744 = vmatpush2.msra.mxu0 0.0
        %1745 = vmatprep.subr.mxu0 0.0
        %1746 = vmatpush2.msra.mxu0 0.0
        %1747 = vmatprep.subr.mxu0 0.0
        %1748 = vmatpush2.msra.mxu0 0.0
        %1749 = vmatprep.subr.mxu0 0.0
        %1750 = vmatpush2.msra.mxu0 0.0
        %1751 = vmatprep.subr.mxu0 0.0
        %1752 = vmatpush2.msra.mxu0 0.0
        %1753 = vmatprep.subr.mxu0 0.0
        %1754 = vmatpush2.msra.mxu0 0.0
        %1755 = vmatprep.subr.mxu0 0.0
        %1756 = vmatpush2.msra.mxu0 0.0
        %1757 = vmatprep.subr.mxu0 0.0
        %1758 = vmatpush2.msra.mxu0 0.0
        %1759 = vmatprep.subr.mxu0 0.0
        %1760 = vmatpush2.msra.mxu0 0.0
        %1761 = vmatprep.subr.mxu0 0.0
        %1762 = vmatpush2.msra.mxu0 0.0
        %1763 = vmatprep.mubr.f32.mxu0 0.0
        %1764 = vmatmul.mubr.f32.gmra.mxu0 %v1694
        %v1765 = vpop.f32.mrf.mxu0
        %v1766 = vadd.f32 0.0, %v1765
        %v1767 = vpop.f32.mrf.mxu0
        %1768 = vmatprep.mubr.f32.mxu0 0.0
        %1769 = vmatmul.mubr.f32.gmra.mxu0 %v1697
        %v1770 = vpop.f32.mrf.mxu0
        %v1771 = vadd.f32 0.0, %v1770
        %v1772 = vpop.f32.mrf.mxu0
        %1773 = vdwg.mxu0
        %1776 = vrot.lane.b32.xlu0 %v1362, 32
        %v1777 = vpop.permute.xlu0 %1776
        %1778 = vrot.lane.b32.xlu0 %v1367, 32
        %v1779 = vpop.permute.xlu0 %1778
        %1784 = vrot.lane.b32.xlu0 %v1564, 64
        %v1785 = vpop.permute.xlu0 %1784
        %1786 = vrot.lane.b32.xlu0 %v1569, 64
        %v1787 = vpop.permute.xlu0 %1786
        %1792 = vrot.lane.b32.xlu0 %v1766, 96
        %v1793 = vpop.permute.xlu0 %1792
        %1794 = vrot.lane.b32.xlu0 %v1771, 96
        %v1795 = vpop.permute.xlu0 %1794
        %v1798 = vsel %vm972, %v1158, %v1777
        %v1799 = vsel %vm972, %v1163, %v1779
        %vm1800 = vcmask 523264
        %v1801 = vsel %vm1800, %v1798, %v1785
        %v1802 = vsel %vm1800, %v1799, %v1787
        %vm1803 = vcmask 785408
        %v1804 = vsel %vm1803, %v1801, %v1793
        %v1805 = vsel %vm1803, %v1802, %v1795
        %v1806 = vpack.c.bf16 %v1805, %v1804
        %v1807 = vld [vmem:[#allocation7] sm:$0xf]
        %v1808 = vld [vmem:[#allocation7 + $0x4] sm:$0xf]
        %v1809 = vld [vmem:[#allocation7 + $0x8] sm:$0xf]
        %v1810 = vld [vmem:[#allocation7 + $0xc] sm:$0xf]
        %v1811 = vld [vmem:[#allocation7 + $0x10] sm:$0xf]
        %v1812 = vld [vmem:[#allocation7 + $0x14] sm:$0xf]
        %v1813 = vld [vmem:[#allocation7 + $0x18] sm:$0xf]
        %v1814 = vld [vmem:[#allocation7 + $0x1c] sm:$0xf]
        %v1815 = vld [vmem:[#allocation7 + $0x20] sm:$0xf]
        %v1816 = vld [vmem:[#allocation7 + $0x24] sm:$0xf]
        %v1817 = vld [vmem:[#allocation7 + $0x28] sm:$0xf]
        %v1818 = vld [vmem:[#allocation7 + $0x2c] sm:$0xf]
        %v1819 = vld [vmem:[#allocation7 + $0x30] sm:$0xf]
        %v1820 = vld [vmem:[#allocation7 + $0x34] sm:$0xf]
        %v1821 = vld [vmem:[#allocation7 + $0x38] sm:$0xf]
        %v1822 = vld [vmem:[#allocation7 + $0x3c] sm:$0xf]
        %v1823 = vld [vmem:[%s5] sm:$0x1]
        %v1825 = vlaneseq
        %v1826 = vshrl.u32 %v1825, 7
        %v1827 = vsub.s32 0, %v1826
        %v1828 = vrot.slane %v1823, %v1827
        %v1846 = vunpack.c.l.b16 %v1807
        %v1847 = vunpack.c.l.b16 %v1808
        %v1848 = vunpack.c.l.b16 %v1809
        %v1849 = vunpack.c.l.b16 %v1810
        %v1850 = vunpack.c.l.b16 %v1811
        %v1851 = vunpack.c.l.b16 %v1812
        %v1852 = vunpack.c.l.b16 %v1813
        %v1853 = vunpack.c.l.b16 %v1814
        %v1854 = vunpack.c.l.b16 %v1815
        %v1855 = vunpack.c.l.b16 %v1816
        %v1856 = vunpack.c.l.b16 %v1817
        %v1857 = vunpack.c.l.b16 %v1818
        %v1858 = vunpack.c.l.b16 %v1819
        %v1859 = vunpack.c.l.b16 %v1820
        %v1860 = vunpack.c.l.b16 %v1821
        %v1861 = vunpack.c.l.b16 %v1822
        %v1862 = vpack.c.b16 %v1847, %v1846
        %v1863 = vpack.c.b16 %v1849, %v1848
        %v1864 = vpack.c.b16 %v1851, %v1850
        %v1865 = vpack.c.b16 %v1853, %v1852
        %v1866 = vpack.c.b16 %v1855, %v1854
        %v1867 = vpack.c.b16 %v1857, %v1856
        %v1868 = vpack.c.b16 %v1859, %v1858
        %v1869 = vpack.c.b16 %v1861, %v1860
        %1878 = vmatprep.subr.bf16.mxu0 0
        %1879 = vmatpush1.bf16.msra.mxu0 %v1869
        %1880 = vmatprep.subr.bf16.mxu0 0
        %1881 = vmatpush1.bf16.msra.mxu0 %v1868
        %1882 = vmatprep.subr.bf16.mxu0 0
        %1883 = vmatpush1.bf16.msra.mxu0 %v1867
        %1884 = vmatprep.subr.bf16.mxu0 0
        %1885 = vmatpush1.bf16.msra.mxu0 %v1866
        %1886 = vmatprep.subr.bf16.mxu0 0
        %1887 = vmatpush1.bf16.msra.mxu0 %v1865
        %1888 = vmatprep.subr.bf16.mxu0 0
        %1889 = vmatpush1.bf16.msra.mxu0 %v1864
        %1890 = vmatprep.subr.bf16.mxu0 0
        %1891 = vmatpush1.bf16.msra.mxu0 %v1863
        %1892 = vmatprep.subr.bf16.mxu0 0
        %1893 = vmatpush1.bf16.msra.mxu0 %v1862
        %1894 = vmatprep.subr.bf16.mxu0 0
        %1895 = vmatpush2.bf16.msra.mxu0 0
        %1896 = vmatprep.subr.bf16.mxu0 0
        %1897 = vmatpush2.bf16.msra.mxu0 0
        %1898 = vmatprep.subr.bf16.mxu0 0
        %1899 = vmatpush2.bf16.msra.mxu0 0
        %1900 = vmatprep.subr.bf16.mxu0 0
        %1901 = vmatpush2.bf16.msra.mxu0 0
        %1902 = vmatprep.subr.bf16.mxu0 0
        %1903 = vmatpush2.bf16.msra.mxu0 0
        %1904 = vmatprep.subr.bf16.mxu0 0
        %1905 = vmatpush2.bf16.msra.mxu0 0
        %1906 = vmatprep.subr.bf16.mxu0 0
        %1907 = vmatpush2.bf16.msra.mxu0 0
        %1908 = vmatprep.subr.bf16.mxu0 0
        %1909 = vmatpush2.bf16.msra.mxu0 0
        %1910 = vmatprep.mubr.bf16.mxu0 0
        %1911 = vmatmul.mubr.bf16.gmra.mxu0 %v1806
        %v1912 = vpop.f32.mrf.mxu0
        %v1913 = vadd.f32 %v1828, %v1912
        %v1914 = vpop.f32.mrf.mxu0
        %v1915 = vpop.f32.mrf.mxu0
        %v1916 = vadd.f32 %v1828, %v1915
        %v1917 = vpop.f32.mrf.mxu0
        %1918 = vdwg.mxu0
        %v1919 = vadd.f32 %v706, %v1913
        %v1920 = vadd.f32 %v707, %v1916
        %1921 = vadd.xlane.f32.xlu0 %v1919
        %v1922 = vpop.xlane.xlu0 %1921
        %1923 = vadd.xlane.f32.xlu0 %v1920
        %v1924 = vpop.xlane.xlu0 %1923
        %v1925 = vrcp.pop 128.0
        %v1926 = vmul.f32 %v1922, %v1925
        %v1927 = vmul.f32 %v1924, %v1925
        %v1928 = vsub.f32 %v1919, %v1926
        %v1929 = vsub.f32 %v1920, %v1927
        %v1930 = vmul.f32 %v1928, %v1928
        %v1931 = vmul.f32 %v1929, %v1929
        %1932 = vadd.xlane.f32.xlu0 %v1930
        %v1933 = vpop.xlane.xlu0 %1932
        %1934 = vadd.xlane.f32.xlu0 %v1931
        %v1935 = vpop.xlane.xlu0 %1934
        %v1936 = vmul.f32 %v1933, %v1925
        %v1937 = vmul.f32 %v1935, %v1925
        %v1938 = vadd.f32 %v1936, 1e-05
        %v1939 = vadd.f32 %v1937, 1e-05
        %v1940 = vrsqrt.pop %v1938
        %v1941 = vrsqrt.pop %v1939
        %v1942 = vmul.f32 %v1928, %v1940
        %v1943 = vmul.f32 %v1929, %v1941
        %v1944 = vlaneseq
        %v1945 = vshrl.u32 %v1944, 7
        %v1946 = vsub.s32 0, %v1945
        %v1947 = vrot.slane %v708, %v1946
        %v1948 = vmul.f32 %v1942, %v1947
        %v1949 = vmul.f32 %v1943, %v1947
        %v1950 = vlaneseq
        %v1951 = vshrl.u32 %v1950, 7
        %v1952 = vsub.s32 0, %v1951
        %v1953 = vrot.slane %v709, %v1952
        %v1954 = vadd.f32 %v1948, %v1953
        %v1955 = vadd.f32 %v1949, %v1953
        %v1956 = vpack.c.bf16 %v705, %v705
        %v1957 = vld [vmem:[#allocation8] sm:$0xf]
        %v1958 = vld [vmem:[#allocation8 + $0x4] sm:$0xf]
        %v1959 = vld [vmem:[#allocation8 + $0x8] sm:$0xf]
        %v1960 = vld [vmem:[#allocation8 + $0xc] sm:$0xf]
        %v1961 = vld [vmem:[#allocation8 + $0x10] sm:$0xf]
        %v1962 = vld [vmem:[#allocation8 + $0x14] sm:$0xf]
        %v1963 = vld [vmem:[#allocation8 + $0x18] sm:$0xf]
        %v1964 = vld [vmem:[#allocation8 + $0x1c] sm:$0xf]
        %v1965 = vld [vmem:[#allocation8 + $0x20] sm:$0xf]
        %v1966 = vld [vmem:[#allocation8 + $0x24] sm:$0xf]
        %v1967 = vld [vmem:[#allocation8 + $0x28] sm:$0xf]
        %v1968 = vld [vmem:[#allocation8 + $0x2c] sm:$0xf]
        %v1969 = vld [vmem:[#allocation8 + $0x30] sm:$0xf]
        %v1970 = vld [vmem:[#allocation8 + $0x34] sm:$0xf]
        %v1971 = vld [vmem:[#allocation8 + $0x38] sm:$0xf]
        %v1972 = vld [vmem:[#allocation8 + $0x3c] sm:$0xf]
        %v1973 = vld [vmem:[#allocation10] sm:$0x1]
        %v1990 = vunpack.c.l.b16 %v1957
        %v1991 = vunpack.c.l.b16 %v1958
        %v1992 = vunpack.c.l.b16 %v1959
        %v1993 = vunpack.c.l.b16 %v1960
        %v1994 = vunpack.c.l.b16 %v1961
        %v1995 = vunpack.c.l.b16 %v1962
        %v1996 = vunpack.c.l.b16 %v1963
        %v1997 = vunpack.c.l.b16 %v1964
        %v1998 = vunpack.c.l.b16 %v1965
        %v1999 = vunpack.c.l.b16 %v1966
        %v2000 = vunpack.c.l.b16 %v1967
        %v2001 = vunpack.c.l.b16 %v1968
        %v2002 = vunpack.c.l.b16 %v1969
        %v2003 = vunpack.c.l.b16 %v1970
        %v2004 = vunpack.c.l.b16 %v1971
        %v2005 = vunpack.c.l.b16 %v1972
        %v2006 = vpack.c.b16 %v1991, %v1990
        %v2007 = vpack.c.b16 %v1993, %v1992
        %v2008 = vpack.c.b16 %v1995, %v1994
        %v2009 = vpack.c.b16 %v1997, %v1996
        %v2010 = vpack.c.b16 %v1999, %v1998
        %v2011 = vpack.c.b16 %v2001, %v2000
        %v2012 = vpack.c.b16 %v2003, %v2002
        %v2013 = vpack.c.b16 %v2005, %v2004
        %2022 = vmatprep.subr.bf16.mxu0 0
        %2023 = vmatpush1.bf16.msra.mxu0 %v2013
        %2024 = vmatprep.subr.bf16.mxu0 0
        %2025 = vmatpush1.bf16.msra.mxu0 %v2012
        %2026 = vmatprep.subr.bf16.mxu0 0
        %2027 = vmatpush1.bf16.msra.mxu0 %v2011
        %2028 = vmatprep.subr.bf16.mxu0 0
        %2029 = vmatpush1.bf16.msra.mxu0 %v2010
        %2030 = vmatprep.subr.bf16.mxu0 0
        %2031 = vmatpush1.bf16.msra.mxu0 %v2009
        %2032 = vmatprep.subr.bf16.mxu0 0
        %2033 = vmatpush1.bf16.msra.mxu0 %v2008
        %2034 = vmatprep.subr.bf16.mxu0 0
        %2035 = vmatpush1.bf16.msra.mxu0 %v2007
        %2036 = vmatprep.subr.bf16.mxu0 0
        %2037 = vmatpush1.bf16.msra.mxu0 %v2006
        %2038 = vmatprep.subr.bf16.mxu0 0
        %2039 = vmatpush2.bf16.msra.mxu0 0
        %2040 = vmatprep.subr.bf16.mxu0 0
        %2041 = vmatpush2.bf16.msra.mxu0 0
        %2042 = vmatprep.subr.bf16.mxu0 0
        %2043 = vmatpush2.bf16.msra.mxu0 0
        %2044 = vmatprep.subr.bf16.mxu0 0
        %2045 = vmatpush2.bf16.msra.mxu0 0
        %2046 = vmatprep.subr.bf16.mxu0 0
        %2047 = vmatpush2.bf16.msra.mxu0 0
        %2048 = vmatprep.subr.bf16.mxu0 0
        %2049 = vmatpush2.bf16.msra.mxu0 0
        %2050 = vmatprep.subr.bf16.mxu0 0
        %2051 = vmatpush2.bf16.msra.mxu0 0
        %2052 = vmatprep.subr.bf16.mxu0 0
        %2053 = vmatpush2.bf16.msra.mxu0 0
        %2054 = vmatprep.mubr.bf16.mxu0 0
        %2055 = vmatmul.mubr.bf16.gmra.mxu0 %v1956
        %v2056 = vpop.f32.mrf.mxu0
        %v2057 = vadd.f32 %v1973, %v2056
        %v2058 = vpop.f32.mrf.mxu0
        %v2059 = vpop.f32.mrf.mxu0
        %v2060 = vpop.f32.mrf.mxu0
        %2061 = vdwg.mxu0
        %v2062 = vpack.c.bf16 %v2057, %v2057
        %v2063 = vld [vmem:[#allocation11] sm:$0xf]
        %v2064 = vld [vmem:[#allocation11 + $0x4] sm:$0xf]
        %v2065 = vld [vmem:[#allocation11 + $0x8] sm:$0xf]
        %v2066 = vld [vmem:[#allocation11 + $0xc] sm:$0xf]
        %v2067 = vld [vmem:[#allocation11 + $0x10] sm:$0xf]
        %v2068 = vld [vmem:[#allocation11 + $0x14] sm:$0xf]
        %v2069 = vld [vmem:[#allocation11 + $0x18] sm:$0xf]
        %v2070 = vld [vmem:[#allocation11 + $0x1c] sm:$0xf]
        %v2071 = vld [vmem:[#allocation11 + $0x20] sm:$0xf]
        %v2072 = vld [vmem:[#allocation11 + $0x24] sm:$0xf]
        %v2073 = vld [vmem:[#allocation11 + $0x28] sm:$0xf]
        %v2074 = vld [vmem:[#allocation11 + $0x2c] sm:$0xf]
        %v2075 = vld [vmem:[#allocation11 + $0x30] sm:$0xf]
        %v2076 = vld [vmem:[#allocation11 + $0x34] sm:$0xf]
        %v2077 = vld [vmem:[#allocation11 + $0x38] sm:$0xf]
        %v2078 = vld [vmem:[#allocation11 + $0x3c] sm:$0xf]
        %v2079 = vld [vmem:[%s9] sm:$0x1]
        %v2096 = vunpack.c.l.b16 %v2063
        %v2097 = vunpack.c.l.b16 %v2064
        %v2098 = vunpack.c.l.b16 %v2065
        %v2099 = vunpack.c.l.b16 %v2066
        %v2100 = vunpack.c.l.b16 %v2067
        %v2101 = vunpack.c.l.b16 %v2068
        %v2102 = vunpack.c.l.b16 %v2069
        %v2103 = vunpack.c.l.b16 %v2070
        %v2104 = vunpack.c.l.b16 %v2071
        %v2105 = vunpack.c.l.b16 %v2072
        %v2106 = vunpack.c.l.b16 %v2073
        %v2107 = vunpack.c.l.b16 %v2074
        %v2108 = vunpack.c.l.b16 %v2075
        %v2109 = vunpack.c.l.b16 %v2076
        %v2110 = vunpack.c.l.b16 %v2077
        %v2111 = vunpack.c.l.b16 %v2078
        %v2112 = vpack.c.b16 %v2097, %v2096
        %v2113 = vpack.c.b16 %v2099, %v2098
        %v2114 = vpack.c.b16 %v2101, %v2100
        %v2115 = vpack.c.b16 %v2103, %v2102
        %v2116 = vpack.c.b16 %v2105, %v2104
        %v2117 = vpack.c.b16 %v2107, %v2106
        %v2118 = vpack.c.b16 %v2109, %v2108
        %v2119 = vpack.c.b16 %v2111, %v2110
        %2128 = vmatprep.subr.bf16.mxu0 0
        %2129 = vmatpush1.bf16.msra.mxu0 %v2119
        %2130 = vmatprep.subr.bf16.mxu0 0
        %2131 = vmatpush1.bf16.msra.mxu0 %v2118
        %2132 = vmatprep.subr.bf16.mxu0 0
        %2133 = vmatpush1.bf16.msra.mxu0 %v2117
        %2134 = vmatprep.subr.bf16.mxu0 0
        %2135 = vmatpush1.bf16.msra.mxu0 %v2116
        %2136 = vmatprep.subr.bf16.mxu0 0
        %2137 = vmatpush1.bf16.msra.mxu0 %v2115
        %2138 = vmatprep.subr.bf16.mxu0 0
        %2139 = vmatpush1.bf16.msra.mxu0 %v2114
        %2140 = vmatprep.subr.bf16.mxu0 0
        %2141 = vmatpush1.bf16.msra.mxu0 %v2113
        %2142 = vmatprep.subr.bf16.mxu0 0
        %2143 = vmatpush1.bf16.msra.mxu0 %v2112
        %2144 = vmatprep.subr.bf16.mxu0 0
        %2145 = vmatpush2.bf16.msra.mxu0 0
        %2146 = vmatprep.subr.bf16.mxu0 0
        %2147 = vmatpush2.bf16.msra.mxu0 0
        %2148 = vmatprep.subr.bf16.mxu0 0
        %2149 = vmatpush2.bf16.msra.mxu0 0
        %2150 = vmatprep.subr.bf16.mxu0 0
        %2151 = vmatpush2.bf16.msra.mxu0 0
        %2152 = vmatprep.subr.bf16.mxu0 0
        %2153 = vmatpush2.bf16.msra.mxu0 0
        %2154 = vmatprep.subr.bf16.mxu0 0
        %2155 = vmatpush2.bf16.msra.mxu0 0
        %2156 = vmatprep.subr.bf16.mxu0 0
        %2157 = vmatpush2.bf16.msra.mxu0 0
        %2158 = vmatprep.subr.bf16.mxu0 0
        %2159 = vmatpush2.bf16.msra.mxu0 0
        %2160 = vmatprep.mubr.bf16.mxu0 0
        %2161 = vmatmul.mubr.bf16.gmra.mxu0 %v2062
        %v2162 = vpop.f32.mrf.mxu0
        %v2163 = vadd.f32 %v2079, %v2162
        %v2164 = vpop.f32.mrf.mxu0
        %v2165 = vpop.f32.mrf.mxu0
        %v2166 = vpop.f32.mrf.mxu0
        %2167 = vdwg.mxu0
        %v2168 = vlaneseq
        %v2169 = vshrl.u32 %v2168, 7
        %v2170 = vsub.s32 0, %v2169
        %v2171 = vrot.slane %v2163, %v2170
        %v2172 = vadd.f32 %v1954, %v2171
        %v2173 = vadd.f32 %v1955, %v2171
        %2174 = vadd.xlane.f32.xlu0 %v2172
        %v2175 = vpop.xlane.xlu0 %2174
        %2176 = vadd.xlane.f32.xlu0 %v2173
        %v2177 = vpop.xlane.xlu0 %2176
        %v2178 = vmul.f32 %v2175, %v1925
        %v2179 = vmul.f32 %v2177, %v1925
        %v2180 = vsub.f32 %v2172, %v2178
        %v2181 = vsub.f32 %v2173, %v2179
        %v2182 = vmul.f32 %v2180, %v2180
        %v2183 = vmul.f32 %v2181, %v2181
        %2184 = vadd.xlane.f32.xlu0 %v2182
        %v2185 = vpop.xlane.xlu0 %2184
        %2186 = vadd.xlane.f32.xlu0 %v2183
        %v2187 = vpop.xlane.xlu0 %2186
        %v2188 = vmul.f32 %v2185, %v1925
        %v2189 = vmul.f32 %v2187, %v1925
        %v2190 = vadd.f32 %v2188, 1e-05
        %v2191 = vadd.f32 %v2189, 1e-05
        %v2192 = vrsqrt.pop %v2190
        %v2193 = vrsqrt.pop %v2191
        %v2194 = vmul.f32 %v2180, %v2192
        %v2195 = vmul.f32 %v2181, %v2193
        %v2196 = vlaneseq
        %v2197 = vshrl.u32 %v2196, 7
        %v2198 = vsub.s32 1, %v2197
        %v2199 = vrot.slane %v708, %v2198
        %v2200 = vmul.f32 %v2194, %v2199
        %v2201 = vmul.f32 %v2195, %v2199
        %v2202 = vlaneseq
        %v2203 = vshrl.u32 %v2202, 7
        %v2204 = vsub.s32 1, %v2203
        %v2205 = vrot.slane %v709, %v2204
        %v2206 = vadd.f32 %v2200, %v2205
        %v2207 = vadd.f32 %v2201, %v2205
        %v2208 = vpack.c.bf16 %v2207, %v2206
        %v2209 = vld [vmem:[#allocation13] sm:$0xff]
        %v2210 = vld [vmem:[#allocation13 + $0x8] sm:$0xff]
        %v2211 = vld [vmem:[#allocation13 + $0x10] sm:$0xff]
        %v2212 = vld [vmem:[#allocation13 + $0x18] sm:$0xff]
        %v2213 = vld [vmem:[#allocation13 + $0x20] sm:$0xff]
        %v2214 = vld [vmem:[#allocation13 + $0x28] sm:$0xff]
        %v2215 = vld [vmem:[#allocation13 + $0x30] sm:$0xff]
        %v2216 = vld [vmem:[#allocation13 + $0x38] sm:$0xff]
        %v2217 = vld [vmem:[#allocation13 + $0x40] sm:$0xff]
        %v2218 = vld [vmem:[#allocation13 + $0x48] sm:$0xff]
        %v2219 = vld [vmem:[#allocation13 + $0x50] sm:$0xff]
        %v2220 = vld [vmem:[#allocation13 + $0x58] sm:$0xff]
        %v2221 = vld [vmem:[#allocation13 + $0x60] sm:$0xff]
        %v2222 = vld [vmem:[#allocation13 + $0x68] sm:$0xff]
        %v2223 = vld [vmem:[#allocation13 + $0x70] sm:$0xff]
        %v2224 = vld [vmem:[#allocation13 + $0x78] sm:$0xff]
        %v2225 = vld [vmem:[%s13] sm:$0x3]
        %v2227 = vlaneseq
        %v2228 = vshrl.u32 %v2227, 7
        %v2229 = vsub.s32 0, %v2228
        %v2230 = vrot.slane %v2225, %v2229
        %v2231 = vlaneseq
        %v2232 = vshrl.u32 %v2231, 7
        %v2233 = vsub.s32 1, %v2232
        %v2234 = vrot.slane %v2225, %v2233
        %v2253 = vunpack.c.l.b16 %v2209
        %v2254 = vunpack.c.h.b16 %v2209
        %v2255 = vunpack.c.l.b16 %v2210
        %v2256 = vunpack.c.h.b16 %v2210
        %v2257 = vunpack.c.l.b16 %v2211
        %v2258 = vunpack.c.h.b16 %v2211
        %v2259 = vunpack.c.l.b16 %v2212
        %v2260 = vunpack.c.h.b16 %v2212
        %v2261 = vunpack.c.l.b16 %v2213
        %v2262 = vunpack.c.h.b16 %v2213
        %v2263 = vunpack.c.l.b16 %v2214
        %v2264 = vunpack.c.h.b16 %v2214
        %v2265 = vunpack.c.l.b16 %v2215
        %v2266 = vunpack.c.h.b16 %v2215
        %v2267 = vunpack.c.l.b16 %v2216
        %v2268 = vunpack.c.h.b16 %v2216
        %v2269 = vunpack.c.l.b16 %v2217
        %v2270 = vunpack.c.h.b16 %v2217
        %v2271 = vunpack.c.l.b16 %v2218
        %v2272 = vunpack.c.h.b16 %v2218
        %v2273 = vunpack.c.l.b16 %v2219
        %v2274 = vunpack.c.h.b16 %v2219
        %v2275 = vunpack.c.l.b16 %v2220
        %v2276 = vunpack.c.h.b16 %v2220
        %v2277 = vunpack.c.l.b16 %v2221
        %v2278 = vunpack.c.h.b16 %v2221
        %v2279 = vunpack.c.l.b16 %v2222
        %v2280 = vunpack.c.h.b16 %v2222
        %v2281 = vunpack.c.l.b16 %v2223
        %v2282 = vunpack.c.h.b16 %v2223
        %v2283 = vunpack.c.l.b16 %v2224
        %v2284 = vunpack.c.h.b16 %v2224
        %v2285 = vpack.c.b16 %v2255, %v2253
        %v2286 = vpack.c.b16 %v2256, %v2254
        %v2287 = vpack.c.b16 %v2259, %v2257
        %v2288 = vpack.c.b16 %v2260, %v2258
        %v2289 = vpack.c.b16 %v2263, %v2261
        %v2290 = vpack.c.b16 %v2264, %v2262
        %v2291 = vpack.c.b16 %v2267, %v2265
        %v2292 = vpack.c.b16 %v2268, %v2266
        %v2293 = vpack.c.b16 %v2271, %v2269
        %v2294 = vpack.c.b16 %v2272, %v2270
        %v2295 = vpack.c.b16 %v2275, %v2273
        %v2296 = vpack.c.b16 %v2276, %v2274
        %v2297 = vpack.c.b16 %v2279, %v2277
        %v2298 = vpack.c.b16 %v2280, %v2278
        %v2299 = vpack.c.b16 %v2283, %v2281
        %v2300 = vpack.c.b16 %v2284, %v2282
        %2317 = vmatprep.subr.bf16.mxu0 %v2300
        %2318 = vmatpush1.bf16.msra.mxu0 %v2299
        %2319 = vmatprep.subr.bf16.mxu0 %v2298
        %2320 = vmatpush1.bf16.msra.mxu0 %v2297
        %2321 = vmatprep.subr.bf16.mxu0 %v2296
        %2322 = vmatpush1.bf16.msra.mxu0 %v2295
        %2323 = vmatprep.subr.bf16.mxu0 %v2294
        %2324 = vmatpush1.bf16.msra.mxu0 %v2293
        %2325 = vmatprep.subr.bf16.mxu0 %v2292
        %2326 = vmatpush1.bf16.msra.mxu0 %v2291
        %2327 = vmatprep.subr.bf16.mxu0 %v2290
        %2328 = vmatpush1.bf16.msra.mxu0 %v2289
        %2329 = vmatprep.subr.bf16.mxu0 %v2288
        %2330 = vmatpush1.bf16.msra.mxu0 %v2287
        %2331 = vmatprep.subr.bf16.mxu0 %v2286
        %2332 = vmatpush1.bf16.msra.mxu0 %v2285
        %2333 = vmatprep.subr.bf16.mxu0 0
        %2334 = vmatpush2.bf16.msra.mxu0 0
        %2335 = vmatprep.subr.bf16.mxu0 0
        %2336 = vmatpush2.bf16.msra.mxu0 0
        %2337 = vmatprep.subr.bf16.mxu0 0
        %2338 = vmatpush2.bf16.msra.mxu0 0
        %2339 = vmatprep.subr.bf16.mxu0 0
        %2340 = vmatpush2.bf16.msra.mxu0 0
        %2341 = vmatprep.subr.bf16.mxu0 0
        %2342 = vmatpush2.bf16.msra.mxu0 0
        %2343 = vmatprep.subr.bf16.mxu0 0
        %2344 = vmatpush2.bf16.msra.mxu0 0
        %2345 = vmatprep.subr.bf16.mxu0 0
        %2346 = vmatpush2.bf16.msra.mxu0 0
        %2347 = vmatprep.subr.bf16.mxu0 0
        %2348 = vmatpush2.bf16.msra.mxu0 0
        %2349 = vmatprep.mubr.bf16.mxu0 0
        %2350 = vmatmul.mubr.bf16.gmra.mxu0 %v2208
        %v2351 = vpop.f32.mrf.mxu0
        %v2352 = vadd.f32 %v2230, %v2351
        %v2353 = vpop.f32.mrf.mxu0
        %v2354 = vadd.f32 %v2234, %v2353
        %v2355 = vpop.f32.mrf.mxu0
        %v2356 = vadd.f32 %v2230, %v2355
        %v2357 = vpop.f32.mrf.mxu0
        %v2358 = vadd.f32 %v2234, %v2357
        %2359 = vdwg.mxu0
        %v2360 = vmax.f32 %v2352, 0.0
        %v2361 = vmax.f32 %v2354, 0.0
        %v2362 = vmax.f32 %v2356, 0.0
        %v2363 = vmax.f32 %v2358, 0.0
        %v2364 = vpack.c.bf16 %v2362, %v2360
        %v2365 = vpack.c.bf16 %v2363, %v2361
        %v2366 = vld [vmem:[#allocation14] sm:$0xf]
        %v2367 = vld [vmem:[#allocation14 + $0x4] sm:$0xf]
        %v2368 = vld [vmem:[#allocation14 + $0x8] sm:$0xf]
        %v2369 = vld [vmem:[#allocation14 + $0xc] sm:$0xf]
        %v2370 = vld [vmem:[#allocation14 + $0x10] sm:$0xf]
        %v2371 = vld [vmem:[#allocation14 + $0x14] sm:$0xf]
        %v2372 = vld [vmem:[#allocation14 + $0x18] sm:$0xf]
        %v2373 = vld [vmem:[#allocation14 + $0x1c] sm:$0xf]
        %v2374 = vld [vmem:[#allocation14 + $0x20] sm:$0xf]
        %v2375 = vld [vmem:[#allocation14 + $0x24] sm:$0xf]
        %v2376 = vld [vmem:[#allocation14 + $0x28] sm:$0xf]
        %v2377 = vld [vmem:[#allocation14 + $0x2c] sm:$0xf]
        %v2378 = vld [vmem:[#allocation14 + $0x30] sm:$0xf]
        %v2379 = vld [vmem:[#allocation14 + $0x34] sm:$0xf]
        %v2380 = vld [vmem:[#allocation14 + $0x38] sm:$0xf]
        %v2381 = vld [vmem:[#allocation14 + $0x3c] sm:$0xf]
        %v2382 = vld [vmem:[#allocation14 + $0x40] sm:$0xf]
        %v2383 = vld [vmem:[#allocation14 + $0x44] sm:$0xf]
        %v2384 = vld [vmem:[#allocation14 + $0x48] sm:$0xf]
        %v2385 = vld [vmem:[#allocation14 + $0x4c] sm:$0xf]
        %v2386 = vld [vmem:[#allocation14 + $0x50] sm:$0xf]
        %v2387 = vld [vmem:[#allocation14 + $0x54] sm:$0xf]
        %v2388 = vld [vmem:[#allocation14 + $0x58] sm:$0xf]
        %v2389 = vld [vmem:[#allocation14 + $0x5c] sm:$0xf]
        %v2390 = vld [vmem:[#allocation14 + $0x60] sm:$0xf]
        %v2391 = vld [vmem:[#allocation14 + $0x64] sm:$0xf]
        %v2392 = vld [vmem:[#allocation14 + $0x68] sm:$0xf]
        %v2393 = vld [vmem:[#allocation14 + $0x6c] sm:$0xf]
        %v2394 = vld [vmem:[#allocation14 + $0x70] sm:$0xf]
        %v2395 = vld [vmem:[#allocation14 + $0x74] sm:$0xf]
        %v2396 = vld [vmem:[#allocation14 + $0x78] sm:$0xf]
        %v2397 = vld [vmem:[#allocation14 + $0x7c] sm:$0xf]
        %v2398 = vld [vmem:[%s15] sm:$0x1]
        %v2400 = vlaneseq
        %v2401 = vshrl.u32 %v2400, 7
        %v2402 = vsub.s32 0, %v2401
        %v2403 = vrot.slane %v2398, %v2402
        %v2437 = vunpack.c.l.b16 %v2366
        %v2438 = vunpack.c.l.b16 %v2367
        %v2439 = vunpack.c.l.b16 %v2368
        %v2440 = vunpack.c.l.b16 %v2369
        %v2441 = vunpack.c.l.b16 %v2370
        %v2442 = vunpack.c.l.b16 %v2371
        %v2443 = vunpack.c.l.b16 %v2372
        %v2444 = vunpack.c.l.b16 %v2373
        %v2445 = vunpack.c.l.b16 %v2374
        %v2446 = vunpack.c.l.b16 %v2375
        %v2447 = vunpack.c.l.b16 %v2376
        %v2448 = vunpack.c.l.b16 %v2377
        %v2449 = vunpack.c.l.b16 %v2378
        %v2450 = vunpack.c.l.b16 %v2379
        %v2451 = vunpack.c.l.b16 %v2380
        %v2452 = vunpack.c.l.b16 %v2381
        %v2453 = vunpack.c.l.b16 %v2382
        %v2454 = vunpack.c.l.b16 %v2383
        %v2455 = vunpack.c.l.b16 %v2384
        %v2456 = vunpack.c.l.b16 %v2385
        %v2457 = vunpack.c.l.b16 %v2386
        %v2458 = vunpack.c.l.b16 %v2387
        %v2459 = vunpack.c.l.b16 %v2388
        %v2460 = vunpack.c.l.b16 %v2389
        %v2461 = vunpack.c.l.b16 %v2390
        %v2462 = vunpack.c.l.b16 %v2391
        %v2463 = vunpack.c.l.b16 %v2392
        %v2464 = vunpack.c.l.b16 %v2393
        %v2465 = vunpack.c.l.b16 %v2394
        %v2466 = vunpack.c.l.b16 %v2395
        %v2467 = vunpack.c.l.b16 %v2396
        %v2468 = vunpack.c.l.b16 %v2397
        %v2469 = vpack.c.b16 %v2438, %v2437
        %v2470 = vpack.c.b16 %v2440, %v2439
        %v2471 = vpack.c.b16 %v2442, %v2441
        %v2472 = vpack.c.b16 %v2444, %v2443
        %v2473 = vpack.c.b16 %v2446, %v2445
        %v2474 = vpack.c.b16 %v2448, %v2447
        %v2475 = vpack.c.b16 %v2450, %v2449
        %v2476 = vpack.c.b16 %v2452, %v2451
        %v2477 = vpack.c.b16 %v2454, %v2453
        %v2478 = vpack.c.b16 %v2456, %v2455
        %v2479 = vpack.c.b16 %v2458, %v2457
        %v2480 = vpack.c.b16 %v2460, %v2459
        %v2481 = vpack.c.b16 %v2462, %v2461
        %v2482 = vpack.c.b16 %v2464, %v2463
        %v2483 = vpack.c.b16 %v2466, %v2465
        %v2484 = vpack.c.b16 %v2468, %v2467
        %2501 = vmatprep.subr.bf16.mxu0 0
        %2502 = vmatpush1.bf16.msra.mxu0 %v2476
        %2503 = vmatprep.subr.bf16.mxu0 0
        %2504 = vmatpush1.bf16.msra.mxu0 %v2475
        %2505 = vmatprep.subr.bf16.mxu0 0
        %2506 = vmatpush1.bf16.msra.mxu0 %v2474
        %2507 = vmatprep.subr.bf16.mxu0 0
        %2508 = vmatpush1.bf16.msra.mxu0 %v2473
        %2509 = vmatprep.subr.bf16.mxu0 0
        %2510 = vmatpush1.bf16.msra.mxu0 %v2472
        %2511 = vmatprep.subr.bf16.mxu0 0
        %2512 = vmatpush1.bf16.msra.mxu0 %v2471
        %2513 = vmatprep.subr.bf16.mxu0 0
        %2514 = vmatpush1.bf16.msra.mxu0 %v2470
        %2515 = vmatprep.subr.bf16.mxu0 0
        %2516 = vmatpush1.bf16.msra.mxu0 %v2469
        %2517 = vmatprep.subr.bf16.mxu0 0
        %2518 = vmatpush2.bf16.msra.mxu0 %v2484
        %2519 = vmatprep.subr.bf16.mxu0 0
        %2520 = vmatpush2.bf16.msra.mxu0 %v2483
        %2521 = vmatprep.subr.bf16.mxu0 0
        %2522 = vmatpush2.bf16.msra.mxu0 %v2482
        %2523 = vmatprep.subr.bf16.mxu0 0
        %2524 = vmatpush2.bf16.msra.mxu0 %v2481
        %2525 = vmatprep.subr.bf16.mxu0 0
        %2526 = vmatpush2.bf16.msra.mxu0 %v2480
        %2527 = vmatprep.subr.bf16.mxu0 0
        %2528 = vmatpush2.bf16.msra.mxu0 %v2479
        %2529 = vmatprep.subr.bf16.mxu0 0
        %2530 = vmatpush2.bf16.msra.mxu0 %v2478
        %2531 = vmatprep.subr.bf16.mxu0 0
        %2532 = vmatpush2.bf16.msra.mxu0 %v2477
        %2533 = vmatprep.mubr.bf16.mxu0 %v2365
        %2534 = vmatmul.mubr.bf16.gmra.mxu0 %v2364
        %v2535 = vpop.f32.mrf.mxu0
        %v2536 = vadd.f32 %v2403, %v2535
        %v2537 = vpop.f32.mrf.mxu0
        %v2538 = vpop.f32.mrf.mxu0
        %v2539 = vadd.f32 %v2403, %v2538
        %v2540 = vpop.f32.mrf.mxu0
        %2541 = vdwg.mxu0
        %v2542 = vadd.f32 %v2206, %v2536
        %v2543 = vadd.f32 %v2207, %v2539
        %2544 = vadd.xlane.f32.xlu0 %v2542
        %v2545 = vpop.xlane.xlu0 %2544
        %2546 = vadd.xlane.f32.xlu0 %v2543
        %v2547 = vpop.xlane.xlu0 %2546
        %v2548 = vmul.f32 %v2545, %v1925
        %v2549 = vmul.f32 %v2547, %v1925
        %v2550 = vsub.f32 %v2542, %v2548
        %v2551 = vsub.f32 %v2543, %v2549
        %v2552 = vmul.f32 %v2550, %v2550
        %v2553 = vmul.f32 %v2551, %v2551
        %2554 = vadd.xlane.f32.xlu0 %v2552
        %v2555 = vpop.xlane.xlu0 %2554
        %2556 = vadd.xlane.f32.xlu0 %v2553
        %v2557 = vpop.xlane.xlu0 %2556
        %v2558 = vmul.f32 %v2555, %v1925
        %v2559 = vmul.f32 %v2557, %v1925
        %v2560 = vadd.f32 %v2558, 1e-05
        %v2561 = vadd.f32 %v2559, 1e-05
        %v2562 = vrsqrt.pop %v2560
        %v2563 = vrsqrt.pop %v2561
        %v2564 = vmul.f32 %v2550, %v2562
        %v2565 = vmul.f32 %v2551, %v2563
        %v2566 = vlaneseq
        %v2567 = vshrl.u32 %v2566, 7
        %v2568 = vsub.s32 2, %v2567
        %v2569 = vrot.slane %v708, %v2568
        %v2570 = vmul.f32 %v2564, %v2569
        %v2571 = vmul.f32 %v2565, %v2569
        %v2572 = vlaneseq
        %v2573 = vshrl.u32 %v2572, 7
        %v2574 = vsub.s32 2, %v2573
        %v2575 = vrot.slane %v709, %v2574
        %v2576 = vadd.f32 %v2570, %v2575
        %v2577 = vadd.f32 %v2571, %v2575
        %s2578 = scalar_lea.vmem %s10, 4
        %v2579 = vld [vmem:[%s2578] sm:$0x7]
        %s2580 = scalar_lea.vmem %s11, 4
        %v2581 = vld [vmem:[%s2580] sm:$0x7]
        %v2582 = vpack.c.bf16 %v2577, %v2576
        %s2583 = scalar_lea.vmem [#allocation5], 192
        %v2584 = vld [vmem:[%s2583] sm:$0xff]
        %v2585 = vld [vmem:[%s2583 + $0x8] sm:$0xf]
        %v2586 = vld [vmem:[%s2583 + $0xc] sm:$0xff]
        %v2587 = vld [vmem:[%s2583 + $0x14] sm:$0xf]
        %v2588 = vld [vmem:[%s2583 + $0x18] sm:$0xff]
        %v2589 = vld [vmem:[%s2583 + $0x20] sm:$0xf]
        %v2590 = vld [vmem:[%s2583 + $0x24] sm:$0xff]
        %v2591 = vld [vmem:[%s2583 + $0x2c] sm:$0xf]
        %v2592 = vld [vmem:[%s2583 + $0x30] sm:$0xff]
        %v2593 = vld [vmem:[%s2583 + $0x38] sm:$0xf]
        %v2594 = vld [vmem:[%s2583 + $0x3c] sm:$0xff]
        %v2595 = vld [vmem:[%s2583 + $0x44] sm:$0xf]
        %v2596 = vld [vmem:[%s2583 + $0x48] sm:$0xff]
        %v2597 = vld [vmem:[%s2583 + $0x50] sm:$0xf]
        %v2598 = vld [vmem:[%s2583 + $0x54] sm:$0xff]
        %v2599 = vld [vmem:[%s2583 + $0x5c] sm:$0xf]
        %v2600 = vld [vmem:[%s2583 + $0x60] sm:$0xff]
        %v2601 = vld [vmem:[%s2583 + $0x68] sm:$0xf]
        %v2602 = vld [vmem:[%s2583 + $0x6c] sm:$0xff]
        %v2603 = vld [vmem:[%s2583 + $0x74] sm:$0xf]
        %v2604 = vld [vmem:[%s2583 + $0x78] sm:$0xff]
        %v2605 = vld [vmem:[%s2583 + $0x80] sm:$0xf]
        %v2606 = vld [vmem:[%s2583 + $0x84] sm:$0xff]
        %v2607 = vld [vmem:[%s2583 + $0x8c] sm:$0xf]
        %v2608 = vld [vmem:[%s2583 + $0x90] sm:$0xff]
        %v2609 = vld [vmem:[%s2583 + $0x98] sm:$0xf]
        %v2610 = vld [vmem:[%s2583 + $0x9c] sm:$0xff]
        %v2611 = vld [vmem:[%s2583 + $0xa4] sm:$0xf]
        %v2612 = vld [vmem:[%s2583 + $0xa8] sm:$0xff]
        %v2613 = vld [vmem:[%s2583 + $0xb0] sm:$0xf]
        %v2614 = vld [vmem:[%s2583 + $0xb4] sm:$0xff]
        %v2615 = vld [vmem:[%s2583 + $0xbc] sm:$0xf]
        %s2616 = scalar_lea.vmem %s3, 3
        %v2617 = vld [vmem:[%s2616] sm:$0x7]
        %v2619 = vlaneseq
        %v2620 = vshrl.u32 %v2619, 7
        %v2621 = vsub.s32 0, %v2620
        %v2622 = vrot.slane %v2617, %v2621
        %v2623 = vlaneseq
        %v2624 = vshrl.u32 %v2623, 7
        %v2625 = vsub.s32 1, %v2624
        %v2626 = vrot.slane %v2617, %v2625
        %v2627 = vlaneseq
        %v2628 = vshrl.u32 %v2627, 7
        %v2629 = vsub.s32 2, %v2628
        %v2630 = vrot.slane %v2617, %v2629
        %v2666 = vunpack.c.l.b16 %v2584
        %v2667 = vunpack.c.h.b16 %v2584
        %v2668 = vunpack.c.l.b16 %v2585
        %v2669 = vunpack.c.l.b16 %v2586
        %v2670 = vunpack.c.h.b16 %v2586
        %v2671 = vunpack.c.l.b16 %v2587
        %v2672 = vunpack.c.l.b16 %v2588
        %v2673 = vunpack.c.h.b16 %v2588
        %v2674 = vunpack.c.l.b16 %v2589
        %v2675 = vunpack.c.l.b16 %v2590
        %v2676 = vunpack.c.h.b16 %v2590
        %v2677 = vunpack.c.l.b16 %v2591
        %v2678 = vunpack.c.l.b16 %v2592
        %v2679 = vunpack.c.h.b16 %v2592
        %v2680 = vunpack.c.l.b16 %v2593
        %v2681 = vunpack.c.l.b16 %v2594
        %v2682 = vunpack.c.h.b16 %v2594
        %v2683 = vunpack.c.l.b16 %v2595
        %v2684 = vunpack.c.l.b16 %v2596
        %v2685 = vunpack.c.h.b16 %v2596
        %v2686 = vunpack.c.l.b16 %v2597
        %v2687 = vunpack.c.l.b16 %v2598
        %v2688 = vunpack.c.h.b16 %v2598
        %v2689 = vunpack.c.l.b16 %v2599
        %v2690 = vunpack.c.l.b16 %v2600
        %v2691 = vunpack.c.h.b16 %v2600
        %v2692 = vunpack.c.l.b16 %v2601
        %v2693 = vunpack.c.l.b16 %v2602
        %v2694 = vunpack.c.h.b16 %v2602
        %v2695 = vunpack.c.l.b16 %v2603
        %v2696 = vunpack.c.l.b16 %v2604
        %v2697 = vunpack.c.h.b16 %v2604
        %v2698 = vunpack.c.l.b16 %v2605
        %v2699 = vunpack.c.l.b16 %v2606
        %v2700 = vunpack.c.h.b16 %v2606
        %v2701 = vunpack.c.l.b16 %v2607
        %v2702 = vunpack.c.l.b16 %v2608
        %v2703 = vunpack.c.h.b16 %v2608
        %v2704 = vunpack.c.l.b16 %v2609
        %v2705 = vunpack.c.l.b16 %v2610
        %v2706 = vunpack.c.h.b16 %v2610
        %v2707 = vunpack.c.l.b16 %v2611
        %v2708 = vunpack.c.l.b16 %v2612
        %v2709 = vunpack.c.h.b16 %v2612
        %v2710 = vunpack.c.l.b16 %v2613
        %v2711 = vunpack.c.l.b16 %v2614
        %v2712 = vunpack.c.h.b16 %v2614
        %v2713 = vunpack.c.l.b16 %v2615
        %v2714 = vpack.c.b16 %v2669, %v2666
        %v2715 = vpack.c.b16 %v2670, %v2667
        %v2716 = vpack.c.b16 %v2671, %v2668
        %v2717 = vpack.c.b16 %v2675, %v2672
        %v2718 = vpack.c.b16 %v2676, %v2673
        %v2719 = vpack.c.b16 %v2677, %v2674
        %v2720 = vpack.c.b16 %v2681, %v2678
        %v2721 = vpack.c.b16 %v2682, %v2679
        %v2722 = vpack.c.b16 %v2683, %v2680
        %v2723 = vpack.c.b16 %v2687, %v2684
        %v2724 = vpack.c.b16 %v2688, %v2685
        %v2725 = vpack.c.b16 %v2689, %v2686
        %v2726 = vpack.c.b16 %v2693, %v2690
        %v2727 = vpack.c.b16 %v2694, %v2691
        %v2728 = vpack.c.b16 %v2695, %v2692
        %v2729 = vpack.c.b16 %v2699, %v2696
        %v2730 = vpack.c.b16 %v2700, %v2697
        %v2731 = vpack.c.b16 %v2701, %v2698
        %v2732 = vpack.c.b16 %v2705, %v2702
        %v2733 = vpack.c.b16 %v2706, %v2703
        %v2734 = vpack.c.b16 %v2707, %v2704
        %v2735 = vpack.c.b16 %v2711, %v2708
        %v2736 = vpack.c.b16 %v2712, %v2709
        %v2737 = vpack.c.b16 %v2713, %v2710
        %2762 = vmatprep.subr.bf16.mxu0 %v2736
        %2763 = vmatpush1.bf16.msra.mxu0 %v2735
        %2764 = vmatprep.subr.bf16.mxu0 %v2733
        %2765 = vmatpush1.bf16.msra.mxu0 %v2732
        %2766 = vmatprep.subr.bf16.mxu0 %v2730
        %2767 = vmatpush1.bf16.msra.mxu0 %v2729
        %2768 = vmatprep.subr.bf16.mxu0 %v2727
        %2769 = vmatpush1.bf16.msra.mxu0 %v2726
        %2770 = vmatprep.subr.bf16.mxu0 %v2724
        %2771 = vmatpush1.bf16.msra.mxu0 %v2723
        %2772 = vmatprep.subr.bf16.mxu0 %v2721
        %2773 = vmatpush1.bf16.msra.mxu0 %v2720
        %2774 = vmatprep.subr.bf16.mxu0 %v2718
        %2775 = vmatpush1.bf16.msra.mxu0 %v2717
        %2776 = vmatprep.subr.bf16.mxu0 %v2715
        %2777 = vmatpush1.bf16.msra.mxu0 %v2714
        %2778 = vmatprep.subr.bf16.mxu0 0
        %2779 = vmatpush2.bf16.msra.mxu0 0
        %2780 = vmatprep.subr.bf16.mxu0 0
        %2781 = vmatpush2.bf16.msra.mxu0 0
        %2782 = vmatprep.subr.bf16.mxu0 0
        %2783 = vmatpush2.bf16.msra.mxu0 0
        %2784 = vmatprep.subr.bf16.mxu0 0
        %2785 = vmatpush2.bf16.msra.mxu0 0
        %2786 = vmatprep.subr.bf16.mxu0 0
        %2787 = vmatpush2.bf16.msra.mxu0 0
        %2788 = vmatprep.subr.bf16.mxu0 0
        %2789 = vmatpush2.bf16.msra.mxu0 0
        %2790 = vmatprep.subr.bf16.mxu0 0
        %2791 = vmatpush2.bf16.msra.mxu0 0
        %2792 = vmatprep.subr.bf16.mxu0 0
        %2793 = vmatpush2.bf16.msra.mxu0 0
        %2794 = vmatprep.mubr.bf16.mxu0 0
        %2795 = vmatmul.mubr.bf16.gmra.mxu0 %v2582
        %v2796 = vpop.f32.mrf.mxu0
        %v2797 = vadd.f32 %v2622, %v2796
        %v2798 = vpop.f32.mrf.mxu0
        %v2799 = vadd.f32 %v2626, %v2798
        %v2800 = vpop.f32.mrf.mxu0
        %v2801 = vadd.f32 %v2622, %v2800
        %v2802 = vpop.f32.mrf.mxu0
        %v2803 = vadd.f32 %v2626, %v2802
        %2804 = vdwg.mxu0
        %2805 = vmatprep.subr.bf16.mxu0 0
        %2806 = vmatpush1.bf16.msra.mxu0 %v2737
        %2807 = vmatprep.subr.bf16.mxu0 0
        %2808 = vmatpush1.bf16.msra.mxu0 %v2734
        %2809 = vmatprep.subr.bf16.mxu0 0
        %2810 = vmatpush1.bf16.msra.mxu0 %v2731
        %2811 = vmatprep.subr.bf16.mxu0 0
        %2812 = vmatpush1.bf16.msra.mxu0 %v2728
        %2813 = vmatprep.subr.bf16.mxu0 0
        %2814 = vmatpush1.bf16.msra.mxu0 %v2725
        %2815 = vmatprep.subr.bf16.mxu0 0
        %2816 = vmatpush1.bf16.msra.mxu0 %v2722
        %2817 = vmatprep.subr.bf16.mxu0 0
        %2818 = vmatpush1.bf16.msra.mxu0 %v2719
        %2819 = vmatprep.subr.bf16.mxu0 0
        %2820 = vmatpush1.bf16.msra.mxu0 %v2716
        %2821 = vmatprep.subr.bf16.mxu0 0
        %2822 = vmatpush2.bf16.msra.mxu0 0
        %2823 = vmatprep.subr.bf16.mxu0 0
        %2824 = vmatpush2.bf16.msra.mxu0 0
        %2825 = vmatprep.subr.bf16.mxu0 0
        %2826 = vmatpush2.bf16.msra.mxu0 0
        %2827 = vmatprep.subr.bf16.mxu0 0
        %2828 = vmatpush2.bf16.msra.mxu0 0
        %2829 = vmatprep.subr.bf16.mxu0 0
        %2830 = vmatpush2.bf16.msra.mxu0 0
        %2831 = vmatprep.subr.bf16.mxu0 0
        %2832 = vmatpush2.bf16.msra.mxu0 0
        %2833 = vmatprep.subr.bf16.mxu0 0
        %2834 = vmatpush2.bf16.msra.mxu0 0
        %2835 = vmatprep.subr.bf16.mxu0 0
        %2836 = vmatpush2.bf16.msra.mxu0 0
        %2837 = vmatprep.mubr.bf16.mxu0 0
        %2838 = vmatmul.mubr.bf16.gmra.mxu0 %v2582
        %v2839 = vpop.f32.mrf.mxu0
        %v2840 = vadd.f32 %v2630, %v2839
        %v2841 = vpop.f32.mrf.mxu0
        %v2842 = vpop.f32.mrf.mxu0
        %v2843 = vadd.f32 %v2630, %v2842
        %v2844 = vpop.f32.mrf.mxu0
        %2845 = vdwg.mxu0
        %v2847 = vsel %vm972, %v2797, 0
        %v2850 = vsel %vm972, %v2801, 0
        %v2853 = vsel %vm972, %v2799, 0
        %v2856 = vsel %vm972, %v2803, 0
        %2858 = vmatprep.subr.mxu0 0.0
        %2859 = vmatpush1.xpose.msra.mxu0 0.0
        %2860 = vmatprep.subr.mxu0 0.0
        %2861 = vmatpush1.xpose.msra.mxu0 0.0
        %2862 = vmatprep.subr.mxu0 0.0
        %2863 = vmatpush1.xpose.msra.mxu0 0.0
        %2864 = vmatprep.subr.mxu0 0.0
        %2865 = vmatpush1.xpose.msra.mxu0 0.0
        %2866 = vmatprep.subr.mxu0 0.0
        %2867 = vmatpush1.xpose.msra.mxu0 0.0
        %2868 = vmatprep.subr.mxu0 0.0
        %2869 = vmatpush1.xpose.msra.mxu0 0.0
        %2870 = vmatprep.subr.mxu0 0.0
        %2871 = vmatpush1.xpose.msra.mxu0 0.0
        %2872 = vmatprep.subr.mxu0 0.0
        %2873 = vmatpush1.xpose.msra.mxu0 0.0
        %2874 = vmatprep.subr.mxu0 0.0
        %2875 = vmatpush1.xpose.msra.mxu0 0.0
        %2876 = vmatprep.subr.mxu0 0.0
        %2877 = vmatpush1.xpose.msra.mxu0 0.0
        %2878 = vmatprep.subr.mxu0 0.0
        %2879 = vmatpush1.xpose.msra.mxu0 0.0
        %2880 = vmatprep.subr.mxu0 0.0
        %2881 = vmatpush1.xpose.msra.mxu0 0.0
        %2882 = vmatprep.subr.mxu0 0.0
        %2883 = vmatpush1.xpose.msra.mxu0 0.0
        %2884 = vmatprep.subr.mxu0 0.0
        %2885 = vmatpush1.xpose.msra.mxu0 0.0
        %2886 = vmatprep.subr.mxu0 0.0
        %2887 = vmatpush1.xpose.msra.mxu0 %v2856
        %2888 = vmatprep.subr.mxu0 0.0
        %2889 = vmatpush1.xpose.msra.mxu0 %v2853
        %2890 = vmatprep.subr.mxu0 0.0
        %2891 = vmatpush2.xpose.msra.mxu0 0.0
        %2892 = vmatprep.subr.mxu0 0.0
        %2893 = vmatpush2.xpose.msra.mxu0 0.0
        %2894 = vmatprep.subr.mxu0 0.0
        %2895 = vmatpush2.xpose.msra.mxu0 0.0
        %2896 = vmatprep.subr.mxu0 0.0
        %2897 = vmatpush2.xpose.msra.mxu0 0.0
        %2898 = vmatprep.subr.mxu0 0.0
        %2899 = vmatpush2.xpose.msra.mxu0 0.0
        %2900 = vmatprep.subr.mxu0 0.0
        %2901 = vmatpush2.xpose.msra.mxu0 0.0
        %2902 = vmatprep.subr.mxu0 0.0
        %2903 = vmatpush2.xpose.msra.mxu0 0.0
        %2904 = vmatprep.subr.mxu0 0.0
        %2905 = vmatpush2.xpose.msra.mxu0 0.0
        %2906 = vmatprep.subr.mxu0 0.0
        %2907 = vmatpush2.xpose.msra.mxu0 0.0
        %2908 = vmatprep.subr.mxu0 0.0
        %2909 = vmatpush2.xpose.msra.mxu0 0.0
        %2910 = vmatprep.subr.mxu0 0.0
        %2911 = vmatpush2.xpose.msra.mxu0 0.0
        %2912 = vmatprep.subr.mxu0 0.0
        %2913 = vmatpush2.xpose.msra.mxu0 0.0
        %2914 = vmatprep.subr.mxu0 0.0
        %2915 = vmatpush2.xpose.msra.mxu0 0.0
        %2916 = vmatprep.subr.mxu0 0.0
        %2917 = vmatpush2.xpose.msra.mxu0 0.0
        %2918 = vmatprep.subr.mxu0 0.0
        %2919 = vmatpush2.xpose.msra.mxu0 0.0
        %2920 = vmatprep.subr.mxu0 0.0
        %2921 = vmatpush2.xpose.msra.mxu0 0.0
        %2922 = vmatprep.mubr.f32.mxu0 0.0
        %2923 = vmatmul.mubr.f32.gmra.mxu0 %v2847
        %v2924 = vpop.f32.mrf.mxu0
        %v2925 = vadd.f32 0.0, %v2924
        %v2926 = vpop.f32.mrf.mxu0
        %2927 = vmatprep.mubr.f32.mxu0 0.0
        %2928 = vmatmul.mubr.f32.gmra.mxu0 %v2850
        %v2929 = vpop.f32.mrf.mxu0
        %v2930 = vadd.f32 0.0, %v2929
        %v2931 = vpop.f32.mrf.mxu0
        %2932 = vdwg.mxu0
        %v2933 = vmul.f32 %v2925, 0.17677669
        %v2934 = vmul.f32 %v2930, 0.17677669
        %v2935 = vsel %vm1062, %v2933, -inf
        %2936 = vmax.xlane.f32.xlu0 %v2935
        %v2937 = vpop.xlane.xlu0 %2936
        %v2938 = vsel %vm1062, %v2934, -inf
        %2939 = vmax.xlane.f32.xlu0 %v2938
        %v2940 = vpop.xlane.xlu0 %2939
        %v2941 = vsub.f32 %v2933, %v2937
        %v2942 = vsub.f32 %v2934, %v2940
        %v2943 = vmul.f32 %v2941, 1.442695
        %v2944 = vpow.pop %v2943
        %v2945 = vmul.f32 %v2942, 1.442695
        %v2946 = vpow.pop %v2945
        %v2947 = vsel %vm1062, %v2944, 0.0
        %2948 = vadd.xlane.f32.xlu0 %v2947
        %v2949 = vpop.xlane.xlu0 %2948
        %v2950 = vsel %vm1062, %v2946, 0.0
        %2951 = vadd.xlane.f32.xlu0 %v2950
        %v2952 = vpop.xlane.xlu0 %2951
        %v2953 = vrcp.pop %v2949
        %v2954 = vrcp.pop %v2952
        %v2955 = vmul.f32 %v2944, %v2953
        %v2956 = vmul.f32 %v2946, %v2954
        %v2958 = vsel %vm1062, %v2955, 0
        %v2961 = vsel %vm1062, %v2956, 0
        %2963 = vmatprep.subr.mxu0 0.0
        %2964 = vmatpush1.msra.mxu0 0.0
        %2965 = vmatprep.subr.mxu0 0.0
        %2966 = vmatpush1.msra.mxu0 0.0
        %2967 = vmatprep.subr.mxu0 0.0
        %2968 = vmatpush1.msra.mxu0 0.0
        %2969 = vmatprep.subr.mxu0 0.0
        %2970 = vmatpush1.msra.mxu0 0.0
        %2971 = vmatprep.subr.mxu0 0.0
        %2972 = vmatpush1.msra.mxu0 0.0
        %2973 = vmatprep.subr.mxu0 0.0
        %2974 = vmatpush1.msra.mxu0 0.0
        %2975 = vmatprep.subr.mxu0 0.0
        %2976 = vmatpush1.msra.mxu0 0.0
        %2977 = vmatprep.subr.mxu0 0.0
        %2978 = vmatpush1.msra.mxu0 0.0
        %2979 = vmatprep.subr.mxu0 0.0
        %2980 = vmatpush1.msra.mxu0 0.0
        %2981 = vmatprep.subr.mxu0 0.0
        %2982 = vmatpush1.msra.mxu0 0.0
        %2983 = vmatprep.subr.mxu0 0.0
        %2984 = vmatpush1.msra.mxu0 0.0
        %2985 = vmatprep.subr.mxu0 0.0
        %2986 = vmatpush1.msra.mxu0 0.0
        %2987 = vmatprep.subr.mxu0 0.0
        %2988 = vmatpush1.msra.mxu0 0.0
        %2989 = vmatprep.subr.mxu0 0.0
        %2990 = vmatpush1.msra.mxu0 0.0
        %2991 = vmatprep.subr.mxu0 0.0
        %2992 = vmatpush1.msra.mxu0 %v2843
        %2993 = vmatprep.subr.mxu0 0.0
        %2994 = vmatpush1.msra.mxu0 %v2840
        %2995 = vmatprep.subr.mxu0 0.0
        %2996 = vmatpush2.msra.mxu0 0.0
        %2997 = vmatprep.subr.mxu0 0.0
        %2998 = vmatpush2.msra.mxu0 0.0
        %2999 = vmatprep.subr.mxu0 0.0
        %3000 = vmatpush2.msra.mxu0 0.0
        %3001 = vmatprep.subr.mxu0 0.0
        %3002 = vmatpush2.msra.mxu0 0.0
        %3003 = vmatprep.subr.mxu0 0.0
        %3004 = vmatpush2.msra.mxu0 0.0
        %3005 = vmatprep.subr.mxu0 0.0
        %3006 = vmatpush2.msra.mxu0 0.0
        %3007 = vmatprep.subr.mxu0 0.0
        %3008 = vmatpush2.msra.mxu0 0.0
        %3009 = vmatprep.subr.mxu0 0.0
        %3010 = vmatpush2.msra.mxu0 0.0
        %3011 = vmatprep.subr.mxu0 0.0
        %3012 = vmatpush2.msra.mxu0 0.0
        %3013 = vmatprep.subr.mxu0 0.0
        %3014 = vmatpush2.msra.mxu0 0.0
        %3015 = vmatprep.subr.mxu0 0.0
        %3016 = vmatpush2.msra.mxu0 0.0
        %3017 = vmatprep.subr.mxu0 0.0
        %3018 = vmatpush2.msra.mxu0 0.0
        %3019 = vmatprep.subr.mxu0 0.0
        %3020 = vmatpush2.msra.mxu0 0.0
        %3021 = vmatprep.subr.mxu0 0.0
        %3022 = vmatpush2.msra.mxu0 0.0
        %3023 = vmatprep.subr.mxu0 0.0
        %3024 = vmatpush2.msra.mxu0 0.0
        %3025 = vmatprep.subr.mxu0 0.0
        %3026 = vmatpush2.msra.mxu0 0.0
        %3027 = vmatprep.mubr.f32.mxu0 0.0
        %3028 = vmatmul.mubr.f32.gmra.mxu0 %v2958
        %v3029 = vpop.f32.mrf.mxu0
        %v3030 = vadd.f32 0.0, %v3029
        %v3031 = vpop.f32.mrf.mxu0
        %3032 = vmatprep.mubr.f32.mxu0 0.0
        %3033 = vmatmul.mubr.f32.gmra.mxu0 %v2961
        %v3034 = vpop.f32.mrf.mxu0
        %v3035 = vadd.f32 0.0, %v3034
        %v3036 = vpop.f32.mrf.mxu0
        %3037 = vdwg.mxu0
        %3038 = vrot.lane.b32.xlu0 %v2797, 96
        %v3039 = vpop.permute.xlu0 %3038
        %3040 = vrot.lane.b32.xlu0 %v2801, 96
        %v3041 = vpop.permute.xlu0 %3040
        %3042 = vrot.lane.b32.xlu0 %v2799, 96
        %v3043 = vpop.permute.xlu0 %3042
        %3044 = vrot.lane.b32.xlu0 %v2803, 96
        %v3045 = vpop.permute.xlu0 %3044
        %v3046 = vsel %vm972, %v3039, 0
        %v3048 = vsel %vm972, %v3041, 0
        %v3050 = vsel %vm972, %v3043, 0
        %v3052 = vsel %vm972, %v3045, 0
        %3054 = vmatprep.subr.mxu0 0.0
        %3055 = vmatpush1.xpose.msra.mxu0 0.0
        %3056 = vmatprep.subr.mxu0 0.0
        %3057 = vmatpush1.xpose.msra.mxu0 0.0
        %3058 = vmatprep.subr.mxu0 0.0
        %3059 = vmatpush1.xpose.msra.mxu0 0.0
        %3060 = vmatprep.subr.mxu0 0.0
        %3061 = vmatpush1.xpose.msra.mxu0 0.0
        %3062 = vmatprep.subr.mxu0 0.0
        %3063 = vmatpush1.xpose.msra.mxu0 0.0
        %3064 = vmatprep.subr.mxu0 0.0
        %3065 = vmatpush1.xpose.msra.mxu0 0.0
        %3066 = vmatprep.subr.mxu0 0.0
        %3067 = vmatpush1.xpose.msra.mxu0 0.0
        %3068 = vmatprep.subr.mxu0 0.0
        %3069 = vmatpush1.xpose.msra.mxu0 0.0
        %3070 = vmatprep.subr.mxu0 0.0
        %3071 = vmatpush1.xpose.msra.mxu0 0.0
        %3072 = vmatprep.subr.mxu0 0.0
        %3073 = vmatpush1.xpose.msra.mxu0 0.0
        %3074 = vmatprep.subr.mxu0 0.0
        %3075 = vmatpush1.xpose.msra.mxu0 0.0
        %3076 = vmatprep.subr.mxu0 0.0
        %3077 = vmatpush1.xpose.msra.mxu0 0.0
        %3078 = vmatprep.subr.mxu0 0.0
        %3079 = vmatpush1.xpose.msra.mxu0 0.0
        %3080 = vmatprep.subr.mxu0 0.0
        %3081 = vmatpush1.xpose.msra.mxu0 0.0
        %3082 = vmatprep.subr.mxu0 0.0
        %3083 = vmatpush1.xpose.msra.mxu0 %v3052
        %3084 = vmatprep.subr.mxu0 0.0
        %3085 = vmatpush1.xpose.msra.mxu0 %v3050
        %3086 = vmatprep.subr.mxu0 0.0
        %3087 = vmatpush2.xpose.msra.mxu0 0.0
        %3088 = vmatprep.subr.mxu0 0.0
        %3089 = vmatpush2.xpose.msra.mxu0 0.0
        %3090 = vmatprep.subr.mxu0 0.0
        %3091 = vmatpush2.xpose.msra.mxu0 0.0
        %3092 = vmatprep.subr.mxu0 0.0
        %3093 = vmatpush2.xpose.msra.mxu0 0.0
        %3094 = vmatprep.subr.mxu0 0.0
        %3095 = vmatpush2.xpose.msra.mxu0 0.0
        %3096 = vmatprep.subr.mxu0 0.0
        %3097 = vmatpush2.xpose.msra.mxu0 0.0
        %3098 = vmatprep.subr.mxu0 0.0
        %3099 = vmatpush2.xpose.msra.mxu0 0.0
        %3100 = vmatprep.subr.mxu0 0.0
        %3101 = vmatpush2.xpose.msra.mxu0 0.0
        %3102 = vmatprep.subr.mxu0 0.0
        %3103 = vmatpush2.xpose.msra.mxu0 0.0
        %3104 = vmatprep.subr.mxu0 0.0
        %3105 = vmatpush2.xpose.msra.mxu0 0.0
        %3106 = vmatprep.subr.mxu0 0.0
        %3107 = vmatpush2.xpose.msra.mxu0 0.0
        %3108 = vmatprep.subr.mxu0 0.0
        %3109 = vmatpush2.xpose.msra.mxu0 0.0
        %3110 = vmatprep.subr.mxu0 0.0
        %3111 = vmatpush2.xpose.msra.mxu0 0.0
        %3112 = vmatprep.subr.mxu0 0.0
        %3113 = vmatpush2.xpose.msra.mxu0 0.0
        %3114 = vmatprep.subr.mxu0 0.0
        %3115 = vmatpush2.xpose.msra.mxu0 0.0
        %3116 = vmatprep.subr.mxu0 0.0
        %3117 = vmatpush2.xpose.msra.mxu0 0.0
        %3118 = vmatprep.mubr.f32.mxu0 0.0
        %3119 = vmatmul.mubr.f32.gmra.mxu0 %v3046
        %v3120 = vpop.f32.mrf.mxu0
        %v3121 = vadd.f32 0.0, %v3120
        %v3122 = vpop.f32.mrf.mxu0
        %3123 = vmatprep.mubr.f32.mxu0 0.0
        %3124 = vmatmul.mubr.f32.gmra.mxu0 %v3048
        %v3125 = vpop.f32.mrf.mxu0
        %v3126 = vadd.f32 0.0, %v3125
        %v3127 = vpop.f32.mrf.mxu0
        %3128 = vdwg.mxu0
        %v3129 = vmul.f32 %v3121, 0.17677669
        %v3130 = vmul.f32 %v3126, 0.17677669
        %v3131 = vsel %vm1062, %v3129, -inf
        %3132 = vmax.xlane.f32.xlu0 %v3131
        %v3133 = vpop.xlane.xlu0 %3132
        %v3134 = vsel %vm1062, %v3130, -inf
        %3135 = vmax.xlane.f32.xlu0 %v3134
        %v3136 = vpop.xlane.xlu0 %3135
        %v3137 = vsub.f32 %v3129, %v3133
        %v3138 = vsub.f32 %v3130, %v3136
        %v3139 = vmul.f32 %v3137, 1.442695
        %v3140 = vpow.pop %v3139
        %v3141 = vmul.f32 %v3138, 1.442695
        %v3142 = vpow.pop %v3141
        %v3143 = vsel %vm1062, %v3140, 0.0
        %3144 = vadd.xlane.f32.xlu0 %v3143
        %v3145 = vpop.xlane.xlu0 %3144
        %v3146 = vsel %vm1062, %v3142, 0.0
        %3147 = vadd.xlane.f32.xlu0 %v3146
        %v3148 = vpop.xlane.xlu0 %3147
        %v3149 = vrcp.pop %v3145
        %v3150 = vrcp.pop %v3148
        %v3151 = vmul.f32 %v3140, %v3149
        %v3152 = vmul.f32 %v3142, %v3150
        %3155 = vrot.lane.b32.xlu0 %v2840, 96
        %v3156 = vpop.permute.xlu0 %3155
        %3157 = vrot.lane.b32.xlu0 %v2843, 96
        %v3158 = vpop.permute.xlu0 %3157
        %v3162 = vsel %vm1062, %v3151, 0
        %v3165 = vsel %vm1062, %v3152, 0
        %3167 = vmatprep.subr.mxu0 0.0
        %3168 = vmatpush1.msra.mxu0 0.0
        %3169 = vmatprep.subr.mxu0 0.0
        %3170 = vmatpush1.msra.mxu0 0.0
        %3171 = vmatprep.subr.mxu0 0.0
        %3172 = vmatpush1.msra.mxu0 0.0
        %3173 = vmatprep.subr.mxu0 0.0
        %3174 = vmatpush1.msra.mxu0 0.0
        %3175 = vmatprep.subr.mxu0 0.0
        %3176 = vmatpush1.msra.mxu0 0.0
        %3177 = vmatprep.subr.mxu0 0.0
        %3178 = vmatpush1.msra.mxu0 0.0
        %3179 = vmatprep.subr.mxu0 0.0
        %3180 = vmatpush1.msra.mxu0 0.0
        %3181 = vmatprep.subr.mxu0 0.0
        %3182 = vmatpush1.msra.mxu0 0.0
        %3183 = vmatprep.subr.mxu0 0.0
        %3184 = vmatpush1.msra.mxu0 0.0
        %3185 = vmatprep.subr.mxu0 0.0
        %3186 = vmatpush1.msra.mxu0 0.0
        %3187 = vmatprep.subr.mxu0 0.0
        %3188 = vmatpush1.msra.mxu0 0.0
        %3189 = vmatprep.subr.mxu0 0.0
        %3190 = vmatpush1.msra.mxu0 0.0
        %3191 = vmatprep.subr.mxu0 0.0
        %3192 = vmatpush1.msra.mxu0 0.0
        %3193 = vmatprep.subr.mxu0 0.0
        %3194 = vmatpush1.msra.mxu0 0.0
        %3195 = vmatprep.subr.mxu0 0.0
        %3196 = vmatpush1.msra.mxu0 %v3158
        %3197 = vmatprep.subr.mxu0 0.0
        %3198 = vmatpush1.msra.mxu0 %v3156
        %3199 = vmatprep.subr.mxu0 0.0
        %3200 = vmatpush2.msra.mxu0 0.0
        %3201 = vmatprep.subr.mxu0 0.0
        %3202 = vmatpush2.msra.mxu0 0.0
        %3203 = vmatprep.subr.mxu0 0.0
        %3204 = vmatpush2.msra.mxu0 0.0
        %3205 = vmatprep.subr.mxu0 0.0
        %3206 = vmatpush2.msra.mxu0 0.0
        %3207 = vmatprep.subr.mxu0 0.0
        %3208 = vmatpush2.msra.mxu0 0.0
        %3209 = vmatprep.subr.mxu0 0.0
        %3210 = vmatpush2.msra.mxu0 0.0
        %3211 = vmatprep.subr.mxu0 0.0
        %3212 = vmatpush2.msra.mxu0 0.0
        %3213 = vmatprep.subr.mxu0 0.0
        %3214 = vmatpush2.msra.mxu0 0.0
        %3215 = vmatprep.subr.mxu0 0.0
        %3216 = vmatpush2.msra.mxu0 0.0
        %3217 = vmatprep.subr.mxu0 0.0
        %3218 = vmatpush2.msra.mxu0 0.0
        %3219 = vmatprep.subr.mxu0 0.0
        %3220 = vmatpush2.msra.mxu0 0.0
        %3221 = vmatprep.subr.mxu0 0.0
        %3222 = vmatpush2.msra.mxu0 0.0
        %3223 = vmatprep.subr.mxu0 0.0
        %3224 = vmatpush2.msra.mxu0 0.0
        %3225 = vmatprep.subr.mxu0 0.0
        %3226 = vmatpush2.msra.mxu0 0.0
        %3227 = vmatprep.subr.mxu0 0.0
        %3228 = vmatpush2.msra.mxu0 0.0
        %3229 = vmatprep.subr.mxu0 0.0
        %3230 = vmatpush2.msra.mxu0 0.0
        %3231 = vmatprep.mubr.f32.mxu0 0.0
        %3232 = vmatmul.mubr.f32.gmra.mxu0 %v3162
        %v3233 = vpop.f32.mrf.mxu0
        %v3234 = vadd.f32 0.0, %v3233
        %v3235 = vpop.f32.mrf.mxu0
        %3236 = vmatprep.mubr.f32.mxu0 0.0
        %3237 = vmatmul.mubr.f32.gmra.mxu0 %v3165
        %v3238 = vpop.f32.mrf.mxu0
        %v3239 = vadd.f32 0.0, %v3238
        %v3240 = vpop.f32.mrf.mxu0
        %3241 = vdwg.mxu0
        %3242 = vrot.lane.b32.xlu0 %v2797, 64
        %v3243 = vpop.permute.xlu0 %3242
        %3244 = vrot.lane.b32.xlu0 %v2801, 64
        %v3245 = vpop.permute.xlu0 %3244
        %3246 = vrot.lane.b32.xlu0 %v2799, 64
        %v3247 = vpop.permute.xlu0 %3246
        %3248 = vrot.lane.b32.xlu0 %v2803, 64
        %v3249 = vpop.permute.xlu0 %3248
        %v3250 = vsel %vm972, %v3243, 0
        %v3252 = vsel %vm972, %v3245, 0
        %v3254 = vsel %vm972, %v3247, 0
        %v3256 = vsel %vm972, %v3249, 0
        %3258 = vmatprep.subr.mxu0 0.0
        %3259 = vmatpush1.xpose.msra.mxu0 0.0
        %3260 = vmatprep.subr.mxu0 0.0
        %3261 = vmatpush1.xpose.msra.mxu0 0.0
        %3262 = vmatprep.subr.mxu0 0.0
        %3263 = vmatpush1.xpose.msra.mxu0 0.0
        %3264 = vmatprep.subr.mxu0 0.0
        %3265 = vmatpush1.xpose.msra.mxu0 0.0
        %3266 = vmatprep.subr.mxu0 0.0
        %3267 = vmatpush1.xpose.msra.mxu0 0.0
        %3268 = vmatprep.subr.mxu0 0.0
        %3269 = vmatpush1.xpose.msra.mxu0 0.0
        %3270 = vmatprep.subr.mxu0 0.0
        %3271 = vmatpush1.xpose.msra.mxu0 0.0
        %3272 = vmatprep.subr.mxu0 0.0
        %3273 = vmatpush1.xpose.msra.mxu0 0.0
        %3274 = vmatprep.subr.mxu0 0.0
        %3275 = vmatpush1.xpose.msra.mxu0 0.0
        %3276 = vmatprep.subr.mxu0 0.0
        %3277 = vmatpush1.xpose.msra.mxu0 0.0
        %3278 = vmatprep.subr.mxu0 0.0
        %3279 = vmatpush1.xpose.msra.mxu0 0.0
        %3280 = vmatprep.subr.mxu0 0.0
        %3281 = vmatpush1.xpose.msra.mxu0 0.0
        %3282 = vmatprep.subr.mxu0 0.0
        %3283 = vmatpush1.xpose.msra.mxu0 0.0
        %3284 = vmatprep.subr.mxu0 0.0
        %3285 = vmatpush1.xpose.msra.mxu0 0.0
        %3286 = vmatprep.subr.mxu0 0.0
        %3287 = vmatpush1.xpose.msra.mxu0 %v3256
        %3288 = vmatprep.subr.mxu0 0.0
        %3289 = vmatpush1.xpose.msra.mxu0 %v3254
        %3290 = vmatprep.subr.mxu0 0.0
        %3291 = vmatpush2.xpose.msra.mxu0 0.0
        %3292 = vmatprep.subr.mxu0 0.0
        %3293 = vmatpush2.xpose.msra.mxu0 0.0
        %3294 = vmatprep.subr.mxu0 0.0
        %3295 = vmatpush2.xpose.msra.mxu0 0.0
        %3296 = vmatprep.subr.mxu0 0.0
        %3297 = vmatpush2.xpose.msra.mxu0 0.0
        %3298 = vmatprep.subr.mxu0 0.0
        %3299 = vmatpush2.xpose.msra.mxu0 0.0
        %3300 = vmatprep.subr.mxu0 0.0
        %3301 = vmatpush2.xpose.msra.mxu0 0.0
        %3302 = vmatprep.subr.mxu0 0.0
        %3303 = vmatpush2.xpose.msra.mxu0 0.0
        %3304 = vmatprep.subr.mxu0 0.0
        %3305 = vmatpush2.xpose.msra.mxu0 0.0
        %3306 = vmatprep.subr.mxu0 0.0
        %3307 = vmatpush2.xpose.msra.mxu0 0.0
        %3308 = vmatprep.subr.mxu0 0.0
        %3309 = vmatpush2.xpose.msra.mxu0 0.0
        %3310 = vmatprep.subr.mxu0 0.0
        %3311 = vmatpush2.xpose.msra.mxu0 0.0
        %3312 = vmatprep.subr.mxu0 0.0
        %3313 = vmatpush2.xpose.msra.mxu0 0.0
        %3314 = vmatprep.subr.mxu0 0.0
        %3315 = vmatpush2.xpose.msra.mxu0 0.0
        %3316 = vmatprep.subr.mxu0 0.0
        %3317 = vmatpush2.xpose.msra.mxu0 0.0
        %3318 = vmatprep.subr.mxu0 0.0
        %3319 = vmatpush2.xpose.msra.mxu0 0.0
        %3320 = vmatprep.subr.mxu0 0.0
        %3321 = vmatpush2.xpose.msra.mxu0 0.0
        %3322 = vmatprep.mubr.f32.mxu0 0.0
        %3323 = vmatmul.mubr.f32.gmra.mxu0 %v3250
        %v3324 = vpop.f32.mrf.mxu0
        %v3325 = vadd.f32 0.0, %v3324
        %v3326 = vpop.f32.mrf.mxu0
        %3327 = vmatprep.mubr.f32.mxu0 0.0
        %3328 = vmatmul.mubr.f32.gmra.mxu0 %v3252
        %v3329 = vpop.f32.mrf.mxu0
        %v3330 = vadd.f32 0.0, %v3329
        %v3331 = vpop.f32.mrf.mxu0
        %3332 = vdwg.mxu0
        %v3333 = vmul.f32 %v3325, 0.17677669
        %v3334 = vmul.f32 %v3330, 0.17677669
        %v3335 = vsel %vm1062, %v3333, -inf
        %3336 = vmax.xlane.f32.xlu0 %v3335
        %v3337 = vpop.xlane.xlu0 %3336
        %v3338 = vsel %vm1062, %v3334, -inf
        %3339 = vmax.xlane.f32.xlu0 %v3338
        %v3340 = vpop.xlane.xlu0 %3339
        %v3341 = vsub.f32 %v3333, %v3337
        %v3342 = vsub.f32 %v3334, %v3340
        %v3343 = vmul.f32 %v3341, 1.442695
        %v3344 = vpow.pop %v3343
        %v3345 = vmul.f32 %v3342, 1.442695
        %v3346 = vpow.pop %v3345
        %v3347 = vsel %vm1062, %v3344, 0.0
        %3348 = vadd.xlane.f32.xlu0 %v3347
        %v3349 = vpop.xlane.xlu0 %3348
        %v3350 = vsel %vm1062, %v3346, 0.0
        %3351 = vadd.xlane.f32.xlu0 %v3350
        %v3352 = vpop.xlane.xlu0 %3351
        %v3353 = vrcp.pop %v3349
        %v3354 = vrcp.pop %v3352
        %v3355 = vmul.f32 %v3344, %v3353
        %v3356 = vmul.f32 %v3346, %v3354
        %3357 = vrot.lane.b32.xlu0 %v2840, 64
        %v3358 = vpop.permute.xlu0 %3357
        %3359 = vrot.lane.b32.xlu0 %v2843, 64
        %v3360 = vpop.permute.xlu0 %3359
        %v3364 = vsel %vm1062, %v3355, 0
        %v3367 = vsel %vm1062, %v3356, 0
        %3369 = vmatprep.subr.mxu0 0.0
        %3370 = vmatpush1.msra.mxu0 0.0
        %3371 = vmatprep.subr.mxu0 0.0
        %3372 = vmatpush1.msra.mxu0 0.0
        %3373 = vmatprep.subr.mxu0 0.0
        %3374 = vmatpush1.msra.mxu0 0.0
        %3375 = vmatprep.subr.mxu0 0.0
        %3376 = vmatpush1.msra.mxu0 0.0
        %3377 = vmatprep.subr.mxu0 0.0
        %3378 = vmatpush1.msra.mxu0 0.0
        %3379 = vmatprep.subr.mxu0 0.0
        %3380 = vmatpush1.msra.mxu0 0.0
        %3381 = vmatprep.subr.mxu0 0.0
        %3382 = vmatpush1.msra.mxu0 0.0
        %3383 = vmatprep.subr.mxu0 0.0
        %3384 = vmatpush1.msra.mxu0 0.0
        %3385 = vmatprep.subr.mxu0 0.0
        %3386 = vmatpush1.msra.mxu0 0.0
        %3387 = vmatprep.subr.mxu0 0.0
        %3388 = vmatpush1.msra.mxu0 0.0
        %3389 = vmatprep.subr.mxu0 0.0
        %3390 = vmatpush1.msra.mxu0 0.0
        %3391 = vmatprep.subr.mxu0 0.0
        %3392 = vmatpush1.msra.mxu0 0.0
        %3393 = vmatprep.subr.mxu0 0.0
        %3394 = vmatpush1.msra.mxu0 0.0
        %3395 = vmatprep.subr.mxu0 0.0
        %3396 = vmatpush1.msra.mxu0 0.0
        %3397 = vmatprep.subr.mxu0 0.0
        %3398 = vmatpush1.msra.mxu0 %v3360
        %3399 = vmatprep.subr.mxu0 0.0
        %3400 = vmatpush1.msra.mxu0 %v3358
        %3401 = vmatprep.subr.mxu0 0.0
        %3402 = vmatpush2.msra.mxu0 0.0
        %3403 = vmatprep.subr.mxu0 0.0
        %3404 = vmatpush2.msra.mxu0 0.0
        %3405 = vmatprep.subr.mxu0 0.0
        %3406 = vmatpush2.msra.mxu0 0.0
        %3407 = vmatprep.subr.mxu0 0.0
        %3408 = vmatpush2.msra.mxu0 0.0
        %3409 = vmatprep.subr.mxu0 0.0
        %3410 = vmatpush2.msra.mxu0 0.0
        %3411 = vmatprep.subr.mxu0 0.0
        %3412 = vmatpush2.msra.mxu0 0.0
        %3413 = vmatprep.subr.mxu0 0.0
        %3414 = vmatpush2.msra.mxu0 0.0
        %3415 = vmatprep.subr.mxu0 0.0
        %3416 = vmatpush2.msra.mxu0 0.0
        %3417 = vmatprep.subr.mxu0 0.0
        %3418 = vmatpush2.msra.mxu0 0.0
        %3419 = vmatprep.subr.mxu0 0.0
        %3420 = vmatpush2.msra.mxu0 0.0
        %3421 = vmatprep.subr.mxu0 0.0
        %3422 = vmatpush2.msra.mxu0 0.0
        %3423 = vmatprep.subr.mxu0 0.0
        %3424 = vmatpush2.msra.mxu0 0.0
        %3425 = vmatprep.subr.mxu0 0.0
        %3426 = vmatpush2.msra.mxu0 0.0
        %3427 = vmatprep.subr.mxu0 0.0
        %3428 = vmatpush2.msra.mxu0 0.0
        %3429 = vmatprep.subr.mxu0 0.0
        %3430 = vmatpush2.msra.mxu0 0.0
        %3431 = vmatprep.subr.mxu0 0.0
        %3432 = vmatpush2.msra.mxu0 0.0
        %3433 = vmatprep.mubr.f32.mxu0 0.0
        %3434 = vmatmul.mubr.f32.gmra.mxu0 %v3364
        %v3435 = vpop.f32.mrf.mxu0
        %v3436 = vadd.f32 0.0, %v3435
        %v3437 = vpop.f32.mrf.mxu0
        %3438 = vmatprep.mubr.f32.mxu0 0.0
        %3439 = vmatmul.mubr.f32.gmra.mxu0 %v3367
        %v3440 = vpop.f32.mrf.mxu0
        %v3441 = vadd.f32 0.0, %v3440
        %v3442 = vpop.f32.mrf.mxu0
        %3443 = vdwg.mxu0
        %3444 = vrot.lane.b32.xlu0 %v2797, 32
        %v3445 = vpop.permute.xlu0 %3444
        %3446 = vrot.lane.b32.xlu0 %v2801, 32
        %v3447 = vpop.permute.xlu0 %3446
        %3448 = vrot.lane.b32.xlu0 %v2799, 32
        %v3449 = vpop.permute.xlu0 %3448
        %3450 = vrot.lane.b32.xlu0 %v2803, 32
        %v3451 = vpop.permute.xlu0 %3450
        %v3452 = vsel %vm972, %v3445, 0
        %v3454 = vsel %vm972, %v3447, 0
        %v3456 = vsel %vm972, %v3449, 0
        %v3458 = vsel %vm972, %v3451, 0
        %3460 = vmatprep.subr.mxu0 0.0
        %3461 = vmatpush1.xpose.msra.mxu0 0.0
        %3462 = vmatprep.subr.mxu0 0.0
        %3463 = vmatpush1.xpose.msra.mxu0 0.0
        %3464 = vmatprep.subr.mxu0 0.0
        %3465 = vmatpush1.xpose.msra.mxu0 0.0
        %3466 = vmatprep.subr.mxu0 0.0
        %3467 = vmatpush1.xpose.msra.mxu0 0.0
        %3468 = vmatprep.subr.mxu0 0.0
        %3469 = vmatpush1.xpose.msra.mxu0 0.0
        %3470 = vmatprep.subr.mxu0 0.0
        %3471 = vmatpush1.xpose.msra.mxu0 0.0
        %3472 = vmatprep.subr.mxu0 0.0
        %3473 = vmatpush1.xpose.msra.mxu0 0.0
        %3474 = vmatprep.subr.mxu0 0.0
        %3475 = vmatpush1.xpose.msra.mxu0 0.0
        %3476 = vmatprep.subr.mxu0 0.0
        %3477 = vmatpush1.xpose.msra.mxu0 0.0
        %3478 = vmatprep.subr.mxu0 0.0
        %3479 = vmatpush1.xpose.msra.mxu0 0.0
        %3480 = vmatprep.subr.mxu0 0.0
        %3481 = vmatpush1.xpose.msra.mxu0 0.0
        %3482 = vmatprep.subr.mxu0 0.0
        %3483 = vmatpush1.xpose.msra.mxu0 0.0
        %3484 = vmatprep.subr.mxu0 0.0
        %3485 = vmatpush1.xpose.msra.mxu0 0.0
        %3486 = vmatprep.subr.mxu0 0.0
        %3487 = vmatpush1.xpose.msra.mxu0 0.0
        %3488 = vmatprep.subr.mxu0 0.0
        %3489 = vmatpush1.xpose.msra.mxu0 %v3458
        %3490 = vmatprep.subr.mxu0 0.0
        %3491 = vmatpush1.xpose.msra.mxu0 %v3456
        %3492 = vmatprep.subr.mxu0 0.0
        %3493 = vmatpush2.xpose.msra.mxu0 0.0
        %3494 = vmatprep.subr.mxu0 0.0
        %3495 = vmatpush2.xpose.msra.mxu0 0.0
        %3496 = vmatprep.subr.mxu0 0.0
        %3497 = vmatpush2.xpose.msra.mxu0 0.0
        %3498 = vmatprep.subr.mxu0 0.0
        %3499 = vmatpush2.xpose.msra.mxu0 0.0
        %3500 = vmatprep.subr.mxu0 0.0
        %3501 = vmatpush2.xpose.msra.mxu0 0.0
        %3502 = vmatprep.subr.mxu0 0.0
        %3503 = vmatpush2.xpose.msra.mxu0 0.0
        %3504 = vmatprep.subr.mxu0 0.0
        %3505 = vmatpush2.xpose.msra.mxu0 0.0
        %3506 = vmatprep.subr.mxu0 0.0
        %3507 = vmatpush2.xpose.msra.mxu0 0.0
        %3508 = vmatprep.subr.mxu0 0.0
        %3509 = vmatpush2.xpose.msra.mxu0 0.0
        %3510 = vmatprep.subr.mxu0 0.0
        %3511 = vmatpush2.xpose.msra.mxu0 0.0
        %3512 = vmatprep.subr.mxu0 0.0
        %3513 = vmatpush2.xpose.msra.mxu0 0.0
        %3514 = vmatprep.subr.mxu0 0.0
        %3515 = vmatpush2.xpose.msra.mxu0 0.0
        %3516 = vmatprep.subr.mxu0 0.0
        %3517 = vmatpush2.xpose.msra.mxu0 0.0
        %3518 = vmatprep.subr.mxu0 0.0
        %3519 = vmatpush2.xpose.msra.mxu0 0.0
        %3520 = vmatprep.subr.mxu0 0.0
        %3521 = vmatpush2.xpose.msra.mxu0 0.0
        %3522 = vmatprep.subr.mxu0 0.0
        %3523 = vmatpush2.xpose.msra.mxu0 0.0
        %3524 = vmatprep.mubr.f32.mxu0 0.0
        %3525 = vmatmul.mubr.f32.gmra.mxu0 %v3452
        %v3526 = vpop.f32.mrf.mxu0
        %v3527 = vadd.f32 0.0, %v3526
        %v3528 = vpop.f32.mrf.mxu0
        %3529 = vmatprep.mubr.f32.mxu0 0.0
        %3530 = vmatmul.mubr.f32.gmra.mxu0 %v3454
        %v3531 = vpop.f32.mrf.mxu0
        %v3532 = vadd.f32 0.0, %v3531
        %v3533 = vpop.f32.mrf.mxu0
        %3534 = vdwg.mxu0
        %v3535 = vmul.f32 %v3527, 0.17677669
        %v3536 = vmul.f32 %v3532, 0.17677669
        %v3537 = vsel %vm1062, %v3535, -inf
        %3538 = vmax.xlane.f32.xlu0 %v3537
        %v3539 = vpop.xlane.xlu0 %3538
        %v3540 = vsel %vm1062, %v3536, -inf
        %3541 = vmax.xlane.f32.xlu0 %v3540
        %v3542 = vpop.xlane.xlu0 %3541
        %v3543 = vsub.f32 %v3535, %v3539
        %v3544 = vsub.f32 %v3536, %v3542
        %v3545 = vmul.f32 %v3543, 1.442695
        %v3546 = vpow.pop %v3545
        %v3547 = vmul.f32 %v3544, 1.442695
        %v3548 = vpow.pop %v3547
        %v3549 = vsel %vm1062, %v3546, 0.0
        %3550 = vadd.xlane.f32.xlu0 %v3549
        %v3551 = vpop.xlane.xlu0 %3550
        %v3552 = vsel %vm1062, %v3548, 0.0
        %3553 = vadd.xlane.f32.xlu0 %v3552
        %v3554 = vpop.xlane.xlu0 %3553
        %v3555 = vrcp.pop %v3551
        %v3556 = vrcp.pop %v3554
        %v3557 = vmul.f32 %v3546, %v3555
        %v3558 = vmul.f32 %v3548, %v3556
        %3559 = vrot.lane.b32.xlu0 %v2840, 32
        %v3560 = vpop.permute.xlu0 %3559
        %3561 = vrot.lane.b32.xlu0 %v2843, 32
        %v3562 = vpop.permute.xlu0 %3561
        %v3566 = vsel %vm1062, %v3557, 0
        %v3569 = vsel %vm1062, %v3558, 0
        %3571 = vmatprep.subr.mxu0 0.0
        %3572 = vmatpush1.msra.mxu0 0.0
        %3573 = vmatprep.subr.mxu0 0.0
        %3574 = vmatpush1.msra.mxu0 0.0
        %3575 = vmatprep.subr.mxu0 0.0
        %3576 = vmatpush1.msra.mxu0 0.0
        %3577 = vmatprep.subr.mxu0 0.0
        %3578 = vmatpush1.msra.mxu0 0.0
        %3579 = vmatprep.subr.mxu0 0.0
        %3580 = vmatpush1.msra.mxu0 0.0
        %3581 = vmatprep.subr.mxu0 0.0
        %3582 = vmatpush1.msra.mxu0 0.0
        %3583 = vmatprep.subr.mxu0 0.0
        %3584 = vmatpush1.msra.mxu0 0.0
        %3585 = vmatprep.subr.mxu0 0.0
        %3586 = vmatpush1.msra.mxu0 0.0
        %3587 = vmatprep.subr.mxu0 0.0
        %3588 = vmatpush1.msra.mxu0 0.0
        %3589 = vmatprep.subr.mxu0 0.0
        %3590 = vmatpush1.msra.mxu0 0.0
        %3591 = vmatprep.subr.mxu0 0.0
        %3592 = vmatpush1.msra.mxu0 0.0
        %3593 = vmatprep.subr.mxu0 0.0
        %3594 = vmatpush1.msra.mxu0 0.0
        %3595 = vmatprep.subr.mxu0 0.0
        %3596 = vmatpush1.msra.mxu0 0.0
        %3597 = vmatprep.subr.mxu0 0.0
        %3598 = vmatpush1.msra.mxu0 0.0
        %3599 = vmatprep.subr.mxu0 0.0
        %3600 = vmatpush1.msra.mxu0 %v3562
        %3601 = vmatprep.subr.mxu0 0.0
        %3602 = vmatpush1.msra.mxu0 %v3560
        %3603 = vmatprep.subr.mxu0 0.0
        %3604 = vmatpush2.msra.mxu0 0.0
        %3605 = vmatprep.subr.mxu0 0.0
        %3606 = vmatpush2.msra.mxu0 0.0
        %3607 = vmatprep.subr.mxu0 0.0
        %3608 = vmatpush2.msra.mxu0 0.0
        %3609 = vmatprep.subr.mxu0 0.0
        %3610 = vmatpush2.msra.mxu0 0.0
        %3611 = vmatprep.subr.mxu0 0.0
        %3612 = vmatpush2.msra.mxu0 0.0
        %3613 = vmatprep.subr.mxu0 0.0
        %3614 = vmatpush2.msra.mxu0 0.0
        %3615 = vmatprep.subr.mxu0 0.0
        %3616 = vmatpush2.msra.mxu0 0.0
        %3617 = vmatprep.subr.mxu0 0.0
        %3618 = vmatpush2.msra.mxu0 0.0
        %3619 = vmatprep.subr.mxu0 0.0
        %3620 = vmatpush2.msra.mxu0 0.0
        %3621 = vmatprep.subr.mxu0 0.0
        %3622 = vmatpush2.msra.mxu0 0.0
        %3623 = vmatprep.subr.mxu0 0.0
        %3624 = vmatpush2.msra.mxu0 0.0
        %3625 = vmatprep.subr.mxu0 0.0
        %3626 = vmatpush2.msra.mxu0 0.0
        %3627 = vmatprep.subr.mxu0 0.0
        %3628 = vmatpush2.msra.mxu0 0.0
        %3629 = vmatprep.subr.mxu0 0.0
        %3630 = vmatpush2.msra.mxu0 0.0
        %3631 = vmatprep.subr.mxu0 0.0
        %3632 = vmatpush2.msra.mxu0 0.0
        %3633 = vmatprep.subr.mxu0 0.0
        %3634 = vmatpush2.msra.mxu0 0.0
        %3635 = vmatprep.mubr.f32.mxu0 0.0
        %3636 = vmatmul.mubr.f32.gmra.mxu0 %v3566
        %v3637 = vpop.f32.mrf.mxu0
        %v3638 = vadd.f32 0.0, %v3637
        %v3639 = vpop.f32.mrf.mxu0
        %3640 = vmatprep.mubr.f32.mxu0 0.0
        %3641 = vmatmul.mubr.f32.gmra.mxu0 %v3569
        %v3642 = vpop.f32.mrf.mxu0
        %v3643 = vadd.f32 0.0, %v3642
        %v3644 = vpop.f32.mrf.mxu0
        %3645 = vdwg.mxu0
        %3648 = vrot.lane.b32.xlu0 %v3234, 32
        %v3649 = vpop.permute.xlu0 %3648
        %3650 = vrot.lane.b32.xlu0 %v3239, 32
        %v3651 = vpop.permute.xlu0 %3650
        %3656 = vrot.lane.b32.xlu0 %v3436, 64
        %v3657 = vpop.permute.xlu0 %3656
        %3658 = vrot.lane.b32.xlu0 %v3441, 64
        %v3659 = vpop.permute.xlu0 %3658
        %3664 = vrot.lane.b32.xlu0 %v3638, 96
        %v3665 = vpop.permute.xlu0 %3664
        %3666 = vrot.lane.b32.xlu0 %v3643, 96
        %v3667 = vpop.permute.xlu0 %3666
        %v3670 = vsel %vm972, %v3030, %v3649
        %v3671 = vsel %vm972, %v3035, %v3651
        %v3672 = vsel %vm1800, %v3670, %v3657
        %v3673 = vsel %vm1800, %v3671, %v3659
        %v3674 = vsel %vm1803, %v3672, %v3665
        %v3675 = vsel %vm1803, %v3673, %v3667
        %v3676 = vpack.c.bf16 %v3675, %v3674
        %s3677 = scalar_lea.vmem [#allocation7], 64
        %v3678 = vld [vmem:[%s3677] sm:$0xf]
        %v3679 = vld [vmem:[%s3677 + $0x4] sm:$0xf]
        %v3680 = vld [vmem:[%s3677 + $0x8] sm:$0xf]
        %v3681 = vld [vmem:[%s3677 + $0xc] sm:$0xf]
        %v3682 = vld [vmem:[%s3677 + $0x10] sm:$0xf]
        %v3683 = vld [vmem:[%s3677 + $0x14] sm:$0xf]
        %v3684 = vld [vmem:[%s3677 + $0x18] sm:$0xf]
        %v3685 = vld [vmem:[%s3677 + $0x1c] sm:$0xf]
        %v3686 = vld [vmem:[%s3677 + $0x20] sm:$0xf]
        %v3687 = vld [vmem:[%s3677 + $0x24] sm:$0xf]
        %v3688 = vld [vmem:[%s3677 + $0x28] sm:$0xf]
        %v3689 = vld [vmem:[%s3677 + $0x2c] sm:$0xf]
        %v3690 = vld [vmem:[%s3677 + $0x30] sm:$0xf]
        %v3691 = vld [vmem:[%s3677 + $0x34] sm:$0xf]
        %v3692 = vld [vmem:[%s3677 + $0x38] sm:$0xf]
        %v3693 = vld [vmem:[%s3677 + $0x3c] sm:$0xf]
        %s3694 = scalar_lea.vmem %s5, 1
        %v3695 = vld [vmem:[%s3694] sm:$0x1]
        %v3697 = vlaneseq
        %v3698 = vshrl.u32 %v3697, 7
        %v3699 = vsub.s32 0, %v3698
        %v3700 = vrot.slane %v3695, %v3699
        %v3718 = vunpack.c.l.b16 %v3678
        %v3719 = vunpack.c.l.b16 %v3679
        %v3720 = vunpack.c.l.b16 %v3680
        %v3721 = vunpack.c.l.b16 %v3681
        %v3722 = vunpack.c.l.b16 %v3682
        %v3723 = vunpack.c.l.b16 %v3683
        %v3724 = vunpack.c.l.b16 %v3684
        %v3725 = vunpack.c.l.b16 %v3685
        %v3726 = vunpack.c.l.b16 %v3686
        %v3727 = vunpack.c.l.b16 %v3687
        %v3728 = vunpack.c.l.b16 %v3688
        %v3729 = vunpack.c.l.b16 %v3689
        %v3730 = vunpack.c.l.b16 %v3690
        %v3731 = vunpack.c.l.b16 %v3691
        %v3732 = vunpack.c.l.b16 %v3692
        %v3733 = vunpack.c.l.b16 %v3693
        %v3734 = vpack.c.b16 %v3719, %v3718
        %v3735 = vpack.c.b16 %v3721, %v3720
        %v3736 = vpack.c.b16 %v3723, %v3722
        %v3737 = vpack.c.b16 %v3725, %v3724
        %v3738 = vpack.c.b16 %v3727, %v3726
        %v3739 = vpack.c.b16 %v3729, %v3728
        %v3740 = vpack.c.b16 %v3731, %v3730
        %v3741 = vpack.c.b16 %v3733, %v3732
        %3750 = vmatprep.subr.bf16.mxu0 0
        %3751 = vmatpush1.bf16.msra.mxu0 %v3741
        %3752 = vmatprep.subr.bf16.mxu0 0
        %3753 = vmatpush1.bf16.msra.mxu0 %v3740
        %3754 = vmatprep.subr.bf16.mxu0 0
        %3755 = vmatpush1.bf16.msra.mxu0 %v3739
        %3756 = vmatprep.subr.bf16.mxu0 0
        %3757 = vmatpush1.bf16.msra.mxu0 %v3738
        %3758 = vmatprep.subr.bf16.mxu0 0
        %3759 = vmatpush1.bf16.msra.mxu0 %v3737
        %3760 = vmatprep.subr.bf16.mxu0 0
        %3761 = vmatpush1.bf16.msra.mxu0 %v3736
        %3762 = vmatprep.subr.bf16.mxu0 0
        %3763 = vmatpush1.bf16.msra.mxu0 %v3735
        %3764 = vmatprep.subr.bf16.mxu0 0
        %3765 = vmatpush1.bf16.msra.mxu0 %v3734
        %3766 = vmatprep.subr.bf16.mxu0 0
        %3767 = vmatpush2.bf16.msra.mxu0 0
        %3768 = vmatprep.subr.bf16.mxu0 0
        %3769 = vmatpush2.bf16.msra.mxu0 0
        %3770 = vmatprep.subr.bf16.mxu0 0
        %3771 = vmatpush2.bf16.msra.mxu0 0
        %3772 = vmatprep.subr.bf16.mxu0 0
        %3773 = vmatpush2.bf16.msra.mxu0 0
        %3774 = vmatprep.subr.bf16.mxu0 0
        %3775 = vmatpush2.bf16.msra.mxu0 0
        %3776 = vmatprep.subr.bf16.mxu0 0
        %3777 = vmatpush2.bf16.msra.mxu0 0
        %3778 = vmatprep.subr.bf16.mxu0 0
        %3779 = vmatpush2.bf16.msra.mxu0 0
        %3780 = vmatprep.subr.bf16.mxu0 0
        %3781 = vmatpush2.bf16.msra.mxu0 0
        %3782 = vmatprep.mubr.bf16.mxu0 0
        %3783 = vmatmul.mubr.bf16.gmra.mxu0 %v3676
        %v3784 = vpop.f32.mrf.mxu0
        %v3785 = vadd.f32 %v3700, %v3784
        %v3786 = vpop.f32.mrf.mxu0
        %v3787 = vpop.f32.mrf.mxu0
        %v3788 = vadd.f32 %v3700, %v3787
        %v3789 = vpop.f32.mrf.mxu0
        %3790 = vdwg.mxu0
        %v3791 = vadd.f32 %v2576, %v3785
        %v3792 = vadd.f32 %v2577, %v3788
        %3793 = vadd.xlane.f32.xlu0 %v3791
        %v3794 = vpop.xlane.xlu0 %3793
        %3795 = vadd.xlane.f32.xlu0 %v3792
        %v3796 = vpop.xlane.xlu0 %3795
        %v3797 = vmul.f32 %v3794, %v1925
        %v3798 = vmul.f32 %v3796, %v1925
        %v3799 = vsub.f32 %v3791, %v3797
        %v3800 = vsub.f32 %v3792, %v3798
        %v3801 = vmul.f32 %v3799, %v3799
        %v3802 = vmul.f32 %v3800, %v3800
        %3803 = vadd.xlane.f32.xlu0 %v3801
        %v3804 = vpop.xlane.xlu0 %3803
        %3805 = vadd.xlane.f32.xlu0 %v3802
        %v3806 = vpop.xlane.xlu0 %3805
        %v3807 = vmul.f32 %v3804, %v1925
        %v3808 = vmul.f32 %v3806, %v1925
        %v3809 = vadd.f32 %v3807, 1e-05
        %v3810 = vadd.f32 %v3808, 1e-05
        %v3811 = vrsqrt.pop %v3809
        %v3812 = vrsqrt.pop %v3810
        %v3813 = vmul.f32 %v3799, %v3811
        %v3814 = vmul.f32 %v3800, %v3812
        %v3815 = vlaneseq
        %v3816 = vshrl.u32 %v3815, 7
        %v3817 = vsub.s32 0, %v3816
        %v3818 = vrot.slane %v2579, %v3817
        %v3819 = vmul.f32 %v3813, %v3818
        %v3820 = vmul.f32 %v3814, %v3818
        %v3821 = vlaneseq
        %v3822 = vshrl.u32 %v3821, 7
        %v3823 = vsub.s32 0, %v3822
        %v3824 = vrot.slane %v2581, %v3823
        %v3825 = vadd.f32 %v3819, %v3824
        %v3826 = vadd.f32 %v3820, %v3824
        %s3827 = scalar_lea.vmem [#allocation8], 64
        %v3828 = vld [vmem:[%s3827] sm:$0xf]
        %v3829 = vld [vmem:[%s3827 + $0x4] sm:$0xf]
        %v3830 = vld [vmem:[%s3827 + $0x8] sm:$0xf]
        %v3831 = vld [vmem:[%s3827 + $0xc] sm:$0xf]
        %v3832 = vld [vmem:[%s3827 + $0x10] sm:$0xf]
        %v3833 = vld [vmem:[%s3827 + $0x14] sm:$0xf]
        %v3834 = vld [vmem:[%s3827 + $0x18] sm:$0xf]
        %v3835 = vld [vmem:[%s3827 + $0x1c] sm:$0xf]
        %v3836 = vld [vmem:[%s3827 + $0x20] sm:$0xf]
        %v3837 = vld [vmem:[%s3827 + $0x24] sm:$0xf]
        %v3838 = vld [vmem:[%s3827 + $0x28] sm:$0xf]
        %v3839 = vld [vmem:[%s3827 + $0x2c] sm:$0xf]
        %v3840 = vld [vmem:[%s3827 + $0x30] sm:$0xf]
        %v3841 = vld [vmem:[%s3827 + $0x34] sm:$0xf]
        %v3842 = vld [vmem:[%s3827 + $0x38] sm:$0xf]
        %v3843 = vld [vmem:[%s3827 + $0x3c] sm:$0xf]
        %s3844 = scalar_lea.vmem [#allocation10], 1
        %v3845 = vld [vmem:[%s3844] sm:$0x1]
        %v3862 = vunpack.c.l.b16 %v3828
        %v3863 = vunpack.c.l.b16 %v3829
        %v3864 = vunpack.c.l.b16 %v3830
        %v3865 = vunpack.c.l.b16 %v3831
        %v3866 = vunpack.c.l.b16 %v3832
        %v3867 = vunpack.c.l.b16 %v3833
        %v3868 = vunpack.c.l.b16 %v3834
        %v3869 = vunpack.c.l.b16 %v3835
        %v3870 = vunpack.c.l.b16 %v3836
        %v3871 = vunpack.c.l.b16 %v3837
        %v3872 = vunpack.c.l.b16 %v3838
        %v3873 = vunpack.c.l.b16 %v3839
        %v3874 = vunpack.c.l.b16 %v3840
        %v3875 = vunpack.c.l.b16 %v3841
        %v3876 = vunpack.c.l.b16 %v3842
        %v3877 = vunpack.c.l.b16 %v3843
        %v3878 = vpack.c.b16 %v3863, %v3862
        %v3879 = vpack.c.b16 %v3865, %v3864
        %v3880 = vpack.c.b16 %v3867, %v3866
        %v3881 = vpack.c.b16 %v3869, %v3868
        %v3882 = vpack.c.b16 %v3871, %v3870
        %v3883 = vpack.c.b16 %v3873, %v3872
        %v3884 = vpack.c.b16 %v3875, %v3874
        %v3885 = vpack.c.b16 %v3877, %v3876
        %3894 = vmatprep.subr.bf16.mxu0 0
        %3895 = vmatpush1.bf16.msra.mxu0 %v3885
        %3896 = vmatprep.subr.bf16.mxu0 0
        %3897 = vmatpush1.bf16.msra.mxu0 %v3884
        %3898 = vmatprep.subr.bf16.mxu0 0
        %3899 = vmatpush1.bf16.msra.mxu0 %v3883
        %3900 = vmatprep.subr.bf16.mxu0 0
        %3901 = vmatpush1.bf16.msra.mxu0 %v3882
        %3902 = vmatprep.subr.bf16.mxu0 0
        %3903 = vmatpush1.bf16.msra.mxu0 %v3881
        %3904 = vmatprep.subr.bf16.mxu0 0
        %3905 = vmatpush1.bf16.msra.mxu0 %v3880
        %3906 = vmatprep.subr.bf16.mxu0 0
        %3907 = vmatpush1.bf16.msra.mxu0 %v3879
        %3908 = vmatprep.subr.bf16.mxu0 0
        %3909 = vmatpush1.bf16.msra.mxu0 %v3878
        %3910 = vmatprep.subr.bf16.mxu0 0
        %3911 = vmatpush2.bf16.msra.mxu0 0
        %3912 = vmatprep.subr.bf16.mxu0 0
        %3913 = vmatpush2.bf16.msra.mxu0 0
        %3914 = vmatprep.subr.bf16.mxu0 0
        %3915 = vmatpush2.bf16.msra.mxu0 0
        %3916 = vmatprep.subr.bf16.mxu0 0
        %3917 = vmatpush2.bf16.msra.mxu0 0
        %3918 = vmatprep.subr.bf16.mxu0 0
        %3919 = vmatpush2.bf16.msra.mxu0 0
        %3920 = vmatprep.subr.bf16.mxu0 0
        %3921 = vmatpush2.bf16.msra.mxu0 0
        %3922 = vmatprep.subr.bf16.mxu0 0
        %3923 = vmatpush2.bf16.msra.mxu0 0
        %3924 = vmatprep.subr.bf16.mxu0 0
        %3925 = vmatpush2.bf16.msra.mxu0 0
        %3926 = vmatprep.mubr.bf16.mxu0 0
        %3927 = vmatmul.mubr.bf16.gmra.mxu0 %v1956
        %v3928 = vpop.f32.mrf.mxu0
        %v3929 = vadd.f32 %v3845, %v3928
        %v3930 = vpop.f32.mrf.mxu0
        %v3931 = vpop.f32.mrf.mxu0
        %v3932 = vpop.f32.mrf.mxu0
        %3933 = vdwg.mxu0
        %v3934 = vpack.c.bf16 %v3929, %v3929
        %s3935 = scalar_lea.vmem [#allocation11], 64
        %v3936 = vld [vmem:[%s3935] sm:$0xf]
        %v3937 = vld [vmem:[%s3935 + $0x4] sm:$0xf]
        %v3938 = vld [vmem:[%s3935 + $0x8] sm:$0xf]
        %v3939 = vld [vmem:[%s3935 + $0xc] sm:$0xf]
        %v3940 = vld [vmem:[%s3935 + $0x10] sm:$0xf]
        %v3941 = vld [vmem:[%s3935 + $0x14] sm:$0xf]
        %v3942 = vld [vmem:[%s3935 + $0x18] sm:$0xf]
        %v3943 = vld [vmem:[%s3935 + $0x1c] sm:$0xf]
        %v3944 = vld [vmem:[%s3935 + $0x20] sm:$0xf]
        %v3945 = vld [vmem:[%s3935 + $0x24] sm:$0xf]
        %v3946 = vld [vmem:[%s3935 + $0x28] sm:$0xf]
        %v3947 = vld [vmem:[%s3935 + $0x2c] sm:$0xf]
        %v3948 = vld [vmem:[%s3935 + $0x30] sm:$0xf]
        %v3949 = vld [vmem:[%s3935 + $0x34] sm:$0xf]
        %v3950 = vld [vmem:[%s3935 + $0x38] sm:$0xf]
        %v3951 = vld [vmem:[%s3935 + $0x3c] sm:$0xf]
        %s3952 = scalar_lea.vmem %s9, 1
        %v3953 = vld [vmem:[%s3952] sm:$0x1]
        %v3970 = vunpack.c.l.b16 %v3936
        %v3971 = vunpack.c.l.b16 %v3937
        %v3972 = vunpack.c.l.b16 %v3938
        %v3973 = vunpack.c.l.b16 %v3939
        %v3974 = vunpack.c.l.b16 %v3940
        %v3975 = vunpack.c.l.b16 %v3941
        %v3976 = vunpack.c.l.b16 %v3942
        %v3977 = vunpack.c.l.b16 %v3943
        %v3978 = vunpack.c.l.b16 %v3944
        %v3979 = vunpack.c.l.b16 %v3945
        %v3980 = vunpack.c.l.b16 %v3946
        %v3981 = vunpack.c.l.b16 %v3947
        %v3982 = vunpack.c.l.b16 %v3948
        %v3983 = vunpack.c.l.b16 %v3949
        %v3984 = vunpack.c.l.b16 %v3950
        %v3985 = vunpack.c.l.b16 %v3951
        %v3986 = vpack.c.b16 %v3971, %v3970
        %v3987 = vpack.c.b16 %v3973, %v3972
        %v3988 = vpack.c.b16 %v3975, %v3974
        %v3989 = vpack.c.b16 %v3977, %v3976
        %v3990 = vpack.c.b16 %v3979, %v3978
        %v3991 = vpack.c.b16 %v3981, %v3980
        %v3992 = vpack.c.b16 %v3983, %v3982
        %v3993 = vpack.c.b16 %v3985, %v3984
        %4002 = vmatprep.subr.bf16.mxu0 0
        %4003 = vmatpush1.bf16.msra.mxu0 %v3993
        %4004 = vmatprep.subr.bf16.mxu0 0
        %4005 = vmatpush1.bf16.msra.mxu0 %v3992
        %4006 = vmatprep.subr.bf16.mxu0 0
        %4007 = vmatpush1.bf16.msra.mxu0 %v3991
        %4008 = vmatprep.subr.bf16.mxu0 0
        %4009 = vmatpush1.bf16.msra.mxu0 %v3990
        %4010 = vmatprep.subr.bf16.mxu0 0
        %4011 = vmatpush1.bf16.msra.mxu0 %v3989
        %4012 = vmatprep.subr.bf16.mxu0 0
        %4013 = vmatpush1.bf16.msra.mxu0 %v3988
        %4014 = vmatprep.subr.bf16.mxu0 0
        %4015 = vmatpush1.bf16.msra.mxu0 %v3987
        %4016 = vmatprep.subr.bf16.mxu0 0
        %4017 = vmatpush1.bf16.msra.mxu0 %v3986
        %4018 = vmatprep.subr.bf16.mxu0 0
        %4019 = vmatpush2.bf16.msra.mxu0 0
        %4020 = vmatprep.subr.bf16.mxu0 0
        %4021 = vmatpush2.bf16.msra.mxu0 0
        %4022 = vmatprep.subr.bf16.mxu0 0
        %4023 = vmatpush2.bf16.msra.mxu0 0
        %4024 = vmatprep.subr.bf16.mxu0 0
        %4025 = vmatpush2.bf16.msra.mxu0 0
        %4026 = vmatprep.subr.bf16.mxu0 0
        %4027 = vmatpush2.bf16.msra.mxu0 0
        %4028 = vmatprep.subr.bf16.mxu0 0
        %4029 = vmatpush2.bf16.msra.mxu0 0
        %4030 = vmatprep.subr.bf16.mxu0 0
        %4031 = vmatpush2.bf16.msra.mxu0 0
        %4032 = vmatprep.subr.bf16.mxu0 0
        %4033 = vmatpush2.bf16.msra.mxu0 0
        %4034 = vmatprep.mubr.bf16.mxu0 0
        %4035 = vmatmul.mubr.bf16.gmra.mxu0 %v3934
        %v4036 = vpop.f32.mrf.mxu0
        %v4037 = vadd.f32 %v3953, %v4036
        %v4038 = vpop.f32.mrf.mxu0
        %v4039 = vpop.f32.mrf.mxu0
        %v4040 = vpop.f32.mrf.mxu0
        %4041 = vdwg.mxu0
        %v4042 = vlaneseq
        %v4043 = vshrl.u32 %v4042, 7
        %v4044 = vsub.s32 0, %v4043
        %v4045 = vrot.slane %v4037, %v4044
        %v4046 = vadd.f32 %v3825, %v4045
        %v4047 = vadd.f32 %v3826, %v4045
        %4048 = vadd.xlane.f32.xlu0 %v4046
        %v4049 = vpop.xlane.xlu0 %4048
        %4050 = vadd.xlane.f32.xlu0 %v4047
        %v4051 = vpop.xlane.xlu0 %4050
        %v4052 = vmul.f32 %v4049, %v1925
        %v4053 = vmul.f32 %v4051, %v1925
        %v4054 = vsub.f32 %v4046, %v4052
        %v4055 = vsub.f32 %v4047, %v4053
        %v4056 = vmul.f32 %v4054, %v4054
        %v4057 = vmul.f32 %v4055, %v4055
        %4058 = vadd.xlane.f32.xlu0 %v4056
        %v4059 = vpop.xlane.xlu0 %4058
        %4060 = vadd.xlane.f32.xlu0 %v4057
        %v4061 = vpop.xlane.xlu0 %4060
        %v4062 = vmul.f32 %v4059, %v1925
        %v4063 = vmul.f32 %v4061, %v1925
        %v4064 = vadd.f32 %v4062, 1e-05
        %v4065 = vadd.f32 %v4063, 1e-05
        %v4066 = vrsqrt.pop %v4064
        %v4067 = vrsqrt.pop %v4065
        %v4068 = vmul.f32 %v4054, %v4066
        %v4069 = vmul.f32 %v4055, %v4067
        %v4070 = vlaneseq
        %v4071 = vshrl.u32 %v4070, 7
        %v4072 = vsub.s32 1, %v4071
        %v4073 = vrot.slane %v2579, %v4072
        %v4074 = vmul.f32 %v4068, %v4073
        %v4075 = vmul.f32 %v4069, %v4073
        %v4076 = vlaneseq
        %v4077 = vshrl.u32 %v4076, 7
        %v4078 = vsub.s32 1, %v4077
        %v4079 = vrot.slane %v2581, %v4078
        %v4080 = vadd.f32 %v4074, %v4079
        %v4081 = vadd.f32 %v4075, %v4079
        %v4082 = vpack.c.bf16 %v4081, %v4080
        %s4083 = scalar_lea.vmem [#allocation13], 128
        %v4084 = vld [vmem:[%s4083] sm:$0xff]
        %v4085 = vld [vmem:[%s4083 + $0x8] sm:$0xff]
        %v4086 = vld [vmem:[%s4083 + $0x10] sm:$0xff]
        %v4087 = vld [vmem:[%s4083 + $0x18] sm:$0xff]
        %v4088 = vld [vmem:[%s4083 + $0x20] sm:$0xff]
        %v4089 = vld [vmem:[%s4083 + $0x28] sm:$0xff]
        %v4090 = vld [vmem:[%s4083 + $0x30] sm:$0xff]
        %v4091 = vld [vmem:[%s4083 + $0x38] sm:$0xff]
        %v4092 = vld [vmem:[%s4083 + $0x40] sm:$0xff]
        %v4093 = vld [vmem:[%s4083 + $0x48] sm:$0xff]
        %v4094 = vld [vmem:[%s4083 + $0x50] sm:$0xff]
        %v4095 = vld [vmem:[%s4083 + $0x58] sm:$0xff]
        %v4096 = vld [vmem:[%s4083 + $0x60] sm:$0xff]
        %v4097 = vld [vmem:[%s4083 + $0x68] sm:$0xff]
        %v4098 = vld [vmem:[%s4083 + $0x70] sm:$0xff]
        %v4099 = vld [vmem:[%s4083 + $0x78] sm:$0xff]
        %s4100 = scalar_lea.vmem %s13, 2
        %v4101 = vld [vmem:[%s4100] sm:$0x3]
        %v4103 = vlaneseq
        %v4104 = vshrl.u32 %v4103, 7
        %v4105 = vsub.s32 0, %v4104
        %v4106 = vrot.slane %v4101, %v4105
        %v4107 = vlaneseq
        %v4108 = vshrl.u32 %v4107, 7
        %v4109 = vsub.s32 1, %v4108
        %v4110 = vrot.slane %v4101, %v4109
        %v4129 = vunpack.c.l.b16 %v4084
        %v4130 = vunpack.c.h.b16 %v4084
        %v4131 = vunpack.c.l.b16 %v4085
        %v4132 = vunpack.c.h.b16 %v4085
        %v4133 = vunpack.c.l.b16 %v4086
        %v4134 = vunpack.c.h.b16 %v4086
        %v4135 = vunpack.c.l.b16 %v4087
        %v4136 = vunpack.c.h.b16 %v4087
        %v4137 = vunpack.c.l.b16 %v4088
        %v4138 = vunpack.c.h.b16 %v4088
        %v4139 = vunpack.c.l.b16 %v4089
        %v4140 = vunpack.c.h.b16 %v4089
        %v4141 = vunpack.c.l.b16 %v4090
        %v4142 = vunpack.c.h.b16 %v4090
        %v4143 = vunpack.c.l.b16 %v4091
        %v4144 = vunpack.c.h.b16 %v4091
        %v4145 = vunpack.c.l.b16 %v4092
        %v4146 = vunpack.c.h.b16 %v4092
        %v4147 = vunpack.c.l.b16 %v4093
        %v4148 = vunpack.c.h.b16 %v4093
        %v4149 = vunpack.c.l.b16 %v4094
        %v4150 = vunpack.c.h.b16 %v4094
        %v4151 = vunpack.c.l.b16 %v4095
        %v4152 = vunpack.c.h.b16 %v4095
        %v4153 = vunpack.c.l.b16 %v4096
        %v4154 = vunpack.c.h.b16 %v4096
        %v4155 = vunpack.c.l.b16 %v4097
        %v4156 = vunpack.c.h.b16 %v4097
        %v4157 = vunpack.c.l.b16 %v4098
        %v4158 = vunpack.c.h.b16 %v4098
        %v4159 = vunpack.c.l.b16 %v4099
        %v4160 = vunpack.c.h.b16 %v4099
        %v4161 = vpack.c.b16 %v4131, %v4129
        %v4162 = vpack.c.b16 %v4132, %v4130
        %v4163 = vpack.c.b16 %v4135, %v4133
        %v4164 = vpack.c.b16 %v4136, %v4134
        %v4165 = vpack.c.b16 %v4139, %v4137
        %v4166 = vpack.c.b16 %v4140, %v4138
        %v4167 = vpack.c.b16 %v4143, %v4141
        %v4168 = vpack.c.b16 %v4144, %v4142
        %v4169 = vpack.c.b16 %v4147, %v4145
        %v4170 = vpack.c.b16 %v4148, %v4146
        %v4171 = vpack.c.b16 %v4151, %v4149
        %v4172 = vpack.c.b16 %v4152, %v4150
        %v4173 = vpack.c.b16 %v4155, %v4153
        %v4174 = vpack.c.b16 %v4156, %v4154
        %v4175 = vpack.c.b16 %v4159, %v4157
        %v4176 = vpack.c.b16 %v4160, %v4158
        %4193 = vmatprep.subr.bf16.mxu0 %v4176
        %4194 = vmatpush1.bf16.msra.mxu0 %v4175
        %4195 = vmatprep.subr.bf16.mxu0 %v4174
        %4196 = vmatpush1.bf16.msra.mxu0 %v4173
        %4197 = vmatprep.subr.bf16.mxu0 %v4172
        %4198 = vmatpush1.bf16.msra.mxu0 %v4171
        %4199 = vmatprep.subr.bf16.mxu0 %v4170
        %4200 = vmatpush1.bf16.msra.mxu0 %v4169
        %4201 = vmatprep.subr.bf16.mxu0 %v4168
        %4202 = vmatpush1.bf16.msra.mxu0 %v4167
        %4203 = vmatprep.subr.bf16.mxu0 %v4166
        %4204 = vmatpush1.bf16.msra.mxu0 %v4165
        %4205 = vmatprep.subr.bf16.mxu0 %v4164
        %4206 = vmatpush1.bf16.msra.mxu0 %v4163
        %4207 = vmatprep.subr.bf16.mxu0 %v4162
        %4208 = vmatpush1.bf16.msra.mxu0 %v4161
        %4209 = vmatprep.subr.bf16.mxu0 0
        %4210 = vmatpush2.bf16.msra.mxu0 0
        %4211 = vmatprep.subr.bf16.mxu0 0
        %4212 = vmatpush2.bf16.msra.mxu0 0
        %4213 = vmatprep.subr.bf16.mxu0 0
        %4214 = vmatpush2.bf16.msra.mxu0 0
        %4215 = vmatprep.subr.bf16.mxu0 0
        %4216 = vmatpush2.bf16.msra.mxu0 0
        %4217 = vmatprep.subr.bf16.mxu0 0
        %4218 = vmatpush2.bf16.msra.mxu0 0
        %4219 = vmatprep.subr.bf16.mxu0 0
        %4220 = vmatpush2.bf16.msra.mxu0 0
        %4221 = vmatprep.subr.bf16.mxu0 0
        %4222 = vmatpush2.bf16.msra.mxu0 0
        %4223 = vmatprep.subr.bf16.mxu0 0
        %4224 = vmatpush2.bf16.msra.mxu0 0
        %4225 = vmatprep.mubr.bf16.mxu0 0
        %4226 = vmatmul.mubr.bf16.gmra.mxu0 %v4082
        %v4227 = vpop.f32.mrf.mxu0
        %v4228 = vadd.f32 %v4106, %v4227
        %v4229 = vpop.f32.mrf.mxu0
        %v4230 = vadd.f32 %v4110, %v4229
        %v4231 = vpop.f32.mrf.mxu0
        %v4232 = vadd.f32 %v4106, %v4231
        %v4233 = vpop.f32.mrf.mxu0
        %v4234 = vadd.f32 %v4110, %v4233
        %4235 = vdwg.mxu0
        %v4236 = vmax.f32 %v4228, 0.0
        %v4237 = vmax.f32 %v4230, 0.0
        %v4238 = vmax.f32 %v4232, 0.0
        %v4239 = vmax.f32 %v4234, 0.0
        %v4240 = vpack.c.bf16 %v4238, %v4236
        %v4241 = vpack.c.bf16 %v4239, %v4237
        %s4242 = scalar_lea.vmem [#allocation14], 128
        %v4243 = vld [vmem:[%s4242] sm:$0xf]
        %v4244 = vld [vmem:[%s4242 + $0x4] sm:$0xf]
        %v4245 = vld [vmem:[%s4242 + $0x8] sm:$0xf]
        %v4246 = vld [vmem:[%s4242 + $0xc] sm:$0xf]
        %v4247 = vld [vmem:[%s4242 + $0x10] sm:$0xf]
        %v4248 = vld [vmem:[%s4242 + $0x14] sm:$0xf]
        %v4249 = vld [vmem:[%s4242 + $0x18] sm:$0xf]
        %v4250 = vld [vmem:[%s4242 + $0x1c] sm:$0xf]
        %v4251 = vld [vmem:[%s4242 + $0x20] sm:$0xf]
        %v4252 = vld [vmem:[%s4242 + $0x24] sm:$0xf]
        %v4253 = vld [vmem:[%s4242 + $0x28] sm:$0xf]
        %v4254 = vld [vmem:[%s4242 + $0x2c] sm:$0xf]
        %v4255 = vld [vmem:[%s4242 + $0x30] sm:$0xf]
        %v4256 = vld [vmem:[%s4242 + $0x34] sm:$0xf]
        %v4257 = vld [vmem:[%s4242 + $0x38] sm:$0xf]
        %v4258 = vld [vmem:[%s4242 + $0x3c] sm:$0xf]
        %v4259 = vld [vmem:[%s4242 + $0x40] sm:$0xf]
        %v4260 = vld [vmem:[%s4242 + $0x44] sm:$0xf]
        %v4261 = vld [vmem:[%s4242 + $0x48] sm:$0xf]
        %v4262 = vld [vmem:[%s4242 + $0x4c] sm:$0xf]
        %v4263 = vld [vmem:[%s4242 + $0x50] sm:$0xf]
        %v4264 = vld [vmem:[%s4242 + $0x54] sm:$0xf]
        %v4265 = vld [vmem:[%s4242 + $0x58] sm:$0xf]
        %v4266 = vld [vmem:[%s4242 + $0x5c] sm:$0xf]
        %v4267 = vld [vmem:[%s4242 + $0x60] sm:$0xf]
        %v4268 = vld [vmem:[%s4242 + $0x64] sm:$0xf]
        %v4269 = vld [vmem:[%s4242 + $0x68] sm:$0xf]
        %v4270 = vld [vmem:[%s4242 + $0x6c] sm:$0xf]
        %v4271 = vld [vmem:[%s4242 + $0x70] sm:$0xf]
        %v4272 = vld [vmem:[%s4242 + $0x74] sm:$0xf]
        %v4273 = vld [vmem:[%s4242 + $0x78] sm:$0xf]
        %v4274 = vld [vmem:[%s4242 + $0x7c] sm:$0xf]
        %s4275 = scalar_lea.vmem %s15, 1
        %v4276 = vld [vmem:[%s4275] sm:$0x1]
        %v4278 = vlaneseq
        %v4279 = vshrl.u32 %v4278, 7
        %v4280 = vsub.s32 0, %v4279
        %v4281 = vrot.slane %v4276, %v4280
        %v4315 = vunpack.c.l.b16 %v4243
        %v4316 = vunpack.c.l.b16 %v4244
        %v4317 = vunpack.c.l.b16 %v4245
        %v4318 = vunpack.c.l.b16 %v4246
        %v4319 = vunpack.c.l.b16 %v4247
        %v4320 = vunpack.c.l.b16 %v4248
        %v4321 = vunpack.c.l.b16 %v4249
        %v4322 = vunpack.c.l.b16 %v4250
        %v4323 = vunpack.c.l.b16 %v4251
        %v4324 = vunpack.c.l.b16 %v4252
        %v4325 = vunpack.c.l.b16 %v4253
        %v4326 = vunpack.c.l.b16 %v4254
        %v4327 = vunpack.c.l.b16 %v4255
        %v4328 = vunpack.c.l.b16 %v4256
        %v4329 = vunpack.c.l.b16 %v4257
        %v4330 = vunpack.c.l.b16 %v4258
        %v4331 = vunpack.c.l.b16 %v4259
        %v4332 = vunpack.c.l.b16 %v4260
        %v4333 = vunpack.c.l.b16 %v4261
        %v4334 = vunpack.c.l.b16 %v4262
        %v4335 = vunpack.c.l.b16 %v4263
        %v4336 = vunpack.c.l.b16 %v4264
        %v4337 = vunpack.c.l.b16 %v4265
        %v4338 = vunpack.c.l.b16 %v4266
        %v4339 = vunpack.c.l.b16 %v4267
        %v4340 = vunpack.c.l.b16 %v4268
        %v4341 = vunpack.c.l.b16 %v4269
        %v4342 = vunpack.c.l.b16 %v4270
        %v4343 = vunpack.c.l.b16 %v4271
        %v4344 = vunpack.c.l.b16 %v4272
        %v4345 = vunpack.c.l.b16 %v4273
        %v4346 = vunpack.c.l.b16 %v4274
        %v4347 = vpack.c.b16 %v4316, %v4315
        %v4348 = vpack.c.b16 %v4318, %v4317
        %v4349 = vpack.c.b16 %v4320, %v4319
        %v4350 = vpack.c.b16 %v4322, %v4321
        %v4351 = vpack.c.b16 %v4324, %v4323
        %v4352 = vpack.c.b16 %v4326, %v4325
        %v4353 = vpack.c.b16 %v4328, %v4327
        %v4354 = vpack.c.b16 %v4330, %v4329
        %v4355 = vpack.c.b16 %v4332, %v4331
        %v4356 = vpack.c.b16 %v4334, %v4333
        %v4357 = vpack.c.b16 %v4336, %v4335
        %v4358 = vpack.c.b16 %v4338, %v4337
        %v4359 = vpack.c.b16 %v4340, %v4339
        %v4360 = vpack.c.b16 %v4342, %v4341
        %v4361 = vpack.c.b16 %v4344, %v4343
        %v4362 = vpack.c.b16 %v4346, %v4345
        %4379 = vmatprep.subr.bf16.mxu0 0
        %4380 = vmatpush1.bf16.msra.mxu0 %v4354
        %4381 = vmatprep.subr.bf16.mxu0 0
        %4382 = vmatpush1.bf16.msra.mxu0 %v4353
        %4383 = vmatprep.subr.bf16.mxu0 0
        %4384 = vmatpush1.bf16.msra.mxu0 %v4352
        %4385 = vmatprep.subr.bf16.mxu0 0
        %4386 = vmatpush1.bf16.msra.mxu0 %v4351
        %4387 = vmatprep.subr.bf16.mxu0 0
        %4388 = vmatpush1.bf16.msra.mxu0 %v4350
        %4389 = vmatprep.subr.bf16.mxu0 0
        %4390 = vmatpush1.bf16.msra.mxu0 %v4349
        %4391 = vmatprep.subr.bf16.mxu0 0
        %4392 = vmatpush1.bf16.msra.mxu0 %v4348
        %4393 = vmatprep.subr.bf16.mxu0 0
        %4394 = vmatpush1.bf16.msra.mxu0 %v4347
        %4395 = vmatprep.subr.bf16.mxu0 0
        %4396 = vmatpush2.bf16.msra.mxu0 %v4362
        %4397 = vmatprep.subr.bf16.mxu0 0
        %4398 = vmatpush2.bf16.msra.mxu0 %v4361
        %4399 = vmatprep.subr.bf16.mxu0 0
        %4400 = vmatpush2.bf16.msra.mxu0 %v4360
        %4401 = vmatprep.subr.bf16.mxu0 0
        %4402 = vmatpush2.bf16.msra.mxu0 %v4359
        %4403 = vmatprep.subr.bf16.mxu0 0
        %4404 = vmatpush2.bf16.msra.mxu0 %v4358
        %4405 = vmatprep.subr.bf16.mxu0 0
        %4406 = vmatpush2.bf16.msra.mxu0 %v4357
        %4407 = vmatprep.subr.bf16.mxu0 0
        %4408 = vmatpush2.bf16.msra.mxu0 %v4356
        %4409 = vmatprep.subr.bf16.mxu0 0
        %4410 = vmatpush2.bf16.msra.mxu0 %v4355
        %4411 = vmatprep.mubr.bf16.mxu0 %v4241
        %4412 = vmatmul.mubr.bf16.gmra.mxu0 %v4240
        %v4413 = vpop.f32.mrf.mxu0
        %v4414 = vadd.f32 %v4281, %v4413
        %v4415 = vpop.f32.mrf.mxu0
        %v4416 = vpop.f32.mrf.mxu0
        %v4417 = vadd.f32 %v4281, %v4416
        %v4418 = vpop.f32.mrf.mxu0
        %4419 = vdwg.mxu0
        %v4420 = vadd.f32 %v4080, %v4414
        %v4421 = vadd.f32 %v4081, %v4417
        %4422 = vadd.xlane.f32.xlu0 %v4420
        %v4423 = vpop.xlane.xlu0 %4422
        %4424 = vadd.xlane.f32.xlu0 %v4421
        %v4425 = vpop.xlane.xlu0 %4424
        %v4426 = vmul.f32 %v4423, %v1925
        %v4427 = vmul.f32 %v4425, %v1925
        %v4428 = vsub.f32 %v4420, %v4426
        %v4429 = vsub.f32 %v4421, %v4427
        %v4430 = vmul.f32 %v4428, %v4428
        %v4431 = vmul.f32 %v4429, %v4429
        %4432 = vadd.xlane.f32.xlu0 %v4430
        %v4433 = vpop.xlane.xlu0 %4432
        %4434 = vadd.xlane.f32.xlu0 %v4431
        %v4435 = vpop.xlane.xlu0 %4434
        %v4436 = vmul.f32 %v4433, %v1925
        %v4437 = vmul.f32 %v4435, %v1925
        %v4438 = vadd.f32 %v4436, 1e-05
        %v4439 = vadd.f32 %v4437, 1e-05
        %v4440 = vrsqrt.pop %v4438
        %v4441 = vrsqrt.pop %v4439
        %v4442 = vmul.f32 %v4428, %v4440
        %v4443 = vmul.f32 %v4429, %v4441
        %v4444 = vlaneseq
        %v4445 = vshrl.u32 %v4444, 7
        %v4446 = vsub.s32 2, %v4445
        %v4447 = vrot.slane %v2579, %v4446
        %v4448 = vmul.f32 %v4442, %v4447
        %v4449 = vmul.f32 %v4443, %v4447
        %v4450 = vlaneseq
        %v4451 = vshrl.u32 %v4450, 7
        %v4452 = vsub.s32 2, %v4451
        %v4453 = vrot.slane %v2581, %v4452
        %v4454 = vadd.f32 %v4448, %v4453
        %v4455 = vadd.f32 %v4449, %v4453
        %v4456 = vpack.c.bf16 %v4455, %v4454
        %v4457 = vld [vmem:[#allocation16] sm:$0xf]
        %v4458 = vld [vmem:[#allocation16 + $0x4] sm:$0xf]
        %v4459 = vld [vmem:[#allocation16 + $0x8] sm:$0xf]
        %v4460 = vld [vmem:[#allocation16 + $0xc] sm:$0xf]
        %v4461 = vld [vmem:[#allocation16 + $0x10] sm:$0xf]
        %v4462 = vld [vmem:[#allocation16 + $0x14] sm:$0xf]
        %v4463 = vld [vmem:[#allocation16 + $0x18] sm:$0xf]
        %v4464 = vld [vmem:[#allocation16 + $0x1c] sm:$0xf]
        %v4465 = vld [vmem:[#allocation16 + $0x20] sm:$0xf]
        %v4466 = vld [vmem:[#allocation16 + $0x24] sm:$0xf]
        %v4467 = vld [vmem:[#allocation16 + $0x28] sm:$0xf]
        %v4468 = vld [vmem:[#allocation16 + $0x2c] sm:$0xf]
        %v4469 = vld [vmem:[#allocation16 + $0x30] sm:$0xf]
        %v4470 = vld [vmem:[#allocation16 + $0x34] sm:$0xf]
        %v4471 = vld [vmem:[#allocation16 + $0x38] sm:$0xf]
        %v4472 = vld [vmem:[#allocation16 + $0x3c] sm:$0xf]
        %v4473 = vld [vmem:[%s17] sm:$0x1]
        %v4475 = vlaneseq
        %v4476 = vshrl.u32 %v4475, 7
        %v4477 = vsub.s32 0, %v4476
        %v4478 = vrot.slane %v4473, %v4477
        %v4496 = vunpack.c.l.b16 %v4457
        %v4497 = vunpack.c.l.b16 %v4458
        %v4498 = vunpack.c.l.b16 %v4459
        %v4499 = vunpack.c.l.b16 %v4460
        %v4500 = vunpack.c.l.b16 %v4461
        %v4501 = vunpack.c.l.b16 %v4462
        %v4502 = vunpack.c.l.b16 %v4463
        %v4503 = vunpack.c.l.b16 %v4464
        %v4504 = vunpack.c.l.b16 %v4465
        %v4505 = vunpack.c.l.b16 %v4466
        %v4506 = vunpack.c.l.b16 %v4467
        %v4507 = vunpack.c.l.b16 %v4468
        %v4508 = vunpack.c.l.b16 %v4469
        %v4509 = vunpack.c.l.b16 %v4470
        %v4510 = vunpack.c.l.b16 %v4471
        %v4511 = vunpack.c.l.b16 %v4472
        %v4512 = vpack.c.b16 %v4497, %v4496
        %v4513 = vpack.c.b16 %v4499, %v4498
        %v4514 = vpack.c.b16 %v4501, %v4500
        %v4515 = vpack.c.b16 %v4503, %v4502
        %v4516 = vpack.c.b16 %v4505, %v4504
        %v4517 = vpack.c.b16 %v4507, %v4506
        %v4518 = vpack.c.b16 %v4509, %v4508
        %v4519 = vpack.c.b16 %v4511, %v4510
        %4528 = vmatprep.subr.bf16.mxu0 0
        %4529 = vmatpush1.bf16.msra.mxu0 %v4519
        %4530 = vmatprep.subr.bf16.mxu0 0
        %4531 = vmatpush1.bf16.msra.mxu0 %v4518
        %4532 = vmatprep.subr.bf16.mxu0 0
        %4533 = vmatpush1.bf16.msra.mxu0 %v4517
        %4534 = vmatprep.subr.bf16.mxu0 0
        %4535 = vmatpush1.bf16.msra.mxu0 %v4516
        %4536 = vmatprep.subr.bf16.mxu0 0
        %4537 = vmatpush1.bf16.msra.mxu0 %v4515
        %4538 = vmatprep.subr.bf16.mxu0 0
        %4539 = vmatpush1.bf16.msra.mxu0 %v4514
        %4540 = vmatprep.subr.bf16.mxu0 0
        %4541 = vmatpush1.bf16.msra.mxu0 %v4513
        %4542 = vmatprep.subr.bf16.mxu0 0
        %4543 = vmatpush1.bf16.msra.mxu0 %v4512
        %4544 = vmatprep.subr.bf16.mxu0 0
        %4545 = vmatpush2.bf16.msra.mxu0 0
        %4546 = vmatprep.subr.bf16.mxu0 0
        %4547 = vmatpush2.bf16.msra.mxu0 0
        %4548 = vmatprep.subr.bf16.mxu0 0
        %4549 = vmatpush2.bf16.msra.mxu0 0
        %4550 = vmatprep.subr.bf16.mxu0 0
        %4551 = vmatpush2.bf16.msra.mxu0 0
        %4552 = vmatprep.subr.bf16.mxu0 0
        %4553 = vmatpush2.bf16.msra.mxu0 0
        %4554 = vmatprep.subr.bf16.mxu0 0
        %4555 = vmatpush2.bf16.msra.mxu0 0
        %4556 = vmatprep.subr.bf16.mxu0 0
        %4557 = vmatpush2.bf16.msra.mxu0 0
        %4558 = vmatprep.subr.bf16.mxu0 0
        %4559 = vmatpush2.bf16.msra.mxu0 0
        %4560 = vmatprep.mubr.bf16.mxu0 0
        %4561 = vmatmul.mubr.bf16.gmra.mxu0 %v4456
        %v4562 = vpop.f32.mrf.mxu0
        %v4563 = vadd.f32 %v4478, %v4562
        %v4564 = vpop.f32.mrf.mxu0
        %v4565 = vpop.f32.mrf.mxu0
        %v4566 = vadd.f32 %v4478, %v4565
        %v4567 = vpop.f32.mrf.mxu0
        %4568 = vdwg.mxu0
        %4569 = vst [vmem:[%s703] sm:$0xff] %v4563
        %4570 = vst [vmem:[%s703 + $0x8] sm:$0xff] %v4566
        %s4571 = sand.u32 %s430, 1
        %s4572 = scalar_lea.sflag [#allocation4], %s4571
        %s4573 = sand.u32 %s430, 1
        %s4574 = smul.addr %s4573, 16
        %s4575 = scalar_lea.vmem [#allocation17], %s4574
        // Predicated region
        $region129: #{tpu_custom_call.1} parent=91 // pred_check
          %p4576 = pneg %p440
        $region130: #{tpu_custom_call.1} parent=91 // pred_check_branch
          %4578 = sbr.rel (%p4576) target = $region132
        $region131: #{tpu_custom_call.1} parent=91 // pred_region
          %s4580 = ssub.s32 256, 256
          %4581 = vsyncadd %s4572, %s4580
          %s4582 = smul.addr %s39, 2
          %s4583 = smul.addr %s4582, 128
          %s4584 = scalar_lea.hbm %s18, %s4583
          %s4585 = sshll.u32 %s4575, 4
          %s4586 = int_to_ptr.vmem [resolvable:$true] %s4585
          %4591 = dma.vmem_to_hbm [thread:$0]  %s4586, 256, %s4584, %s4572, 128, 128, 8
        $region132: #{tpu_custom_call.1} parent=91 // pred_fallthru
          _
      $region92: #{tpu_custom_call.1} parent=5 // pred_fallthru
        _
      %p4592 = scmp.le.s32.totalorder 2, %s34
      // Predicated region
      $region133: #{tpu_custom_call.1} parent=5 // pred_check
        %p4593 = pneg %p4592
      $region134: #{tpu_custom_call.1} parent=5 // pred_check_branch
        %4595 = sbr.rel (%p4593) target = $region136
      $region135: #{tpu_custom_call.1} parent=5 // pred_region
        %s4596 = ssub.s32 %s34, 2
        // Predicated region
        $region137: #{tpu_custom_call.1} parent=135 // pred_check
          %p4597 = pneg %p446
        $region138: #{tpu_custom_call.1} parent=135 // pred_check_branch
          %4599 = sbr.rel (%p4597) target = $region140
        $region139: #{tpu_custom_call.1} parent=135 // pred_region
          %s4600 = sand.u32 %s431, 1
          %s4601 = scalar_lea.sflag [#allocation4], %s4600
          %s4602 = sand.u32 %s431, 1
          %s4603 = smul.addr %s4602, 16
          %s4604 = scalar_lea.vmem [#allocation17], %s4603
          %4605 = dma.done %s4601, 256
        $region140: #{tpu_custom_call.1} parent=135 // pred_fallthru
          _
      $region136: #{tpu_custom_call.1} parent=5 // pred_fallthru
        _
    $region6: #{tpu_custom_call.1} parent=1 // loop_footer
      %s38 = sadd.s32 1, %s34
    $region7: #{tpu_custom_call.1} parent=1 // loop_footer_branch
      %33 = sbr.rel target = $region3
    $region8: #{tpu_custom_call.1} parent=1 // loop_exit
      _
    %4606 = vsyncpa [#allocation3], 1
    %s4607 = scalar_lea.sflag [#allocation3], 1
    %4608 = vsyncpa %s4607, 1
    %4609 = vsyncpa [#allocation6], 1
    %4610 = vsyncpa [#allocation9], 1
    %4611 = vsyncpa [#allocation12], 1
    %4612 = vsyncpa [#allocation15], 1
    %4613 = vsyncpa [#allocation4], 1
    %s4614 = scalar_lea.sflag [#allocation4], 1
    %4615 = vsyncpa %s4614, 1

</llo_original>
